<compile_context>
chip_gen: v7x
topology: tpu7x:2x2x1
jax: 0.10.0
libtpu: 0.0.40
codegen_flags: <defaults>
</compile_context>

<pallas_src>
import functools

import jax
import jax.numpy as jnp
from jax import lax
from jax.experimental import pallas as pl
from jax.experimental.pallas import tpu as pltpu


# ----------------------------- in-kernel helpers -----------------------------------------------


def _pad1_hw(a):
    """Zero-pad the last two dims of a (C, H, W) activation by 1 on each side (in VMEM)."""
    C, H, W = a.shape
    zr = jnp.zeros((C, 1, W), jnp.float32)
    a = jnp.concatenate([zr, a, zr], axis=1)            # (C, H+2, W)
    zc = jnp.zeros((C, H + 2, 1), jnp.float32)
    return jnp.concatenate([zc, a, zc], axis=2)          # (C, H+2, W+2)


def _conv3x3_matmul(a, w2d):
    """3x3 same-convolution of a (C, H, W) activation as a single im2col MXU matmul.

    w2d has layout (Cout, 9*C) with the reduction index flattened as (kh, kw, c).
    Returns (Cout, H*W) in float32.
    """
    C, H, W = a.shape
    ap = _pad1_hw(a)                                     # (C, H+2, W+2)
    patches = jnp.concatenate(
        [ap[:, kh:kh + H, kw:kw + W].reshape(C, H * W)
         for kh in range(3) for kw in range(3)],
        axis=0)                                          # (9*C, H*W)
    return jnp.dot(w2d.astype(jnp.bfloat16), patches.astype(jnp.bfloat16),
                   preferred_element_type=jnp.float32)   # f32 accumulation on the MXU


# ----------------------------------- kernels ----------------------------------------------------


def _conv_stats_kernel(x_ref, w_ref, y_ref, s_ref, q_ref, *, H, W):
    # x_ref: (1, Cin, H*W)   one image, NC(HW) layout (lane-dense)
    # w_ref: (Cout, 9*Cin)   conv weight, taps flattened (kh, kw, c)
    # y_ref: (1, Cout, H*W)  raw conv output (pre-BN)
    # s_ref/q_ref: (1, Cout, 1) per-image channel sum / sum of squares (for BN stats)
    Cin = x_ref.shape[1]
    x = x_ref[0].reshape(Cin, H, W)
    y = _conv3x3_matmul(x, w_ref[...])                   # (Cout, H*W), f32
    y_ref[...] = y[None].astype(y_ref.dtype)
    s_ref[...] = jnp.sum(y, axis=1, keepdims=True)[None]
    q_ref[...] = jnp.sum(y * y, axis=1, keepdims=True)[None]


def _bn_relu_conv_stats_kernel(y_ref, sc_ref, sh_ref, w_ref, o_ref, s_ref, q_ref, *, H, W):
    # y_ref: (1, Cin, H*W)   raw conv1 output
    # sc_ref/sh_ref: (Cin, 1) folded BN1 scale / shift
    # w_ref: (Cout, 9*Cin)   conv2 weight
    # o_ref: (1, Cout, H*W)  raw conv2 output; s_ref/q_ref: (1, Cout, 1) BN2 partial stats
    Cin = y_ref.shape[1]
    a = jnp.maximum(y_ref[0] * sc_ref[...] + sh_ref[...], 0.0)   # BN1 affine + ReLU, f32 math
    y = _conv3x3_matmul(a.reshape(Cin, H, W), w_ref[...])
    o_ref[...] = y[None].astype(o_ref.dtype)
    s_ref[...] = jnp.sum(y, axis=1, keepdims=True)[None]
    q_ref[...] = jnp.sum(y * y, axis=1, keepdims=True)[None]


def _bn_relu_kernel(y_ref, sc_ref, sh_ref, o_ref):
    # y_ref: (1, C, H*W); sc_ref/sh_ref: (C, 1)
    o_ref[...] = jnp.maximum(y_ref[...] * sc_ref[...] + sh_ref[...], 0.0).astype(o_ref.dtype)


# --------------------------------- host-side wrapper --------------------------------------------


def _fold_bn(s, q, gamma, beta, count, eps):
    """Fold training-mode BatchNorm (batch statistics) into per-channel scale/shift, (C,1) f32."""
    mean = jnp.sum(s, axis=0)[:, 0] / count              # (C,)
    ex2 = jnp.sum(q, axis=0)[:, 0] / count
    var = jnp.maximum(ex2 - mean * mean, 0.0)             # biased variance (normalization)
    scale = gamma.astype(jnp.float32) / jnp.sqrt(var + eps)
    shift = beta.astype(jnp.float32) - mean * scale
    return scale.reshape(-1, 1), shift.reshape(-1, 1)


def conv_block_d_forward(x_nchw, w1, b1, g1, beta1, w2, b2, g2, beta2, eps=1e-5):
    """Forward pass of conv_block_d. x_nchw: (N, Cin, H, W); w1: (Cout, Cin, 3, 3); w2: (Cout, Cout, 3, 3)."""
    N, Cin, H, W = x_nchw.shape
    Cout = w1.shape[0]
    HW = H * W
    count = float(N * HW)

    # NOTE: conv biases b1/b2 are intentionally unused — a per-channel constant bias is exactly
    # cancelled by the training-mode BatchNorm that immediately follows each conv.
    x = x_nchw.astype(jnp.float32).reshape(N, Cin, HW)
    w1_2d = jnp.transpose(w1, (0, 2, 3, 1)).reshape(Cout, 9 * Cin).astype(jnp.float32)
    w2_2d = jnp.transpose(w2, (0, 2, 3, 1)).reshape(Cout, 9 * Cout).astype(jnp.float32)

    parallel = pltpu.CompilerParams(dimension_semantics=("parallel",))
    stat_shape = jax.ShapeDtypeStruct((N, Cout, 1), jnp.float32)
    stat_spec = pl.BlockSpec((1, Cout, 1), lambda n: (n, 0, 0))
    chan_spec = pl.BlockSpec((Cout, 1), lambda n: (0, 0))

    # ---- stage 1: conv1 + per-image BN1 statistics ----------------------------------------------
    y1, s1, q1 = pl.pallas_call(
        functools.partial(_conv_stats_kernel, H=H, W=W),
        out_shape=(jax.ShapeDtypeStruct((N, Cout, HW), jnp.float32), stat_shape, stat_shape),
        grid=(N,),
        in_specs=[
            pl.BlockSpec((1, Cin, HW), lambda n: (n, 0, 0)),
            pl.BlockSpec((Cout, 9 * Cin), lambda n: (0, 0)),
        ],
        out_specs=(pl.BlockSpec((1, Cout, HW), lambda n: (n, 0, 0)), stat_spec, stat_spec),
        compiler_params=parallel,
    )(x, w1_2d)

    sc1, sh1 = _fold_bn(s1, q1, g1, beta1, count, eps)    # (Cout, 1) each

    # ---- stage 2: fused BN1 affine + ReLU + conv2 + per-image BN2 statistics ---------------------
    y2, s2, q2 = pl.pallas_call(
        functools.partial(_bn_relu_conv_stats_kernel, H=H, W=W),
        out_shape=(jax.ShapeDtypeStruct((N, Cout, HW), jnp.float32), stat_shape, stat_shape),
        grid=(N,),
        in_specs=[
            pl.BlockSpec((1, Cout, HW), lambda n: (n, 0, 0)),
            chan_spec,
            chan_spec,
            pl.BlockSpec((Cout, 9 * Cout), lambda n: (0, 0)),
        ],
        out_specs=(pl.BlockSpec((1, Cout, HW), lambda n: (n, 0, 0)), stat_spec, stat_spec),
        compiler_params=parallel,
    )(y1, sc1, sh1, w2_2d)

    sc2, sh2 = _fold_bn(s2, q2, g2, beta2, count, eps)

    # ---- stage 3: BN2 affine + ReLU --------------------------------------------------------------
    out = pl.pallas_call(
        _bn_relu_kernel,
        out_shape=jax.ShapeDtypeStruct((N, Cout, HW), jnp.float32),
        grid=(N,),
        in_specs=[
            pl.BlockSpec((1, Cout, HW), lambda n: (n, 0, 0)),
            chan_spec,
            chan_spec,
        ],
        out_specs=pl.BlockSpec((1, Cout, HW), lambda n: (n, 0, 0)),
        compiler_params=parallel,
    )(y2, sc2, sh2)

    return out.reshape(N, Cout, H, W)                     # already NCHW: reshape only, no transpose


# ------------------------------------ reference & test ------------------------------------------


def _reference(x, w1, b1, g1, be1, w2, b2, g2, be2, eps=1e-5):
    def stage(x, w, b, g, be):
        y = lax.conv_general_dilated(
            x, w, window_strides=(1, 1), padding=((1, 1), (1, 1)),
            dimension_numbers=("NCHW", "OIHW", "NCHW"),
            precision=lax.Precision.HIGHEST) + b.reshape(1, -1, 1, 1)
        m = jnp.mean(y, axis=(0, 2, 3), keepdims=True)
        v = jnp.mean(jnp.square(y - m), axis=(0, 2, 3), keepdims=True)
        yn = (y - m) / jnp.sqrt(v + eps)
        return jnp.maximum(yn * g.reshape(1, -1, 1, 1) + be.reshape(1, -1, 1, 1), 0.0)

    return stage(stage(x, w1, b1, g1, be1), w2, b2, g2, be2)


if __name__ == "__main__":
    key = jax.random.PRNGKey(0)
    ks = jax.random.split(key, 9)

    N, Cin, Cout, H, W = 2, 4, 8, 16, 16

    x = jax.random.normal(ks[0], (N, Cin, H, W), dtype=jnp.float32)
    w1 = 0.1 * jax.random.normal(ks[1], (Cout, Cin, 3, 3), dtype=jnp.float32)
    b1 = 0.1 * jax.random.normal(ks[2], (Cout,), dtype=jnp.float32)
    w2 = 0.1 * jax.random.normal(ks[3], (Cout, Cout, 3, 3), dtype=jnp.float32)
    b2 = 0.1 * jax.random.normal(ks[4], (Cout,), dtype=jnp.float32)
    g1 = 1.0 + 0.1 * jax.random.normal(ks[5], (Cout,), dtype=jnp.float32)
    be1 = 0.1 * jax.random.normal(ks[6], (Cout,), dtype=jnp.float32)
    g2 = 1.0 + 0.1 * jax.random.normal(ks[7], (Cout,), dtype=jnp.float32)
    be2 = 0.1 * jax.random.normal(ks[8], (Cout,), dtype=jnp.float32)

    fwd = jax.jit(conv_block_d_forward)
    y = fwd(x, w1, b1, g1, be1, w2, b2, g2, be2)
    jax.block_until_ready(y)

    assert y.shape == (N, Cout, H, W), y.shape
    assert bool(jnp.all(y >= 0.0))                         # ReLU output is non-negative

    ref = _reference(x, w1, b1, g1, be1, w2, b2, g2, be2)
    err = float(jnp.max(jnp.abs(y - ref)))
    assert err < 0.1, f"max abs error vs reference: {err}"  # bf16-matmul tolerance; bugs give O(1)

    print("KERNEL_OK")
</pallas_src>

<mosaic_0001>
module attributes {stable_mosaic.version = 11 : i64} {
  func.func @_conv_stats_kernel(%arg0: i32, %arg1: memref<1x4x256xf32, #tpu.memory_space<vmem>>, %arg2: memref<8x36xf32, #tpu.memory_space<vmem>>, %arg3: memref<1x8x256xf32, #tpu.memory_space<vmem>>, %arg4: memref<1x8x1xf32, #tpu.memory_space<vmem>>, %arg5: memref<1x8x1xf32, #tpu.memory_space<vmem>>) attributes {dimension_semantics = [#tpu.dimension_semantics<parallel>], iteration_bounds = array<i64: 2>, scalar_prefetch = 0 : i64, scratch_operands = 0 : i64, tpu.core_type = #tpu.core_type<tc>, window_params = [{transform_indices = @transform_0, window_bounds = array<i64: 1, 4, 256>}, {pipeline_mode = #tpu.pipeline_mode<synchronous>, transform_indices = @transform_1, window_bounds = array<i64: 8, 36>}, {transform_indices = @transform_2, window_bounds = array<i64: 1, 8, 256>}, {transform_indices = @transform_3, window_bounds = array<i64: 1, 8, 1>}, {transform_indices = @transform_4, window_bounds = array<i64: 1, 8, 1>}]} {
    %c0 = arith.constant 0 : index
    %c0_0 = arith.constant 0 : index
    %c0_1 = arith.constant 0 : index
    %0 = vector.load %arg1[%c0, %c0_0, %c0_1] : memref<1x4x256xf32, #tpu.memory_space<vmem>>, vector<1x4x256xf32>
    %1 = vector.shape_cast %0 : vector<1x4x256xf32> to vector<4x256xf32>
    %2 = vector.shape_cast %1 : vector<4x256xf32> to vector<4x16x16xf32>
    %c0_2 = arith.constant 0 : index
    %c0_3 = arith.constant 0 : index
    %3 = vector.load %arg2[%c0_2, %c0_3] : memref<8x36xf32, #tpu.memory_space<vmem>>, vector<8x36xf32>
    %cst = arith.constant 0.000000e+00 : f32
    %4 = vector.broadcast %cst : f32 to vector<4x1x16xf32>
    %5 = tpu.concatenate %4, %2, %4 in 1 : vector<4x1x16xf32>, vector<4x16x16xf32>, vector<4x1x16xf32> -> vector<4x18x16xf32>
    %cst_4 = arith.constant 0.000000e+00 : f32
    %6 = vector.broadcast %cst_4 : f32 to vector<4x18x1xf32>
    %7 = tpu.concatenate %6, %5, %6 in 2 : vector<4x18x1xf32>, vector<4x18x16xf32>, vector<4x18x1xf32> -> vector<4x18x18xf32>
    %8 = vector.extract_strided_slice %7 {offsets = [0, 0, 0], sizes = [4, 16, 16], strides = [1, 1, 1]} : vector<4x18x18xf32> to vector<4x16x16xf32>
    %9 = vector.shape_cast %8 : vector<4x16x16xf32> to vector<4x256xf32>
    %10 = vector.extract_strided_slice %7 {offsets = [0, 0, 1], sizes = [4, 16, 16], strides = [1, 1, 1]} : vector<4x18x18xf32> to vector<4x16x16xf32>
    %11 = vector.shape_cast %10 : vector<4x16x16xf32> to vector<4x256xf32>
    %12 = vector.extract_strided_slice %7 {offsets = [0, 0, 2], sizes = [4, 16, 16], strides = [1, 1, 1]} : vector<4x18x18xf32> to vector<4x16x16xf32>
    %13 = vector.shape_cast %12 : vector<4x16x16xf32> to vector<4x256xf32>
    %14 = vector.extract_strided_slice %7 {offsets = [0, 1, 0], sizes = [4, 16, 16], strides = [1, 1, 1]} : vector<4x18x18xf32> to vector<4x16x16xf32>
    %15 = vector.shape_cast %14 : vector<4x16x16xf32> to vector<4x256xf32>
    %16 = vector.extract_strided_slice %7 {offsets = [0, 1, 1], sizes = [4, 16, 16], strides = [1, 1, 1]} : vector<4x18x18xf32> to vector<4x16x16xf32>
    %17 = vector.shape_cast %16 : vector<4x16x16xf32> to vector<4x256xf32>
    %18 = vector.extract_strided_slice %7 {offsets = [0, 1, 2], sizes = [4, 16, 16], strides = [1, 1, 1]} : vector<4x18x18xf32> to vector<4x16x16xf32>
    %19 = vector.shape_cast %18 : vector<4x16x16xf32> to vector<4x256xf32>
    %20 = vector.extract_strided_slice %7 {offsets = [0, 2, 0], sizes = [4, 16, 16], strides = [1, 1, 1]} : vector<4x18x18xf32> to vector<4x16x16xf32>
    %21 = vector.shape_cast %20 : vector<4x16x16xf32> to vector<4x256xf32>
    %22 = vector.extract_strided_slice %7 {offsets = [0, 2, 1], sizes = [4, 16, 16], strides = [1, 1, 1]} : vector<4x18x18xf32> to vector<4x16x16xf32>
    %23 = vector.shape_cast %22 : vector<4x16x16xf32> to vector<4x256xf32>
    %24 = vector.extract_strided_slice %7 {offsets = [0, 2, 2], sizes = [4, 16, 16], strides = [1, 1, 1]} : vector<4x18x18xf32> to vector<4x16x16xf32>
    %25 = vector.shape_cast %24 : vector<4x16x16xf32> to vector<4x256xf32>
    %26 = tpu.concatenate %9, %11, %13, %15, %17, %19, %21, %23, %25 in 0 : vector<4x256xf32>, vector<4x256xf32>, vector<4x256xf32>, vector<4x256xf32>, vector<4x256xf32>, vector<4x256xf32>, vector<4x256xf32>, vector<4x256xf32>, vector<4x256xf32> -> vector<36x256xf32>
    %27 = arith.truncf %3 : vector<8x36xf32> to vector<8x36xbf16>
    %28 = arith.truncf %26 : vector<36x256xf32> to vector<36x256xbf16>
    %cst_5 = arith.constant dense<0.000000e+00> : vector<8x256xf32>
    %29 = tpu.matmul %27, %28, %cst_5 {dimension_numbers = #tpu.dot_dimension_numbers<[1], [0], [0], [1], [0, 0, 1, 1], [], []>} : vector<8x36xbf16>, vector<36x256xbf16>, vector<8x256xf32> -> vector<8x256xf32>
    %30 = vector.shape_cast %29 : vector<8x256xf32> to vector<1x8x256xf32>
    %c0_6 = arith.constant 0 : index
    %c0_7 = arith.constant 0 : index
    %c0_8 = arith.constant 0 : index
    %31 = vector.load %arg3[%c0_6, %c0_7, %c0_8] : memref<1x8x256xf32, #tpu.memory_space<vmem>>, vector<1x8x256xf32>
    tpu.vector_store %arg3[%c0_6, %c0_7, %c0_8], %30 {strides = array<i32>} : memref<1x8x256xf32, #tpu.memory_space<vmem>>, vector<1x8x256xf32>,
    %cst_9 = arith.constant dense<0.000000e+00> : vector<8xf32>
    %32 = vector.multi_reduction <add>, %29, %cst_9 [1] : vector<8x256xf32> to vector<8xf32>
    %33 = vector.shape_cast %32 : vector<8xf32> to vector<8x1xf32>
    %34 = vector.shape_cast %33 : vector<8x1xf32> to vector<1x8x1xf32>
    %c0_10 = arith.constant 0 : index
    %c0_11 = arith.constant 0 : index
    %c0_12 = arith.constant 0 : index
    %35 = vector.load %arg4[%c0_10, %c0_11, %c0_12] : memref<1x8x1xf32, #tpu.memory_space<vmem>>, vector<1x8x1xf32>
    tpu.vector_store %arg4[%c0_10, %c0_11, %c0_12], %34 {strides = array<i32>} : memref<1x8x1xf32, #tpu.memory_space<vmem>>, vector<1x8x1xf32>,
    %36 = arith.mulf %29, %29 : vector<8x256xf32>
    %cst_13 = arith.constant dense<0.000000e+00> : vector<8xf32>
    %37 = vector.multi_reduction <add>, %36, %cst_13 [1] : vector<8x256xf32> to vector<8xf32>
    %38 = vector.shape_cast %37 : vector<8xf32> to vector<8x1xf32>
    %39 = vector.shape_cast %38 : vector<8x1xf32> to vector<1x8x1xf32>
    %c0_14 = arith.constant 0 : index
    %c0_15 = arith.constant 0 : index
    %c0_16 = arith.constant 0 : index
    %40 = vector.load %arg5[%c0_14, %c0_15, %c0_16] : memref<1x8x1xf32, #tpu.memory_space<vmem>>, vector<1x8x1xf32>
    tpu.vector_store %arg5[%c0_14, %c0_15, %c0_16], %39 {strides = array<i32>} : memref<1x8x1xf32, #tpu.memory_space<vmem>>, vector<1x8x1xf32>,
    return
  }
  func.func @transform_0(%arg0: i32) -> (i32, i32, i32) {
    %c0_i32 = arith.constant 0 : i32
    %c0_i32_0 = arith.constant 0 : i32
    %c0_i32_1 = arith.constant 0 : i32
    return %arg0, %c0_i32, %c0_i32_0 : i32, i32, i32
  }
  func.func @transform_1(%arg0: i32) -> (i32, i32) {
    %c0_i32 = arith.constant 0 : i32
    %c0_i32_0 = arith.constant 0 : i32
    %c0_i32_1 = arith.constant 0 : i32
    return %c0_i32, %c0_i32_0 : i32, i32
  }
  func.func @transform_2(%arg0: i32) -> (i32, i32, i32) {
    %c0_i32 = arith.constant 0 : i32
    %c0_i32_0 = arith.constant 0 : i32
    %c0_i32_1 = arith.constant 0 : i32
    return %arg0, %c0_i32, %c0_i32_0 : i32, i32, i32
  }
  func.func @transform_3(%arg0: i32) -> (i32, i32, i32) {
    %c0_i32 = arith.constant 0 : i32
    %c0_i32_0 = arith.constant 0 : i32
    %c0_i32_1 = arith.constant 0 : i32
    return %arg0, %c0_i32, %c0_i32_0 : i32, i32, i32
  }
  func.func @transform_4(%arg0: i32) -> (i32, i32, i32) {
    %c0_i32 = arith.constant 0 : i32
    %c0_i32_0 = arith.constant 0 : i32
    %c0_i32_1 = arith.constant 0 : i32
    return %arg0, %c0_i32, %c0_i32_0 : i32, i32, i32
  }
}

module attributes {stable_mosaic.version = 11 : i64} {
  func.func @_bn_relu_conv_stats_kernel(%arg0: i32, %arg1: memref<1x8x256xf32, #tpu.memory_space<vmem>>, %arg2: memref<8x1xf32, #tpu.memory_space<vmem>>, %arg3: memref<8x1xf32, #tpu.memory_space<vmem>>, %arg4: memref<8x72xf32, #tpu.memory_space<vmem>>, %arg5: memref<1x8x256xf32, #tpu.memory_space<vmem>>, %arg6: memref<1x8x1xf32, #tpu.memory_space<vmem>>, %arg7: memref<1x8x1xf32, #tpu.memory_space<vmem>>) attributes {dimension_semantics = [#tpu.dimension_semantics<parallel>], iteration_bounds = array<i64: 2>, scalar_prefetch = 0 : i64, scratch_operands = 0 : i64, tpu.core_type = #tpu.core_type<tc>, window_params = [{transform_indices = @transform_0, window_bounds = array<i64: 1, 8, 256>}, {pipeline_mode = #tpu.pipeline_mode<synchronous>, transform_indices = @transform_1, window_bounds = array<i64: 8, 1>}, {pipeline_mode = #tpu.pipeline_mode<synchronous>, transform_indices = @transform_2, window_bounds = array<i64: 8, 1>}, {pipeline_mode = #tpu.pipeline_mode<synchronous>, transform_indices = @transform_3, window_bounds = array<i64: 8, 72>}, {transform_indices = @transform_4, window_bounds = array<i64: 1, 8, 256>}, {transform_indices = @transform_5, window_bounds = array<i64: 1, 8, 1>}, {transform_indices = @transform_6, window_bounds = array<i64: 1, 8, 1>}]} {
    %c0 = arith.constant 0 : index
    %c0_0 = arith.constant 0 : index
    %c0_1 = arith.constant 0 : index
    %0 = vector.load %arg1[%c0, %c0_0, %c0_1] : memref<1x8x256xf32, #tpu.memory_space<vmem>>, vector<1x8x256xf32>
    %1 = vector.shape_cast %0 : vector<1x8x256xf32> to vector<8x256xf32>
    %c0_2 = arith.constant 0 : index
    %c0_3 = arith.constant 0 : index
    %2 = vector.load %arg2[%c0_2, %c0_3] : memref<8x1xf32, #tpu.memory_space<vmem>>, vector<8x1xf32>
    %3 = vector.broadcast %2 : vector<8x1xf32> to vector<8x256xf32>
    %4 = arith.mulf %1, %3 : vector<8x256xf32>
    %c0_4 = arith.constant 0 : index
    %c0_5 = arith.constant 0 : index
    %5 = vector.load %arg3[%c0_4, %c0_5] : memref<8x1xf32, #tpu.memory_space<vmem>>, vector<8x1xf32>
    %6 = vector.broadcast %5 : vector<8x1xf32> to vector<8x256xf32>
    %7 = arith.addf %4, %6 : vector<8x256xf32>
    %cst = arith.constant 0.000000e+00 : f32
    %8 = vector.broadcast %cst : f32 to vector<8x256xf32>
    %9 = arith.maximumf %7, %8 : vector<8x256xf32>
    %10 = vector.shape_cast %9 : vector<8x256xf32> to vector<8x16x16xf32>
    %c0_6 = arith.constant 0 : index
    %c0_7 = arith.constant 0 : index
    %11 = vector.load %arg4[%c0_6, %c0_7] : memref<8x72xf32, #tpu.memory_space<vmem>>, vector<8x72xf32>
    %cst_8 = arith.constant 0.000000e+00 : f32
    %12 = vector.broadcast %cst_8 : f32 to vector<8x1x16xf32>
    %13 = tpu.concatenate %12, %10, %12 in 1 : vector<8x1x16xf32>, vector<8x16x16xf32>, vector<8x1x16xf32> -> vector<8x18x16xf32>
    %cst_9 = arith.constant 0.000000e+00 : f32
    %14 = vector.broadcast %cst_9 : f32 to vector<8x18x1xf32>
    %15 = tpu.concatenate %14, %13, %14 in 2 : vector<8x18x1xf32>, vector<8x18x16xf32>, vector<8x18x1xf32> -> vector<8x18x18xf32>
    %16 = vector.extract_strided_slice %15 {offsets = [0, 0, 0], sizes = [8, 16, 16], strides = [1, 1, 1]} : vector<8x18x18xf32> to vector<8x16x16xf32>
    %17 = vector.shape_cast %16 : vector<8x16x16xf32> to vector<8x256xf32>
    %18 = vector.extract_strided_slice %15 {offsets = [0, 0, 1], sizes = [8, 16, 16], strides = [1, 1, 1]} : vector<8x18x18xf32> to vector<8x16x16xf32>
    %19 = vector.shape_cast %18 : vector<8x16x16xf32> to vector<8x256xf32>
    %20 = vector.extract_strided_slice %15 {offsets = [0, 0, 2], sizes = [8, 16, 16], strides = [1, 1, 1]} : vector<8x18x18xf32> to vector<8x16x16xf32>
    %21 = vector.shape_cast %20 : vector<8x16x16xf32> to vector<8x256xf32>
    %22 = vector.extract_strided_slice %15 {offsets = [0, 1, 0], sizes = [8, 16, 16], strides = [1, 1, 1]} : vector<8x18x18xf32> to vector<8x16x16xf32>
    %23 = vector.shape_cast %22 : vector<8x16x16xf32> to vector<8x256xf32>
    %24 = vector.extract_strided_slice %15 {offsets = [0, 1, 1], sizes = [8, 16, 16], strides = [1, 1, 1]} : vector<8x18x18xf32> to vector<8x16x16xf32>
    %25 = vector.shape_cast %24 : vector<8x16x16xf32> to vector<8x256xf32>
    %26 = vector.extract_strided_slice %15 {offsets = [0, 1, 2], sizes = [8, 16, 16], strides = [1, 1, 1]} : vector<8x18x18xf32> to vector<8x16x16xf32>
    %27 = vector.shape_cast %26 : vector<8x16x16xf32> to vector<8x256xf32>
    %28 = vector.extract_strided_slice %15 {offsets = [0, 2, 0], sizes = [8, 16, 16], strides = [1, 1, 1]} : vector<8x18x18xf32> to vector<8x16x16xf32>
    %29 = vector.shape_cast %28 : vector<8x16x16xf32> to vector<8x256xf32>
    %30 = vector.extract_strided_slice %15 {offsets = [0, 2, 1], sizes = [8, 16, 16], strides = [1, 1, 1]} : vector<8x18x18xf32> to vector<8x16x16xf32>
    %31 = vector.shape_cast %30 : vector<8x16x16xf32> to vector<8x256xf32>
    %32 = vector.extract_strided_slice %15 {offsets = [0, 2, 2], sizes = [8, 16, 16], strides = [1, 1, 1]} : vector<8x18x18xf32> to vector<8x16x16xf32>
    %33 = vector.shape_cast %32 : vector<8x16x16xf32> to vector<8x256xf32>
    %34 = tpu.concatenate %17, %19, %21, %23, %25, %27, %29, %31, %33 in 0 : vector<8x256xf32>, vector<8x256xf32>, vector<8x256xf32>, vector<8x256xf32>, vector<8x256xf32>, vector<8x256xf32>, vector<8x256xf32>, vector<8x256xf32>, vector<8x256xf32> -> vector<72x256xf32>
    %35 = arith.truncf %11 : vector<8x72xf32> to vector<8x72xbf16>
    %36 = arith.truncf %34 : vector<72x256xf32> to vector<72x256xbf16>
    %cst_10 = arith.constant dense<0.000000e+00> : vector<8x256xf32>
    %37 = tpu.matmul %35, %36, %cst_10 {dimension_numbers = #tpu.dot_dimension_numbers<[1], [0], [0], [1], [0, 0, 1, 1], [], []>} : vector<8x72xbf16>, vector<72x256xbf16>, vector<8x256xf32> -> vector<8x256xf32>
    %38 = vector.shape_cast %37 : vector<8x256xf32> to vector<1x8x256xf32>
    %c0_11 = arith.constant 0 : index
    %c0_12 = arith.constant 0 : index
    %c0_13 = arith.constant 0 : index
    %39 = vector.load %arg5[%c0_11, %c0_12, %c0_13] : memref<1x8x256xf32, #tpu.memory_space<vmem>>, vector<1x8x256xf32>
    tpu.vector_store %arg5[%c0_11, %c0_12, %c0_13], %38 {strides = array<i32>} : memref<1x8x256xf32, #tpu.memory_space<vmem>>, vector<1x8x256xf32>,
    %cst_14 = arith.constant dense<0.000000e+00> : vector<8xf32>
    %40 = vector.multi_reduction <add>, %37, %cst_14 [1] : vector<8x256xf32> to vector<8xf32>
    %41 = vector.shape_cast %40 : vector<8xf32> to vector<8x1xf32>
    %42 = vector.shape_cast %41 : vector<8x1xf32> to vector<1x8x1xf32>
    %c0_15 = arith.constant 0 : index
    %c0_16 = arith.constant 0 : index
    %c0_17 = arith.constant 0 : index
    %43 = vector.load %arg6[%c0_15, %c0_16, %c0_17] : memref<1x8x1xf32, #tpu.memory_space<vmem>>, vector<1x8x1xf32>
    tpu.vector_store %arg6[%c0_15, %c0_16, %c0_17], %42 {strides = array<i32>} : memref<1x8x1xf32, #tpu.memory_space<vmem>>, vector<1x8x1xf32>,
    %44 = arith.mulf %37, %37 : vector<8x256xf32>
    %cst_18 = arith.constant dense<0.000000e+00> : vector<8xf32>
    %45 = vector.multi_reduction <add>, %44, %cst_18 [1] : vector<8x256xf32> to vector<8xf32>
    %46 = vector.shape_cast %45 : vector<8xf32> to vector<8x1xf32>
    %47 = vector.shape_cast %46 : vector<8x1xf32> to vector<1x8x1xf32>
    %c0_19 = arith.constant 0 : index
    %c0_20 = arith.constant 0 : index
    %c0_21 = arith.constant 0 : index
    %48 = vector.load %arg7[%c0_19, %c0_20, %c0_21] : memref<1x8x1xf32, #tpu.memory_space<vmem>>, vector<1x8x1xf32>
    tpu.vector_store %arg7[%c0_19, %c0_20, %c0_21], %47 {strides = array<i32>} : memref<1x8x1xf32, #tpu.memory_space<vmem>>, vector<1x8x1xf32>,
    return
  }
  func.func @transform_0(%arg0: i32) -> (i32, i32, i32) {
    %c0_i32 = arith.constant 0 : i32
    %c0_i32_0 = arith.constant 0 : i32
    %c0_i32_1 = arith.constant 0 : i32
    return %arg0, %c0_i32, %c0_i32_0 : i32, i32, i32
  }
  func.func @transform_1(%arg0: i32) -> (i32, i32) {
    %c0_i32 = arith.constant 0 : i32
    %c0_i32_0 = arith.constant 0 : i32
    %c0_i32_1 = arith.constant 0 : i32
    return %c0_i32, %c0_i32_0 : i32, i32
  }
  func.func @transform_2(%arg0: i32) -> (i32, i32) {
    %c0_i32 = arith.constant 0 : i32
    %c0_i32_0 = arith.constant 0 : i32
    %c0_i32_1 = arith.constant 0 : i32
    return %c0_i32, %c0_i32_0 : i32, i32
  }
  func.func @transform_3(%arg0: i32) -> (i32, i32) {
    %c0_i32 = arith.constant 0 : i32
    %c0_i32_0 = arith.constant 0 : i32
    %c0_i32_1 = arith.constant 0 : i32
    return %c0_i32, %c0_i32_0 : i32, i32
  }
  func.func @transform_4(%arg0: i32) -> (i32, i32, i32) {
    %c0_i32 = arith.constant 0 : i32
    %c0_i32_0 = arith.constant 0 : i32
    %c0_i32_1 = arith.constant 0 : i32
    return %arg0, %c0_i32, %c0_i32_0 : i32, i32, i32
  }
  func.func @transform_5(%arg0: i32) -> (i32, i32, i32) {
    %c0_i32 = arith.constant 0 : i32
    %c0_i32_0 = arith.constant 0 : i32
    %c0_i32_1 = arith.constant 0 : i32
    return %arg0, %c0_i32, %c0_i32_0 : i32, i32, i32
  }
  func.func @transform_6(%arg0: i32) -> (i32, i32, i32) {
    %c0_i32 = arith.constant 0 : i32
    %c0_i32_0 = arith.constant 0 : i32
    %c0_i32_1 = arith.constant 0 : i32
    return %arg0, %c0_i32, %c0_i32_0 : i32, i32, i32
  }
}

module attributes {stable_mosaic.version = 11 : i64} {
  func.func @_bn_relu_kernel(%arg0: i32, %arg1: memref<1x8x256xf32, #tpu.memory_space<vmem>>, %arg2: memref<8x1xf32, #tpu.memory_space<vmem>>, %arg3: memref<8x1xf32, #tpu.memory_space<vmem>>, %arg4: memref<1x8x256xf32, #tpu.memory_space<vmem>>) attributes {dimension_semantics = [#tpu.dimension_semantics<parallel>], iteration_bounds = array<i64: 2>, scalar_prefetch = 0 : i64, scratch_operands = 0 : i64, tpu.core_type = #tpu.core_type<tc>, window_params = [{transform_indices = @transform_0, window_bounds = array<i64: 1, 8, 256>}, {pipeline_mode = #tpu.pipeline_mode<synchronous>, transform_indices = @transform_1, window_bounds = array<i64: 8, 1>}, {pipeline_mode = #tpu.pipeline_mode<synchronous>, transform_indices = @transform_2, window_bounds = array<i64: 8, 1>}, {transform_indices = @transform_3, window_bounds = array<i64: 1, 8, 256>}]} {
    %c0 = arith.constant 0 : index
    %c0_0 = arith.constant 0 : index
    %c0_1 = arith.constant 0 : index
    %0 = vector.load %arg1[%c0, %c0_0, %c0_1] : memref<1x8x256xf32, #tpu.memory_space<vmem>>, vector<1x8x256xf32>
    %c0_2 = arith.constant 0 : index
    %c0_3 = arith.constant 0 : index
    %1 = vector.load %arg2[%c0_2, %c0_3] : memref<8x1xf32, #tpu.memory_space<vmem>>, vector<8x1xf32>
    %2 = vector.shape_cast %1 : vector<8x1xf32> to vector<1x8x1xf32>
    %3 = vector.broadcast %2 : vector<1x8x1xf32> to vector<1x8x256xf32>
    %4 = arith.mulf %0, %3 : vector<1x8x256xf32>
    %c0_4 = arith.constant 0 : index
    %c0_5 = arith.constant 0 : index
    %5 = vector.load %arg3[%c0_4, %c0_5] : memref<8x1xf32, #tpu.memory_space<vmem>>, vector<8x1xf32>
    %6 = vector.shape_cast %5 : vector<8x1xf32> to vector<1x8x1xf32>
    %7 = vector.broadcast %6 : vector<1x8x1xf32> to vector<1x8x256xf32>
    %8 = arith.addf %4, %7 : vector<1x8x256xf32>
    %cst = arith.constant 0.000000e+00 : f32
    %9 = vector.broadcast %cst : f32 to vector<1x8x256xf32>
    %10 = arith.maximumf %8, %9 : vector<1x8x256xf32>
    %c0_6 = arith.constant 0 : index
    %c0_7 = arith.constant 0 : index
    %c0_8 = arith.constant 0 : index
    %11 = vector.load %arg4[%c0_6, %c0_7, %c0_8] : memref<1x8x256xf32, #tpu.memory_space<vmem>>, vector<1x8x256xf32>
    tpu.vector_store %arg4[%c0_6, %c0_7, %c0_8], %10 {strides = array<i32>} : memref<1x8x256xf32, #tpu.memory_space<vmem>>, vector<1x8x256xf32>,
    return
  }
  func.func @transform_0(%arg0: i32) -> (i32, i32, i32) {
    %c0_i32 = arith.constant 0 : i32
    %c0_i32_0 = arith.constant 0 : i32
    %c0_i32_1 = arith.constant 0 : i32
    return %arg0, %c0_i32, %c0_i32_0 : i32, i32, i32
  }
  func.func @transform_1(%arg0: i32) -> (i32, i32) {
    %c0_i32 = arith.constant 0 : i32
    %c0_i32_0 = arith.constant 0 : i32
    %c0_i32_1 = arith.constant 0 : i32
    return %c0_i32, %c0_i32_0 : i32, i32
  }
  func.func @transform_2(%arg0: i32) -> (i32, i32) {
    %c0_i32 = arith.constant 0 : i32
    %c0_i32_0 = arith.constant 0 : i32
    %c0_i32_1 = arith.constant 0 : i32
    return %c0_i32, %c0_i32_0 : i32, i32
  }
  func.func @transform_3(%arg0: i32) -> (i32, i32, i32) {
    %c0_i32 = arith.constant 0 : i32
    %c0_i32_0 = arith.constant 0 : i32
    %c0_i32_1 = arith.constant 0 : i32
    return %arg0, %c0_i32, %c0_i32_0 : i32, i32, i32
  }
}

</mosaic_0001>

<llo_original>
// kernel: conv_block_d_forward.5
$region0: #{conv_block_d_forward.5}
  #allocation0 [shape = 'u32[]', space=smem, size = 0x4, offset = 0x4, fixed_abs, tag = 'smem constant byte address 0x4 - core index']
  #allocation1 [shape = 'u32[144,128]{1,0:T(1,128)}', space=vmem, size = 0x12000, scoped, tag = 'internal scratch']
  %s0 = inlined_call_operand.vmem [shape: f32[2,8,256], index: 0, kind: input, shape index: {}]
  %s1 = inlined_call_operand.vmem [shape: f32[8,1], index: 1, kind: input, shape index: {}]
  %s2 = inlined_call_operand.vmem [shape: f32[8,1], index: 2, kind: input, shape index: {}]
  %s3 = inlined_call_operand.vmem [shape: f32[2,8,256], index: 3, kind: output, shape index: {}]
  %s4 = sld [smem:[#allocation0]]
  $region45: #{conv_block_d_forward.5} parent=0
    _
  %s6 = ssub.s32 1, %s4
  %s7 = scalar_select 0, %s6, %s4
  loop: start=0, step=1, limit=4
  $region2: #{conv_block_d_forward.5} parent=0 // loop_pre_header
    _
  $region3: #{conv_block_d_forward.5} parent=0 // loop_header
    %s9 = sphi 0, %s13
    %p10 = scmp.ge.s32.totalorder %s9, 4
    %s19 = sphi 0, %s21
    %s22 = sphi 0, %s19
    %s23 = sphi 0, %s22
    %s39 = sphi 0, %s23
    %s43 = sphi 0, %s43
    %s45 = sphi 0, %s43
    %s46 = sphi 0, %s45
    %s60 = sphi 0, %s46
    %s64 = sphi 0, %s64
    %s66 = sphi 0, %s64
    %s67 = sphi 0, %s66
    %s81 = sphi 0, %s67
    %s87 = sphi 0, %s89
    %s90 = sphi 0, %s87
    %s91 = sphi 0, %s90
    %s107 = sphi 0, %s91
  $region4: #{conv_block_d_forward.5} parent=0 // loop_header_branch
    %12 = sbr.rel (%p10) target = $region8
  $region5: #{conv_block_d_forward.5} parent=0 // loop_body
    %s14 = ssub.s32 %s9, 1
    %s15 = ssub.s32 %s9, 2
    %s16 = sadd.s32 %s9, 1
    %s17 = ssub.s32 %s9, %s16
    %p18 = scmp.eq.s32.totalorder %s17, 0
    %s20 = sadd.s32 %s19, 1
    %s21 = scalar_select %p18, %s19, %s20
    %p24 = pneg %p18
    %p25 = scmp.eq.s32.totalorder %s9, 1
    %p26 = por %p24, %p25
    %p27 = scmp.ne.s32.totalorder %s19, %s22
    %p28 = scmp.eq.s32.totalorder %s9, 0
    %p29 = por %p27, %p28
    %p30 = scmp.ne.s32.totalorder %s19, %s22
    %p31 = scmp.eq.s32.totalorder %s14, 1
    %p32 = por %p30, %p31
    %p33 = scmp.ne.s32.totalorder %s22, %s23
    %p34 = scmp.eq.s32.totalorder %s14, 0
    %p35 = por %p33, %p34
    %p36 = scmp.ne.s32.totalorder %s22, %s23
    %p37 = scmp.eq.s32.totalorder %s15, 1
    %p38 = por %p36, %p37
    %p40 = scmp.ne.s32.totalorder %s23, %s39
    %p41 = scmp.eq.s32.totalorder %s15, 0
    %p42 = por %p40, %p41
    %s44 = sadd.s32 %s43, 1
    %p47 = scmp.eq.s32.totalorder %s9, 1
    %p48 = scmp.ne.s32.totalorder %s43, %s45
    %p49 = scmp.eq.s32.totalorder %s9, 0
    %p50 = por %p48, %p49
    %p51 = scmp.ne.s32.totalorder %s43, %s45
    %p52 = scmp.eq.s32.totalorder %s14, 1
    %p53 = por %p51, %p52
    %p54 = scmp.ne.s32.totalorder %s45, %s46
    %p55 = scmp.eq.s32.totalorder %s14, 0
    %p56 = por %p54, %p55
    %p57 = scmp.ne.s32.totalorder %s45, %s46
    %p58 = scmp.eq.s32.totalorder %s15, 1
    %p59 = por %p57, %p58
    %p61 = scmp.ne.s32.totalorder %s46, %s60
    %p62 = scmp.eq.s32.totalorder %s15, 0
    %p63 = por %p61, %p62
    %s65 = sadd.s32 %s64, 1
    %p68 = scmp.eq.s32.totalorder %s9, 1
    %p69 = scmp.ne.s32.totalorder %s64, %s66
    %p70 = scmp.eq.s32.totalorder %s9, 0
    %p71 = por %p69, %p70
    %p72 = scmp.ne.s32.totalorder %s64, %s66
    %p73 = scmp.eq.s32.totalorder %s14, 1
    %p74 = por %p72, %p73
    %p75 = scmp.ne.s32.totalorder %s66, %s67
    %p76 = scmp.eq.s32.totalorder %s14, 0
    %p77 = por %p75, %p76
    %p78 = scmp.ne.s32.totalorder %s66, %s67
    %p79 = scmp.eq.s32.totalorder %s15, 1
    %p80 = por %p78, %p79
    %p82 = scmp.ne.s32.totalorder %s67, %s81
    %p83 = scmp.eq.s32.totalorder %s15, 0
    %p84 = por %p82, %p83
    %s85 = ssub.s32 %s9, %s16
    %p86 = scmp.eq.s32.totalorder %s85, 0
    %s88 = sadd.s32 %s87, 1
    %s89 = scalar_select %p86, %s87, %s88
    %p92 = pneg %p86
    %p93 = scmp.eq.s32.totalorder %s9, 1
    %p94 = por %p92, %p93
    %p95 = scmp.ne.s32.totalorder %s87, %s90
    %p96 = scmp.eq.s32.totalorder %s9, 0
    %p97 = por %p95, %p96
    %p98 = scmp.ne.s32.totalorder %s87, %s90
    %p99 = scmp.eq.s32.totalorder %s14, 1
    %p100 = por %p98, %p99
    %p101 = scmp.ne.s32.totalorder %s90, %s91
    %p102 = scmp.eq.s32.totalorder %s14, 0
    %p103 = por %p101, %p102
    %p104 = scmp.ne.s32.totalorder %s90, %s91
    %p105 = scmp.eq.s32.totalorder %s15, 1
    %p106 = por %p104, %p105
    %p108 = scmp.ne.s32.totalorder %s91, %s107
    %p109 = scmp.eq.s32.totalorder %s15, 0
    %p110 = por %p108, %p109
    %p111 = scmp.le.s32.totalorder 1, %s9
    %p112 = scmp.lt.s32.totalorder %s9, 3
    %p113 = pnand %p111, %p112
    %p114 = pneg %p113
    // Predicated region
    $region9: #{conv_block_d_forward.5} parent=5 // pred_check
      _
    $region10: #{conv_block_d_forward.5} parent=5 // pred_check_branch
      %116 = sbr.rel (%p113) target = $region12
    $region11: #{conv_block_d_forward.5} parent=5 // pred_region
      %s117 = ssub.s32 %s9, 1
      // Predicated region
      $region13: #{conv_block_d_forward.5} parent=11 // pred_check
        %p118 = pneg %p56
      $region14: #{conv_block_d_forward.5} parent=11 // pred_check_branch
        %120 = sbr.rel (%p118) target = $region16
      $region15: #{conv_block_d_forward.5} parent=11 // pred_region
        _
      $region16: #{conv_block_d_forward.5} parent=11 // pred_fallthru
        _
      // Predicated region
      $region17: #{conv_block_d_forward.5} parent=11 // pred_check
        %p121 = pneg %p77
      $region18: #{conv_block_d_forward.5} parent=11 // pred_check_branch
        %123 = sbr.rel (%p121) target = $region20
      $region19: #{conv_block_d_forward.5} parent=11 // pred_region
        _
      $region20: #{conv_block_d_forward.5} parent=11 // pred_fallthru
        _
    $region12: #{conv_block_d_forward.5} parent=5 // pred_fallthru
      _
    %p124 = scmp.lt.s32.totalorder %s9, 2
    // Predicated region
    $region21: #{conv_block_d_forward.5} parent=5 // pred_check
      %p125 = pneg %p124
    $region22: #{conv_block_d_forward.5} parent=5 // pred_check_branch
      %127 = sbr.rel (%p125) target = $region24
    $region23: #{conv_block_d_forward.5} parent=5 // pred_region
      // Predicated region
      $region25: #{conv_block_d_forward.5} parent=23 // pred_check
        %p128 = pneg %p29
      $region26: #{conv_block_d_forward.5} parent=23 // pred_check_branch
        %130 = sbr.rel (%p128) target = $region28
      $region27: #{conv_block_d_forward.5} parent=23 // pred_region
        %p131 = scmp.lt.s32.totalorder %s9, 1
        %s132 = scalar_select %p131, %s9, 1
        %s133 = smul.addr %s132, 2
        %s134 = smul.addr %s133, 8
        %s135 = scalar_lea.vmem %s0, %s134
      $region28: #{conv_block_d_forward.5} parent=23 // pred_fallthru
        _
    $region24: #{conv_block_d_forward.5} parent=5 // pred_fallthru
      _
    %p136 = scmp.le.s32.totalorder 1, %s9
    %p137 = scmp.lt.s32.totalorder %s9, 3
    %p138 = pnand %p136, %p137
    %p139 = pneg %p138
    // Predicated region
    $region29: #{conv_block_d_forward.5} parent=5 // pred_check
      _
    $region30: #{conv_block_d_forward.5} parent=5 // pred_check_branch
      %141 = sbr.rel (%p138) target = $region32
    $region31: #{conv_block_d_forward.5} parent=5 // pred_region
      %s142 = ssub.s32 %s9, 1
      %p143 = scmp.lt.s32.totalorder %s14, 1
      %s144 = scalar_select %p143, %s14, 1
      %s145 = smul.addr %s144, 2
      %s146 = smul.addr %s145, 8
      %s147 = scalar_lea.vmem %s0, %s146
      %p148 = pneg %p35
      %p149 = pneg %p32
      %p150 = pneg %p56
      %p151 = pneg %p53
      %p152 = pneg %p77
      %p153 = pneg %p74
      %p154 = pneg %p103
      %p155 = pneg %p100
      %p156 = scmp.lt.s32.totalorder %s14, 1
      %s157 = scalar_select %p156, %s14, 1
      %s158 = smul.addr %s157, 2
      %s159 = smul.addr %s158, 8
      %s160 = scalar_lea.vmem %s3, %s159
      %p161 = scmp.lt.s32.totalorder %s14, 1
      %s162 = scalar_select %p161, %s14, 1
      %s163 = smul.addr %s162, 2
      %s164 = smul.addr %s163, 8
      %s165 = scalar_lea.vmem %s0, %s164
      %p166 = scmp.lt.s32.totalorder %s14, 1
      %s167 = scalar_select %p166, %s14, 1
      %s168 = smul.addr %s167, 2
      %s169 = smul.addr %s168, 8
      %s170 = scalar_lea.vmem %s3, %s169
      %v171 = vld [vmem:[%s165] sm:$0xff]
      %v172 = vld [vmem:[%s165 + $0x8] sm:$0xff]
      %v173 = vld [vmem:[%s1] sm:$0xff]
      %175 = vset.pattern.permute.xlu0 0
      %176 = vperm.xlu0 %175, %v173
      %v177 = vpop.permute.xlu0 %176
      %v179 = vmul.f32 %v171, %v177
      %v180 = vmul.f32 %v172, %v177
      %v181 = vld [vmem:[%s2] sm:$0xff]
      %183 = vset.pattern.permute.xlu0 0
      %184 = vperm.xlu0 %183, %v181
      %v185 = vpop.permute.xlu0 %184
      %v187 = vadd.f32 %v179, %v185
      %v188 = vadd.f32 %v180, %v185
      %v189 = vmax.f32 %v187, 0.0
      %v190 = vmax.f32 %v188, 0.0
      %191 = vst [vmem:[%s170] sm:$0xff] %v189
      %192 = vst [vmem:[%s170 + $0x8] sm:$0xff] %v190
      %p193 = scmp.lt.s32.totalorder %s14, 1
      %s194 = scalar_select %p193, %s14, 1
      %s195 = smul.addr %s194, 2
      %s196 = smul.addr %s195, 8
      %s197 = scalar_lea.vmem %s3, %s196
      // Predicated region
      $region33: #{conv_block_d_forward.5} parent=31 // pred_check
        %p198 = pneg %p100
      $region34: #{conv_block_d_forward.5} parent=31 // pred_check_branch
        %200 = sbr.rel (%p198) target = $region36
      $region35: #{conv_block_d_forward.5} parent=31 // pred_region
        _
      $region36: #{conv_block_d_forward.5} parent=31 // pred_fallthru
        _
    $region32: #{conv_block_d_forward.5} parent=5 // pred_fallthru
      _
    %p201 = scmp.le.s32.totalorder 2, %s9
    // Predicated region
    $region37: #{conv_block_d_forward.5} parent=5 // pred_check
      %p202 = pneg %p201
    $region38: #{conv_block_d_forward.5} parent=5 // pred_check_branch
      %204 = sbr.rel (%p202) target = $region40
    $region39: #{conv_block_d_forward.5} parent=5 // pred_region
      %s205 = ssub.s32 %s9, 2
      // Predicated region
      $region41: #{conv_block_d_forward.5} parent=39 // pred_check
        %p206 = pneg %p106
      $region42: #{conv_block_d_forward.5} parent=39 // pred_check_branch
        %208 = sbr.rel (%p206) target = $region44
      $region43: #{conv_block_d_forward.5} parent=39 // pred_region
        %p209 = scmp.lt.s32.totalorder %s15, 1
        %s210 = scalar_select %p209, %s15, 1
        %s211 = smul.addr %s210, 2
        %s212 = smul.addr %s211, 8
        %s213 = scalar_lea.vmem %s3, %s212
      $region44: #{conv_block_d_forward.5} parent=39 // pred_fallthru
        _
    $region40: #{conv_block_d_forward.5} parent=5 // pred_fallthru
      _
  $region6: #{conv_block_d_forward.5} parent=0 // loop_footer
    %s13 = sadd.s32 1, %s9
  $region7: #{conv_block_d_forward.5} parent=0 // loop_footer_branch
    %8 = sbr.rel target = $region3
  $region8: #{conv_block_d_forward.5} parent=0 // loop_exit
    _

// kernel: conv_block_d_forward.3
$region0: #{conv_block_d_forward.3}
  #allocation0 [shape = 'u32[]', space=smem, size = 0x4, offset = 0x4, fixed_abs, tag = 'smem constant byte address 0x4 - core index']
  #allocation1 [shape = 'u32[144,128]{1,0:T(1,128)}', space=vmem, size = 0x12000, scoped, tag = 'internal scratch']
  %s0 = inlined_call_operand.vmem [shape: f32[2,4,256], index: 0, kind: input, shape index: {}]
  %s1 = inlined_call_operand.vmem [shape: f32[8,36], index: 1, kind: input, shape index: {}]
  %s2 = inlined_call_operand.vmem [shape: f32[2,8,256], index: 2, kind: output, shape index: {0}]
  %s3 = inlined_call_operand.vmem [shape: f32[2,8,1], index: 3, kind: output, shape index: {1}]
  %s4 = inlined_call_operand.vmem [shape: f32[2,8,1], index: 4, kind: output, shape index: {2}]
  %5 = xla_tuple %s2, %s3, %s4
  %s6 = sld [smem:[#allocation0]]
  $region57: #{conv_block_d_forward.3} parent=0
    _
  %s8 = ssub.s32 1, %s6
  %s9 = scalar_select 0, %s8, %s6
  loop: start=0, step=1, limit=4
  $region2: #{conv_block_d_forward.3} parent=0 // loop_pre_header
    _
  $region3: #{conv_block_d_forward.3} parent=0 // loop_header
    %s11 = sphi 0, %s15
    %p12 = scmp.ge.s32.totalorder %s11, 4
    %s21 = sphi 0, %s23
    %s24 = sphi 0, %s21
    %s25 = sphi 0, %s24
    %s41 = sphi 0, %s25
    %s45 = sphi 0, %s45
    %s47 = sphi 0, %s45
    %s48 = sphi 0, %s47
    %s62 = sphi 0, %s48
    %s68 = sphi 0, %s70
    %s71 = sphi 0, %s68
    %s72 = sphi 0, %s71
    %s88 = sphi 0, %s72
    %s94 = sphi 0, %s96
    %s97 = sphi 0, %s94
    %s98 = sphi 0, %s97
    %s114 = sphi 0, %s98
    %s120 = sphi 0, %s122
    %s123 = sphi 0, %s120
    %s124 = sphi 0, %s123
    %s140 = sphi 0, %s124
  $region4: #{conv_block_d_forward.3} parent=0 // loop_header_branch
    %14 = sbr.rel (%p12) target = $region8
  $region5: #{conv_block_d_forward.3} parent=0 // loop_body
    %s16 = ssub.s32 %s11, 1
    %s17 = ssub.s32 %s11, 2
    %s18 = sadd.s32 %s11, 1
    %s19 = ssub.s32 %s11, %s18
    %p20 = scmp.eq.s32.totalorder %s19, 0
    %s22 = sadd.s32 %s21, 1
    %s23 = scalar_select %p20, %s21, %s22
    %p26 = pneg %p20
    %p27 = scmp.eq.s32.totalorder %s11, 1
    %p28 = por %p26, %p27
    %p29 = scmp.ne.s32.totalorder %s21, %s24
    %p30 = scmp.eq.s32.totalorder %s11, 0
    %p31 = por %p29, %p30
    %p32 = scmp.ne.s32.totalorder %s21, %s24
    %p33 = scmp.eq.s32.totalorder %s16, 1
    %p34 = por %p32, %p33
    %p35 = scmp.ne.s32.totalorder %s24, %s25
    %p36 = scmp.eq.s32.totalorder %s16, 0
    %p37 = por %p35, %p36
    %p38 = scmp.ne.s32.totalorder %s24, %s25
    %p39 = scmp.eq.s32.totalorder %s17, 1
    %p40 = por %p38, %p39
    %p42 = scmp.ne.s32.totalorder %s25, %s41
    %p43 = scmp.eq.s32.totalorder %s17, 0
    %p44 = por %p42, %p43
    %s46 = sadd.s32 %s45, 1
    %p49 = scmp.eq.s32.totalorder %s11, 1
    %p50 = scmp.ne.s32.totalorder %s45, %s47
    %p51 = scmp.eq.s32.totalorder %s11, 0
    %p52 = por %p50, %p51
    %p53 = scmp.ne.s32.totalorder %s45, %s47
    %p54 = scmp.eq.s32.totalorder %s16, 1
    %p55 = por %p53, %p54
    %p56 = scmp.ne.s32.totalorder %s47, %s48
    %p57 = scmp.eq.s32.totalorder %s16, 0
    %p58 = por %p56, %p57
    %p59 = scmp.ne.s32.totalorder %s47, %s48
    %p60 = scmp.eq.s32.totalorder %s17, 1
    %p61 = por %p59, %p60
    %p63 = scmp.ne.s32.totalorder %s48, %s62
    %p64 = scmp.eq.s32.totalorder %s17, 0
    %p65 = por %p63, %p64
    %s66 = ssub.s32 %s11, %s18
    %p67 = scmp.eq.s32.totalorder %s66, 0
    %s69 = sadd.s32 %s68, 1
    %s70 = scalar_select %p67, %s68, %s69
    %p73 = pneg %p67
    %p74 = scmp.eq.s32.totalorder %s11, 1
    %p75 = por %p73, %p74
    %p76 = scmp.ne.s32.totalorder %s68, %s71
    %p77 = scmp.eq.s32.totalorder %s11, 0
    %p78 = por %p76, %p77
    %p79 = scmp.ne.s32.totalorder %s68, %s71
    %p80 = scmp.eq.s32.totalorder %s16, 1
    %p81 = por %p79, %p80
    %p82 = scmp.ne.s32.totalorder %s71, %s72
    %p83 = scmp.eq.s32.totalorder %s16, 0
    %p84 = por %p82, %p83
    %p85 = scmp.ne.s32.totalorder %s71, %s72
    %p86 = scmp.eq.s32.totalorder %s17, 1
    %p87 = por %p85, %p86
    %p89 = scmp.ne.s32.totalorder %s72, %s88
    %p90 = scmp.eq.s32.totalorder %s17, 0
    %p91 = por %p89, %p90
    %s92 = ssub.s32 %s11, %s18
    %p93 = scmp.eq.s32.totalorder %s92, 0
    %s95 = sadd.s32 %s94, 1
    %s96 = scalar_select %p93, %s94, %s95
    %p99 = pneg %p93
    %p100 = scmp.eq.s32.totalorder %s11, 1
    %p101 = por %p99, %p100
    %p102 = scmp.ne.s32.totalorder %s94, %s97
    %p103 = scmp.eq.s32.totalorder %s11, 0
    %p104 = por %p102, %p103
    %p105 = scmp.ne.s32.totalorder %s94, %s97
    %p106 = scmp.eq.s32.totalorder %s16, 1
    %p107 = por %p105, %p106
    %p108 = scmp.ne.s32.totalorder %s97, %s98
    %p109 = scmp.eq.s32.totalorder %s16, 0
    %p110 = por %p108, %p109
    %p111 = scmp.ne.s32.totalorder %s97, %s98
    %p112 = scmp.eq.s32.totalorder %s17, 1
    %p113 = por %p111, %p112
    %p115 = scmp.ne.s32.totalorder %s98, %s114
    %p116 = scmp.eq.s32.totalorder %s17, 0
    %p117 = por %p115, %p116
    %s118 = ssub.s32 %s11, %s18
    %p119 = scmp.eq.s32.totalorder %s118, 0
    %s121 = sadd.s32 %s120, 1
    %s122 = scalar_select %p119, %s120, %s121
    %p125 = pneg %p119
    %p126 = scmp.eq.s32.totalorder %s11, 1
    %p127 = por %p125, %p126
    %p128 = scmp.ne.s32.totalorder %s120, %s123
    %p129 = scmp.eq.s32.totalorder %s11, 0
    %p130 = por %p128, %p129
    %p131 = scmp.ne.s32.totalorder %s120, %s123
    %p132 = scmp.eq.s32.totalorder %s16, 1
    %p133 = por %p131, %p132
    %p134 = scmp.ne.s32.totalorder %s123, %s124
    %p135 = scmp.eq.s32.totalorder %s16, 0
    %p136 = por %p134, %p135
    %p137 = scmp.ne.s32.totalorder %s123, %s124
    %p138 = scmp.eq.s32.totalorder %s17, 1
    %p139 = por %p137, %p138
    %p141 = scmp.ne.s32.totalorder %s124, %s140
    %p142 = scmp.eq.s32.totalorder %s17, 0
    %p143 = por %p141, %p142
    %p144 = scmp.le.s32.totalorder 1, %s11
    %p145 = scmp.lt.s32.totalorder %s11, 3
    %p146 = pnand %p144, %p145
    %p147 = pneg %p146
    // Predicated region
    $region9: #{conv_block_d_forward.3} parent=5 // pred_check
      _
    $region10: #{conv_block_d_forward.3} parent=5 // pred_check_branch
      %149 = sbr.rel (%p146) target = $region12
    $region11: #{conv_block_d_forward.3} parent=5 // pred_region
      %s150 = ssub.s32 %s11, 1
      // Predicated region
      $region13: #{conv_block_d_forward.3} parent=11 // pred_check
        %p151 = pneg %p58
      $region14: #{conv_block_d_forward.3} parent=11 // pred_check_branch
        %153 = sbr.rel (%p151) target = $region16
      $region15: #{conv_block_d_forward.3} parent=11 // pred_region
        _
      $region16: #{conv_block_d_forward.3} parent=11 // pred_fallthru
        _
    $region12: #{conv_block_d_forward.3} parent=5 // pred_fallthru
      _
    %p154 = scmp.lt.s32.totalorder %s11, 2
    // Predicated region
    $region17: #{conv_block_d_forward.3} parent=5 // pred_check
      %p155 = pneg %p154
    $region18: #{conv_block_d_forward.3} parent=5 // pred_check_branch
      %157 = sbr.rel (%p155) target = $region20
    $region19: #{conv_block_d_forward.3} parent=5 // pred_region
      // Predicated region
      $region21: #{conv_block_d_forward.3} parent=19 // pred_check
        %p158 = pneg %p31
      $region22: #{conv_block_d_forward.3} parent=19 // pred_check_branch
        %160 = sbr.rel (%p158) target = $region24
      $region23: #{conv_block_d_forward.3} parent=19 // pred_region
        %p161 = scmp.lt.s32.totalorder %s11, 1
        %s162 = scalar_select %p161, %s11, 1
        %s163 = smul.addr %s162, 2
        %s164 = smul.addr %s163, 4
        %s165 = scalar_lea.vmem %s0, %s164
      $region24: #{conv_block_d_forward.3} parent=19 // pred_fallthru
        _
    $region20: #{conv_block_d_forward.3} parent=5 // pred_fallthru
      _
    %p166 = scmp.le.s32.totalorder 1, %s11
    %p167 = scmp.lt.s32.totalorder %s11, 3
    %p168 = pnand %p166, %p167
    %p169 = pneg %p168
    // Predicated region
    $region25: #{conv_block_d_forward.3} parent=5 // pred_check
      _
    $region26: #{conv_block_d_forward.3} parent=5 // pred_check_branch
      %171 = sbr.rel (%p168) target = $region28
    $region27: #{conv_block_d_forward.3} parent=5 // pred_region
      %s172 = ssub.s32 %s11, 1
      %p173 = scmp.lt.s32.totalorder %s16, 1
      %s174 = scalar_select %p173, %s16, 1
      %s175 = smul.addr %s174, 2
      %s176 = smul.addr %s175, 4
      %s177 = scalar_lea.vmem %s0, %s176
      %p178 = pneg %p37
      %p179 = pneg %p34
      %p180 = pneg %p58
      %p181 = pneg %p55
      %p182 = pneg %p84
      %p183 = pneg %p81
      %p184 = scmp.lt.s32.totalorder %s16, 1
      %s185 = scalar_select %p184, %s16, 1
      %s186 = smul.addr %s185, 2
      %s187 = smul.addr %s186, 8
      %s188 = scalar_lea.vmem %s2, %s187
      %p189 = pneg %p110
      %p190 = pneg %p107
      %p191 = scmp.lt.s32.totalorder %s16, 1
      %s192 = scalar_select %p191, %s16, 1
      %s193 = smul.addr %s192, 8
      %s194 = scalar_lea.vmem %s3, %s193
      %p195 = pneg %p136
      %p196 = pneg %p133
      %p197 = scmp.lt.s32.totalorder %s16, 1
      %s198 = scalar_select %p197, %s16, 1
      %s199 = smul.addr %s198, 8
      %s200 = scalar_lea.vmem %s4, %s199
      %p201 = scmp.lt.s32.totalorder %s16, 1
      %s202 = scalar_select %p201, %s16, 1
      %s203 = smul.addr %s202, 2
      %s204 = smul.addr %s203, 4
      %s205 = scalar_lea.vmem %s0, %s204
      %p206 = scmp.lt.s32.totalorder %s16, 1
      %s207 = scalar_select %p206, %s16, 1
      %s208 = smul.addr %s207, 2
      %s209 = smul.addr %s208, 8
      %s210 = scalar_lea.vmem %s2, %s209
      %p211 = scmp.lt.s32.totalorder %s16, 1
      %s212 = scalar_select %p211, %s16, 1
      %s213 = smul.addr %s212, 8
      %s214 = scalar_lea.vmem %s3, %s213
      %p215 = scmp.lt.s32.totalorder %s16, 1
      %s216 = scalar_select %p215, %s16, 1
      %s217 = smul.addr %s216, 8
      %s218 = scalar_lea.vmem %s4, %s217
      %v220 = vld [vmem:[%s205] sm:$0xff]
      %v222 = vrot.slane %v220, 4
      %224 = vrot.lane.b32.xlu0 %v220, 112
      %v225 = vpop.permute.xlu0 %224
      %v226 = vrot.slane %v225, 4
      %228 = vrot.lane.b32.xlu0 %v220, 96
      %v229 = vpop.permute.xlu0 %228
      %v230 = vrot.slane %v229, 4
      %232 = vrot.lane.b32.xlu0 %v220, 80
      %v233 = vpop.permute.xlu0 %232
      %v234 = vrot.slane %v233, 4
      %236 = vrot.lane.b32.xlu0 %v220, 64
      %v237 = vpop.permute.xlu0 %236
      %v238 = vrot.slane %v237, 4
      %240 = vrot.lane.b32.xlu0 %v220, 48
      %v241 = vpop.permute.xlu0 %240
      %v242 = vrot.slane %v241, 4
      %244 = vrot.lane.b32.xlu0 %v220, 32
      %v245 = vpop.permute.xlu0 %244
      %v246 = vrot.slane %v245, 4
      %248 = vrot.lane.b32.xlu0 %v220, 16
      %v249 = vpop.permute.xlu0 %248
      %v250 = vrot.slane %v249, 4
      %v259 = vcombine.low %v220, %v229
      %v261 = vunpack.c.l.s4 1983009808
      %v262 = vunpack.c.0.s8 %v261
      %v263 = vlaneseq
      %v264 = vshrl.u32 %v263, 7
      %v265 = vsub.s32 %v262, %v264
      %v266 = vrot.slane %v259, %v265
      %v267 = vcombine.low %v225, %v233
      %v269 = vunpack.c.l.s4 1983009808
      %v270 = vunpack.c.0.s8 %v269
      %v271 = vlaneseq
      %v272 = vshrl.u32 %v271, 7
      %v273 = vsub.s32 %v270, %v272
      %v274 = vrot.slane %v267, %v273
      %v275 = vcombine.low %v266, %v274
      %v276 = vcombine.high %v266, %v274
      %v278 = vunpack.c.l.s4 1934713408
      %v279 = vunpack.c.0.s8 %v278
      %v280 = vlaneseq
      %v281 = vshrl.u32 %v280, 7
      %v282 = vsub.s32 %v279, %v281
      %v283 = vrot.slane %v275, %v282
      %v285 = vunpack.c.l.s4 1934713408
      %v286 = vunpack.c.0.s8 %v285
      %v287 = vlaneseq
      %v288 = vshrl.u32 %v287, 7
      %v289 = vsub.s32 %v286, %v288
      %v290 = vrot.slane %v276, %v289
      %v291 = vcombine.high %v283, 0.0
      %v292 = vcombine.high %v290, 0.0
      %v293 = vcombine.low %v237, %v245
      %v295 = vunpack.c.l.s4 1983009808
      %v296 = vunpack.c.0.s8 %v295
      %v297 = vlaneseq
      %v298 = vshrl.u32 %v297, 7
      %v299 = vsub.s32 %v296, %v298
      %v300 = vrot.slane %v293, %v299
      %v301 = vcombine.low %v241, %v249
      %v303 = vunpack.c.l.s4 1983009808
      %v304 = vunpack.c.0.s8 %v303
      %v305 = vlaneseq
      %v306 = vshrl.u32 %v305, 7
      %v307 = vsub.s32 %v304, %v306
      %v308 = vrot.slane %v301, %v307
      %v309 = vcombine.low %v300, %v308
      %v310 = vcombine.high %v300, %v308
      %v312 = vunpack.c.l.s4 1934713408
      %v313 = vunpack.c.0.s8 %v312
      %v314 = vlaneseq
      %v315 = vshrl.u32 %v314, 7
      %v316 = vsub.s32 %v313, %v315
      %v317 = vrot.slane %v309, %v316
      %v319 = vunpack.c.l.s4 1934713408
      %v320 = vunpack.c.0.s8 %v319
      %v321 = vlaneseq
      %v322 = vshrl.u32 %v321, 7
      %v323 = vsub.s32 %v320, %v322
      %v324 = vrot.slane %v310, %v323
      %v325 = vcombine.high %v317, 0.0
      %v326 = vcombine.high %v324, 0.0
      %v327 = vcombine.low %v222, %v230
      %v329 = vunpack.c.l.s4 1983009808
      %v330 = vunpack.c.0.s8 %v329
      %v331 = vlaneseq
      %v332 = vshrl.u32 %v331, 7
      %v333 = vsub.s32 %v330, %v332
      %v334 = vrot.slane %v327, %v333
      %v335 = vcombine.low %v226, %v234
      %v337 = vunpack.c.l.s4 1983009808
      %v338 = vunpack.c.0.s8 %v337
      %v339 = vlaneseq
      %v340 = vshrl.u32 %v339, 7
      %v341 = vsub.s32 %v338, %v340
      %v342 = vrot.slane %v335, %v341
      %v343 = vcombine.low %v334, %v342
      %v344 = vcombine.high %v334, %v342
      %v346 = vunpack.c.l.s4 1934713408
      %v347 = vunpack.c.0.s8 %v346
      %v348 = vlaneseq
      %v349 = vshrl.u32 %v348, 7
      %v350 = vsub.s32 %v347, %v349
      %v351 = vrot.slane %v343, %v350
      %v353 = vunpack.c.l.s4 1934713408
      %v354 = vunpack.c.0.s8 %v353
      %v355 = vlaneseq
      %v356 = vshrl.u32 %v355, 7
      %v357 = vsub.s32 %v354, %v356
      %v358 = vrot.slane %v344, %v357
      %v359 = vcombine.high %v351, 0.0
      %v360 = vcombine.high %v358, 0.0
      %v361 = vcombine.low %v238, %v246
      %v363 = vunpack.c.l.s4 1983009808
      %v364 = vunpack.c.0.s8 %v363
      %v365 = vlaneseq
      %v366 = vshrl.u32 %v365, 7
      %v367 = vsub.s32 %v364, %v366
      %v368 = vrot.slane %v361, %v367
      %v369 = vcombine.low %v242, %v250
      %v371 = vunpack.c.l.s4 1983009808
      %v372 = vunpack.c.0.s8 %v371
      %v373 = vlaneseq
      %v374 = vshrl.u32 %v373, 7
      %v375 = vsub.s32 %v372, %v374
      %v376 = vrot.slane %v369, %v375
      %v377 = vcombine.low %v368, %v376
      %v378 = vcombine.high %v368, %v376
      %v380 = vunpack.c.l.s4 1934713408
      %v381 = vunpack.c.0.s8 %v380
      %v382 = vlaneseq
      %v383 = vshrl.u32 %v382, 7
      %v384 = vsub.s32 %v381, %v383
      %v385 = vrot.slane %v377, %v384
      %v387 = vunpack.c.l.s4 1934713408
      %v388 = vunpack.c.0.s8 %v387
      %v389 = vlaneseq
      %v390 = vshrl.u32 %v389, 7
      %v391 = vsub.s32 %v388, %v390
      %v392 = vrot.slane %v378, %v391
      %v393 = vcombine.high %v385, 0.0
      %v394 = vcombine.high %v392, 0.0
      %v395 = vld [vmem:[%s1] sm:$0xff]
      %v412 = vcombine.low %v283, %v317
      %v413 = vcombine.low %v351, %v385
      %v414 = vcombine.low %v291, %v325
      %v415 = vcombine.low %v359, %v393
      %v416 = vcombine.low %v290, %v324
      %v417 = vcombine.low %v358, %v392
      %v418 = vcombine.low %v292, %v326
      %v419 = vcombine.low %v360, %v394
      %vm420 = vcmask 1040384
      %v421 = vrot.slane %v412, 7
      %v422 = vrot.slane %v413, 7
      %v423 = vsel %vm420, %v421, %v422
      %v424 = vrot.slane %v414, 7
      %v425 = vrot.slane %v415, 7
      %v426 = vsel %vm420, %v424, %v425
      %v427 = vrot.slane %v416, 7
      %v428 = vrot.slane %v417, 7
      %v429 = vsel %vm420, %v427, %v428
      %v430 = vrot.slane %v418, 7
      %v431 = vrot.slane %v419, 7
      %v432 = vsel %vm420, %v430, %v431
      %v441 = vsel %vm420, 0.0, %v421
      %v442 = vsel %vm420, 0.0, %v424
      %v443 = vsel %vm420, 0.0, %v427
      %v444 = vsel %vm420, 0.0, %v430
      %v445 = vsel %vm420, %v422, 0.0
      %v446 = vsel %vm420, %v425, 0.0
      %v447 = vsel %vm420, %v428, 0.0
      %v448 = vsel %vm420, %v431, 0.0
      %457 = vrot.lane.b32.xlu0 %v441, 1
      %v458 = vpop.permute.xlu0 %457
      %459 = vrot.lane.b32.xlu0 %v423, 1
      %v460 = vpop.permute.xlu0 %459
      %461 = vrot.lane.b32.xlu0 %v445, 1
      %v462 = vpop.permute.xlu0 %461
      %463 = vrot.lane.b32.xlu0 %v442, 1
      %v464 = vpop.permute.xlu0 %463
      %465 = vrot.lane.b32.xlu0 %v426, 1
      %v466 = vpop.permute.xlu0 %465
      %467 = vrot.lane.b32.xlu0 %v446, 1
      %v468 = vpop.permute.xlu0 %467
      %469 = vrot.lane.b32.xlu0 %v443, 1
      %v470 = vpop.permute.xlu0 %469
      %471 = vrot.lane.b32.xlu0 %v429, 1
      %v472 = vpop.permute.xlu0 %471
      %473 = vrot.lane.b32.xlu0 %v447, 1
      %v474 = vpop.permute.xlu0 %473
      %475 = vrot.lane.b32.xlu0 %v444, 1
      %v476 = vpop.permute.xlu0 %475
      %477 = vrot.lane.b32.xlu0 %v432, 1
      %v478 = vpop.permute.xlu0 %477
      %479 = vrot.lane.b32.xlu0 %v448, 1
      %v480 = vpop.permute.xlu0 %479
      %vm493 = vcmask 7168
      %v494 = vsel %vm493, 0.0, %v458
      %v495 = vsel %vm493, 0.0, %v460
      %v496 = vsel %vm493, 0.0, %v462
      %v497 = vsel %vm493, 0.0, %v464
      %v498 = vsel %vm493, 0.0, %v466
      %v499 = vsel %vm493, 0.0, %v468
      %v500 = vsel %vm493, 0.0, %v470
      %v501 = vsel %vm493, 0.0, %v472
      %v502 = vsel %vm493, 0.0, %v474
      %v503 = vsel %vm493, 0.0, %v476
      %v504 = vsel %vm493, 0.0, %v478
      %v505 = vsel %vm493, 0.0, %v480
      %vm506 = vcmask 138240
      %v507 = vsel %vm506, %v494, 0.0
      %v508 = vsel %vm506, %v495, 0.0
      %v509 = vsel %vm506, %v496, 0.0
      %v510 = vsel %vm506, %v497, 0.0
      %v511 = vsel %vm506, %v498, 0.0
      %v512 = vsel %vm506, %v499, 0.0
      %v513 = vsel %vm506, %v500, 0.0
      %v514 = vsel %vm506, %v501, 0.0
      %v515 = vsel %vm506, %v502, 0.0
      %v516 = vsel %vm506, %v503, 0.0
      %v517 = vsel %vm506, %v504, 0.0
      %v518 = vsel %vm506, %v505, 0.0
      %v519 = vcombine.low %v507, %v513
      %v520 = vcombine.high %v507, %v513
      %v522 = vunpack.c.l.s4 1983009808
      %v523 = vunpack.c.0.s8 %v522
      %v524 = vlaneseq
      %v525 = vshrl.u32 %v524, 7
      %v526 = vsub.s32 %v523, %v525
      %v527 = vrot.slane %v519, %v526
      %v529 = vunpack.c.l.s4 1983009808
      %v530 = vunpack.c.0.s8 %v529
      %v531 = vlaneseq
      %v532 = vshrl.u32 %v531, 7
      %v533 = vsub.s32 %v530, %v532
      %v534 = vrot.slane %v520, %v533
      %v535 = vcombine.low %v510, %v516
      %v536 = vcombine.high %v510, %v516
      %v538 = vunpack.c.l.s4 1983009808
      %v539 = vunpack.c.0.s8 %v538
      %v540 = vlaneseq
      %v541 = vshrl.u32 %v540, 7
      %v542 = vsub.s32 %v539, %v541
      %v543 = vrot.slane %v535, %v542
      %v545 = vunpack.c.l.s4 1983009808
      %v546 = vunpack.c.0.s8 %v545
      %v547 = vlaneseq
      %v548 = vshrl.u32 %v547, 7
      %v549 = vsub.s32 %v546, %v548
      %v550 = vrot.slane %v536, %v549
      %v551 = vcombine.low %v527, %v543
      %v552 = vcombine.high %v527, %v543
      %v554 = vunpack.c.l.s4 1934713408
      %v555 = vunpack.c.0.s8 %v554
      %v556 = vlaneseq
      %v557 = vshrl.u32 %v556, 7
      %v558 = vsub.s32 %v555, %v557
      %v559 = vrot.slane %v551, %v558
      %v561 = vunpack.c.l.s4 1934713408
      %v562 = vunpack.c.0.s8 %v561
      %v563 = vlaneseq
      %v564 = vshrl.u32 %v563, 7
      %v565 = vsub.s32 %v562, %v564
      %v566 = vrot.slane %v552, %v565
      %v567 = vcombine.low %v534, %v550
      %v568 = vcombine.high %v534, %v550
      %v570 = vunpack.c.l.s4 1934713408
      %v571 = vunpack.c.0.s8 %v570
      %v572 = vlaneseq
      %v573 = vshrl.u32 %v572, 7
      %v574 = vsub.s32 %v571, %v573
      %v575 = vrot.slane %v567, %v574
      %v577 = vunpack.c.l.s4 1934713408
      %v578 = vunpack.c.0.s8 %v577
      %v579 = vlaneseq
      %v580 = vshrl.u32 %v579, 7
      %v581 = vsub.s32 %v578, %v580
      %v582 = vrot.slane %v568, %v581
      %v583 = vcombine.high %v559, 0.0
      %v584 = vcombine.high %v566, 0.0
      %v585 = vcombine.high %v575, 0.0
      %v586 = vcombine.high %v582, 0.0
      %v587 = vcombine.low %v508, %v514
      %v588 = vcombine.high %v508, %v514
      %v590 = vunpack.c.l.s4 1983009808
      %v591 = vunpack.c.0.s8 %v590
      %v592 = vlaneseq
      %v593 = vshrl.u32 %v592, 7
      %v594 = vsub.s32 %v591, %v593
      %v595 = vrot.slane %v587, %v594
      %v597 = vunpack.c.l.s4 1983009808
      %v598 = vunpack.c.0.s8 %v597
      %v599 = vlaneseq
      %v600 = vshrl.u32 %v599, 7
      %v601 = vsub.s32 %v598, %v600
      %v602 = vrot.slane %v588, %v601
      %v603 = vcombine.low %v511, %v517
      %v604 = vcombine.high %v511, %v517
      %v606 = vunpack.c.l.s4 1983009808
      %v607 = vunpack.c.0.s8 %v606
      %v608 = vlaneseq
      %v609 = vshrl.u32 %v608, 7
      %v610 = vsub.s32 %v607, %v609
      %v611 = vrot.slane %v603, %v610
      %v613 = vunpack.c.l.s4 1983009808
      %v614 = vunpack.c.0.s8 %v613
      %v615 = vlaneseq
      %v616 = vshrl.u32 %v615, 7
      %v617 = vsub.s32 %v614, %v616
      %v618 = vrot.slane %v604, %v617
      %v619 = vcombine.low %v595, %v611
      %v620 = vcombine.high %v595, %v611
      %v622 = vunpack.c.l.s4 1934713408
      %v623 = vunpack.c.0.s8 %v622
      %v624 = vlaneseq
      %v625 = vshrl.u32 %v624, 7
      %v626 = vsub.s32 %v623, %v625
      %v627 = vrot.slane %v619, %v626
      %v629 = vunpack.c.l.s4 1934713408
      %v630 = vunpack.c.0.s8 %v629
      %v631 = vlaneseq
      %v632 = vshrl.u32 %v631, 7
      %v633 = vsub.s32 %v630, %v632
      %v634 = vrot.slane %v620, %v633
      %v635 = vcombine.low %v602, %v618
      %v636 = vcombine.high %v602, %v618
      %v638 = vunpack.c.l.s4 1934713408
      %v639 = vunpack.c.0.s8 %v638
      %v640 = vlaneseq
      %v641 = vshrl.u32 %v640, 7
      %v642 = vsub.s32 %v639, %v641
      %v643 = vrot.slane %v635, %v642
      %v645 = vunpack.c.l.s4 1934713408
      %v646 = vunpack.c.0.s8 %v645
      %v647 = vlaneseq
      %v648 = vshrl.u32 %v647, 7
      %v649 = vsub.s32 %v646, %v648
      %v650 = vrot.slane %v636, %v649
      %v651 = vcombine.high %v627, 0.0
      %v652 = vcombine.high %v634, 0.0
      %v653 = vcombine.high %v643, 0.0
      %v654 = vcombine.high %v650, 0.0
      %656 = vrot.lane.b32.xlu0 %v583, 16
      %v657 = vpop.permute.xlu0 %656
      %660 = vrot.lane.b32.xlu0 %v566, 32
      %v661 = vpop.permute.xlu0 %660
      %664 = vrot.lane.b32.xlu0 %v584, 48
      %v665 = vpop.permute.xlu0 %664
      %668 = vrot.lane.b32.xlu0 %v575, 64
      %v669 = vpop.permute.xlu0 %668
      %672 = vrot.lane.b32.xlu0 %v585, 80
      %v673 = vpop.permute.xlu0 %672
      %676 = vrot.lane.b32.xlu0 %v582, 96
      %v677 = vpop.permute.xlu0 %676
      %680 = vrot.lane.b32.xlu0 %v586, 112
      %v681 = vpop.permute.xlu0 %680
      %684 = vrot.lane.b32.xlu0 %v651, 16
      %v685 = vpop.permute.xlu0 %684
      %688 = vrot.lane.b32.xlu0 %v634, 32
      %v689 = vpop.permute.xlu0 %688
      %692 = vrot.lane.b32.xlu0 %v652, 48
      %v693 = vpop.permute.xlu0 %692
      %696 = vrot.lane.b32.xlu0 %v643, 64
      %v697 = vpop.permute.xlu0 %696
      %700 = vrot.lane.b32.xlu0 %v653, 80
      %v701 = vpop.permute.xlu0 %700
      %704 = vrot.lane.b32.xlu0 %v650, 96
      %v705 = vpop.permute.xlu0 %704
      %708 = vrot.lane.b32.xlu0 %v654, 112
      %v709 = vpop.permute.xlu0 %708
      %vm711 = vcmask 130048
      %v712 = vsel %vm711, %v559, %v657
      %vm713 = vcmask 261120
      %v714 = vsel %vm713, %v712, %v661
      %vm715 = vcmask 392192
      %v716 = vsel %vm715, %v714, %v665
      %vm717 = vcmask 523264
      %v718 = vsel %vm717, %v716, %v669
      %vm719 = vcmask 654336
      %v720 = vsel %vm719, %v718, %v673
      %vm721 = vcmask 785408
      %v722 = vsel %vm721, %v720, %v677
      %vm723 = vcmask 916480
      %v724 = vsel %vm723, %v722, %v681
      %v725 = vsel %vm711, %v627, %v685
      %v726 = vsel %vm713, %v725, %v689
      %v727 = vsel %vm715, %v726, %v693
      %v728 = vsel %vm717, %v727, %v697
      %v729 = vsel %vm719, %v728, %v701
      %v730 = vsel %vm721, %v729, %v705
      %v731 = vsel %vm723, %v730, %v709
      %740 = vrot.lane.b32.xlu0 %v507, 127
      %v741 = vpop.permute.xlu0 %740
      %742 = vrot.lane.b32.xlu0 %v508, 127
      %v743 = vpop.permute.xlu0 %742
      %744 = vrot.lane.b32.xlu0 %v510, 127
      %v745 = vpop.permute.xlu0 %744
      %746 = vrot.lane.b32.xlu0 %v511, 127
      %v747 = vpop.permute.xlu0 %746
      %748 = vrot.lane.b32.xlu0 %v513, 127
      %v749 = vpop.permute.xlu0 %748
      %750 = vrot.lane.b32.xlu0 %v514, 127
      %v751 = vpop.permute.xlu0 %750
      %752 = vrot.lane.b32.xlu0 %v516, 127
      %v753 = vpop.permute.xlu0 %752
      %754 = vrot.lane.b32.xlu0 %v517, 127
      %v755 = vpop.permute.xlu0 %754
      %v764 = vcombine.low %v741, %v749
      %v765 = vcombine.high %v741, %v749
      %v767 = vunpack.c.l.s4 1983009808
      %v768 = vunpack.c.0.s8 %v767
      %v769 = vlaneseq
      %v770 = vshrl.u32 %v769, 7
      %v771 = vsub.s32 %v768, %v770
      %v772 = vrot.slane %v764, %v771
      %v774 = vunpack.c.l.s4 1983009808
      %v775 = vunpack.c.0.s8 %v774
      %v776 = vlaneseq
      %v777 = vshrl.u32 %v776, 7
      %v778 = vsub.s32 %v775, %v777
      %v779 = vrot.slane %v765, %v778
      %v780 = vcombine.low %v745, %v753
      %v781 = vcombine.high %v745, %v753
      %v783 = vunpack.c.l.s4 1983009808
      %v784 = vunpack.c.0.s8 %v783
      %v785 = vlaneseq
      %v786 = vshrl.u32 %v785, 7
      %v787 = vsub.s32 %v784, %v786
      %v788 = vrot.slane %v780, %v787
      %v790 = vunpack.c.l.s4 1983009808
      %v791 = vunpack.c.0.s8 %v790
      %v792 = vlaneseq
      %v793 = vshrl.u32 %v792, 7
      %v794 = vsub.s32 %v791, %v793
      %v795 = vrot.slane %v781, %v794
      %v796 = vcombine.low %v772, %v788
      %v797 = vcombine.high %v772, %v788
      %v799 = vunpack.c.l.s4 1934713408
      %v800 = vunpack.c.0.s8 %v799
      %v801 = vlaneseq
      %v802 = vshrl.u32 %v801, 7
      %v803 = vsub.s32 %v800, %v802
      %v804 = vrot.slane %v796, %v803
      %v806 = vunpack.c.l.s4 1934713408
      %v807 = vunpack.c.0.s8 %v806
      %v808 = vlaneseq
      %v809 = vshrl.u32 %v808, 7
      %v810 = vsub.s32 %v807, %v809
      %v811 = vrot.slane %v797, %v810
      %v812 = vcombine.low %v779, %v795
      %v813 = vcombine.high %v779, %v795
      %v815 = vunpack.c.l.s4 1934713408
      %v816 = vunpack.c.0.s8 %v815
      %v817 = vlaneseq
      %v818 = vshrl.u32 %v817, 7
      %v819 = vsub.s32 %v816, %v818
      %v820 = vrot.slane %v812, %v819
      %v822 = vunpack.c.l.s4 1934713408
      %v823 = vunpack.c.0.s8 %v822
      %v824 = vlaneseq
      %v825 = vshrl.u32 %v824, 7
      %v826 = vsub.s32 %v823, %v825
      %v827 = vrot.slane %v813, %v826
      %v828 = vcombine.high %v804, 0.0
      %v829 = vcombine.high %v811, 0.0
      %v830 = vcombine.high %v820, 0.0
      %v831 = vcombine.high %v827, 0.0
      %v832 = vcombine.low %v743, %v751
      %v833 = vcombine.high %v743, %v751
      %v835 = vunpack.c.l.s4 1983009808
      %v836 = vunpack.c.0.s8 %v835
      %v837 = vlaneseq
      %v838 = vshrl.u32 %v837, 7
      %v839 = vsub.s32 %v836, %v838
      %v840 = vrot.slane %v832, %v839
      %v842 = vunpack.c.l.s4 1983009808
      %v843 = vunpack.c.0.s8 %v842
      %v844 = vlaneseq
      %v845 = vshrl.u32 %v844, 7
      %v846 = vsub.s32 %v843, %v845
      %v847 = vrot.slane %v833, %v846
      %v848 = vcombine.low %v747, %v755
      %v849 = vcombine.high %v747, %v755
      %v851 = vunpack.c.l.s4 1983009808
      %v852 = vunpack.c.0.s8 %v851
      %v853 = vlaneseq
      %v854 = vshrl.u32 %v853, 7
      %v855 = vsub.s32 %v852, %v854
      %v856 = vrot.slane %v848, %v855
      %v858 = vunpack.c.l.s4 1983009808
      %v859 = vunpack.c.0.s8 %v858
      %v860 = vlaneseq
      %v861 = vshrl.u32 %v860, 7
      %v862 = vsub.s32 %v859, %v861
      %v863 = vrot.slane %v849, %v862
      %v864 = vcombine.low %v840, %v856
      %v865 = vcombine.high %v840, %v856
      %v867 = vunpack.c.l.s4 1934713408
      %v868 = vunpack.c.0.s8 %v867
      %v869 = vlaneseq
      %v870 = vshrl.u32 %v869, 7
      %v871 = vsub.s32 %v868, %v870
      %v872 = vrot.slane %v864, %v871
      %v874 = vunpack.c.l.s4 1934713408
      %v875 = vunpack.c.0.s8 %v874
      %v876 = vlaneseq
      %v877 = vshrl.u32 %v876, 7
      %v878 = vsub.s32 %v875, %v877
      %v879 = vrot.slane %v865, %v878
      %v880 = vcombine.low %v847, %v863
      %v881 = vcombine.high %v847, %v863
      %v883 = vunpack.c.l.s4 1934713408
      %v884 = vunpack.c.0.s8 %v883
      %v885 = vlaneseq
      %v886 = vshrl.u32 %v885, 7
      %v887 = vsub.s32 %v884, %v886
      %v888 = vrot.slane %v880, %v887
      %v890 = vunpack.c.l.s4 1934713408
      %v891 = vunpack.c.0.s8 %v890
      %v892 = vlaneseq
      %v893 = vshrl.u32 %v892, 7
      %v894 = vsub.s32 %v891, %v893
      %v895 = vrot.slane %v881, %v894
      %v896 = vcombine.high %v872, 0.0
      %v897 = vcombine.high %v879, 0.0
      %v898 = vcombine.high %v888, 0.0
      %v899 = vcombine.high %v895, 0.0
      %901 = vrot.lane.b32.xlu0 %v828, 16
      %v902 = vpop.permute.xlu0 %901
      %905 = vrot.lane.b32.xlu0 %v811, 32
      %v906 = vpop.permute.xlu0 %905
      %909 = vrot.lane.b32.xlu0 %v829, 48
      %v910 = vpop.permute.xlu0 %909
      %913 = vrot.lane.b32.xlu0 %v820, 64
      %v914 = vpop.permute.xlu0 %913
      %917 = vrot.lane.b32.xlu0 %v830, 80
      %v918 = vpop.permute.xlu0 %917
      %921 = vrot.lane.b32.xlu0 %v827, 96
      %v922 = vpop.permute.xlu0 %921
      %925 = vrot.lane.b32.xlu0 %v831, 112
      %v926 = vpop.permute.xlu0 %925
      %929 = vrot.lane.b32.xlu0 %v896, 16
      %v930 = vpop.permute.xlu0 %929
      %933 = vrot.lane.b32.xlu0 %v879, 32
      %v934 = vpop.permute.xlu0 %933
      %937 = vrot.lane.b32.xlu0 %v897, 48
      %v938 = vpop.permute.xlu0 %937
      %941 = vrot.lane.b32.xlu0 %v888, 64
      %v942 = vpop.permute.xlu0 %941
      %945 = vrot.lane.b32.xlu0 %v898, 80
      %v946 = vpop.permute.xlu0 %945
      %949 = vrot.lane.b32.xlu0 %v895, 96
      %v950 = vpop.permute.xlu0 %949
      %953 = vrot.lane.b32.xlu0 %v899, 112
      %v954 = vpop.permute.xlu0 %953
      %v956 = vsel %vm711, %v804, %v902
      %v957 = vsel %vm713, %v956, %v906
      %v958 = vsel %vm715, %v957, %v910
      %v959 = vsel %vm717, %v958, %v914
      %v960 = vsel %vm719, %v959, %v918
      %v961 = vsel %vm721, %v960, %v922
      %v962 = vsel %vm723, %v961, %v926
      %v963 = vsel %vm711, %v872, %v930
      %v964 = vsel %vm713, %v963, %v934
      %v965 = vsel %vm715, %v964, %v938
      %v966 = vsel %vm717, %v965, %v942
      %v967 = vsel %vm719, %v966, %v946
      %v968 = vsel %vm721, %v967, %v950
      %v969 = vsel %vm723, %v968, %v954
      %970 = vrot.lane.b32.xlu0 %v507, 126
      %v971 = vpop.permute.xlu0 %970
      %972 = vrot.lane.b32.xlu0 %v508, 126
      %v973 = vpop.permute.xlu0 %972
      %974 = vrot.lane.b32.xlu0 %v510, 126
      %v975 = vpop.permute.xlu0 %974
      %976 = vrot.lane.b32.xlu0 %v511, 126
      %v977 = vpop.permute.xlu0 %976
      %978 = vrot.lane.b32.xlu0 %v513, 126
      %v979 = vpop.permute.xlu0 %978
      %980 = vrot.lane.b32.xlu0 %v514, 126
      %v981 = vpop.permute.xlu0 %980
      %982 = vrot.lane.b32.xlu0 %v516, 126
      %v983 = vpop.permute.xlu0 %982
      %984 = vrot.lane.b32.xlu0 %v517, 126
      %v985 = vpop.permute.xlu0 %984
      %v994 = vcombine.low %v971, %v979
      %v995 = vcombine.high %v971, %v979
      %v997 = vunpack.c.l.s4 1983009808
      %v998 = vunpack.c.0.s8 %v997
      %v999 = vlaneseq
      %v1000 = vshrl.u32 %v999, 7
      %v1001 = vsub.s32 %v998, %v1000
      %v1002 = vrot.slane %v994, %v1001
      %v1004 = vunpack.c.l.s4 1983009808
      %v1005 = vunpack.c.0.s8 %v1004
      %v1006 = vlaneseq
      %v1007 = vshrl.u32 %v1006, 7
      %v1008 = vsub.s32 %v1005, %v1007
      %v1009 = vrot.slane %v995, %v1008
      %v1010 = vcombine.low %v975, %v983
      %v1011 = vcombine.high %v975, %v983
      %v1013 = vunpack.c.l.s4 1983009808
      %v1014 = vunpack.c.0.s8 %v1013
      %v1015 = vlaneseq
      %v1016 = vshrl.u32 %v1015, 7
      %v1017 = vsub.s32 %v1014, %v1016
      %v1018 = vrot.slane %v1010, %v1017
      %v1020 = vunpack.c.l.s4 1983009808
      %v1021 = vunpack.c.0.s8 %v1020
      %v1022 = vlaneseq
      %v1023 = vshrl.u32 %v1022, 7
      %v1024 = vsub.s32 %v1021, %v1023
      %v1025 = vrot.slane %v1011, %v1024
      %v1026 = vcombine.low %v1002, %v1018
      %v1027 = vcombine.high %v1002, %v1018
      %v1029 = vunpack.c.l.s4 1934713408
      %v1030 = vunpack.c.0.s8 %v1029
      %v1031 = vlaneseq
      %v1032 = vshrl.u32 %v1031, 7
      %v1033 = vsub.s32 %v1030, %v1032
      %v1034 = vrot.slane %v1026, %v1033
      %v1036 = vunpack.c.l.s4 1934713408
      %v1037 = vunpack.c.0.s8 %v1036
      %v1038 = vlaneseq
      %v1039 = vshrl.u32 %v1038, 7
      %v1040 = vsub.s32 %v1037, %v1039
      %v1041 = vrot.slane %v1027, %v1040
      %v1042 = vcombine.low %v1009, %v1025
      %v1043 = vcombine.high %v1009, %v1025
      %v1045 = vunpack.c.l.s4 1934713408
      %v1046 = vunpack.c.0.s8 %v1045
      %v1047 = vlaneseq
      %v1048 = vshrl.u32 %v1047, 7
      %v1049 = vsub.s32 %v1046, %v1048
      %v1050 = vrot.slane %v1042, %v1049
      %v1052 = vunpack.c.l.s4 1934713408
      %v1053 = vunpack.c.0.s8 %v1052
      %v1054 = vlaneseq
      %v1055 = vshrl.u32 %v1054, 7
      %v1056 = vsub.s32 %v1053, %v1055
      %v1057 = vrot.slane %v1043, %v1056
      %v1058 = vcombine.high %v1034, 0.0
      %v1059 = vcombine.high %v1041, 0.0
      %v1060 = vcombine.high %v1050, 0.0
      %v1061 = vcombine.high %v1057, 0.0
      %v1062 = vcombine.low %v973, %v981
      %v1063 = vcombine.high %v973, %v981
      %v1065 = vunpack.c.l.s4 1983009808
      %v1066 = vunpack.c.0.s8 %v1065
      %v1067 = vlaneseq
      %v1068 = vshrl.u32 %v1067, 7
      %v1069 = vsub.s32 %v1066, %v1068
      %v1070 = vrot.slane %v1062, %v1069
      %v1072 = vunpack.c.l.s4 1983009808
      %v1073 = vunpack.c.0.s8 %v1072
      %v1074 = vlaneseq
      %v1075 = vshrl.u32 %v1074, 7
      %v1076 = vsub.s32 %v1073, %v1075
      %v1077 = vrot.slane %v1063, %v1076
      %v1078 = vcombine.low %v977, %v985
      %v1079 = vcombine.high %v977, %v985
      %v1081 = vunpack.c.l.s4 1983009808
      %v1082 = vunpack.c.0.s8 %v1081
      %v1083 = vlaneseq
      %v1084 = vshrl.u32 %v1083, 7
      %v1085 = vsub.s32 %v1082, %v1084
      %v1086 = vrot.slane %v1078, %v1085
      %v1088 = vunpack.c.l.s4 1983009808
      %v1089 = vunpack.c.0.s8 %v1088
      %v1090 = vlaneseq
      %v1091 = vshrl.u32 %v1090, 7
      %v1092 = vsub.s32 %v1089, %v1091
      %v1093 = vrot.slane %v1079, %v1092
      %v1094 = vcombine.low %v1070, %v1086
      %v1095 = vcombine.high %v1070, %v1086
      %v1097 = vunpack.c.l.s4 1934713408
      %v1098 = vunpack.c.0.s8 %v1097
      %v1099 = vlaneseq
      %v1100 = vshrl.u32 %v1099, 7
      %v1101 = vsub.s32 %v1098, %v1100
      %v1102 = vrot.slane %v1094, %v1101
      %v1104 = vunpack.c.l.s4 1934713408
      %v1105 = vunpack.c.0.s8 %v1104
      %v1106 = vlaneseq
      %v1107 = vshrl.u32 %v1106, 7
      %v1108 = vsub.s32 %v1105, %v1107
      %v1109 = vrot.slane %v1095, %v1108
      %v1110 = vcombine.low %v1077, %v1093
      %v1111 = vcombine.high %v1077, %v1093
      %v1113 = vunpack.c.l.s4 1934713408
      %v1114 = vunpack.c.0.s8 %v1113
      %v1115 = vlaneseq
      %v1116 = vshrl.u32 %v1115, 7
      %v1117 = vsub.s32 %v1114, %v1116
      %v1118 = vrot.slane %v1110, %v1117
      %v1120 = vunpack.c.l.s4 1934713408
      %v1121 = vunpack.c.0.s8 %v1120
      %v1122 = vlaneseq
      %v1123 = vshrl.u32 %v1122, 7
      %v1124 = vsub.s32 %v1121, %v1123
      %v1125 = vrot.slane %v1111, %v1124
      %v1126 = vcombine.high %v1102, 0.0
      %v1127 = vcombine.high %v1109, 0.0
      %v1128 = vcombine.high %v1118, 0.0
      %v1129 = vcombine.high %v1125, 0.0
      %1131 = vrot.lane.b32.xlu0 %v1058, 16
      %v1132 = vpop.permute.xlu0 %1131
      %1135 = vrot.lane.b32.xlu0 %v1041, 32
      %v1136 = vpop.permute.xlu0 %1135
      %1139 = vrot.lane.b32.xlu0 %v1059, 48
      %v1140 = vpop.permute.xlu0 %1139
      %1143 = vrot.lane.b32.xlu0 %v1050, 64
      %v1144 = vpop.permute.xlu0 %1143
      %1147 = vrot.lane.b32.xlu0 %v1060, 80
      %v1148 = vpop.permute.xlu0 %1147
      %1151 = vrot.lane.b32.xlu0 %v1057, 96
      %v1152 = vpop.permute.xlu0 %1151
      %1155 = vrot.lane.b32.xlu0 %v1061, 112
      %v1156 = vpop.permute.xlu0 %1155
      %1159 = vrot.lane.b32.xlu0 %v1126, 16
      %v1160 = vpop.permute.xlu0 %1159
      %1163 = vrot.lane.b32.xlu0 %v1109, 32
      %v1164 = vpop.permute.xlu0 %1163
      %1167 = vrot.lane.b32.xlu0 %v1127, 48
      %v1168 = vpop.permute.xlu0 %1167
      %1171 = vrot.lane.b32.xlu0 %v1118, 64
      %v1172 = vpop.permute.xlu0 %1171
      %1175 = vrot.lane.b32.xlu0 %v1128, 80
      %v1176 = vpop.permute.xlu0 %1175
      %1179 = vrot.lane.b32.xlu0 %v1125, 96
      %v1180 = vpop.permute.xlu0 %1179
      %1183 = vrot.lane.b32.xlu0 %v1129, 112
      %v1184 = vpop.permute.xlu0 %1183
      %v1186 = vsel %vm711, %v1034, %v1132
      %v1187 = vsel %vm713, %v1186, %v1136
      %v1188 = vsel %vm715, %v1187, %v1140
      %v1189 = vsel %vm717, %v1188, %v1144
      %v1190 = vsel %vm719, %v1189, %v1148
      %v1191 = vsel %vm721, %v1190, %v1152
      %v1192 = vsel %vm723, %v1191, %v1156
      %v1193 = vsel %vm711, %v1102, %v1160
      %v1194 = vsel %vm713, %v1193, %v1164
      %v1195 = vsel %vm715, %v1194, %v1168
      %v1196 = vsel %vm717, %v1195, %v1172
      %v1197 = vsel %vm719, %v1196, %v1176
      %v1198 = vsel %vm721, %v1197, %v1180
      %v1199 = vsel %vm723, %v1198, %v1184
      %vm1204 = vcmask 1046528
      %v1205 = vrot.slane %v507, 1
      %v1206 = vrot.slane %v508, 1
      %v1207 = vsel %vm1204, %v1205, %v1206
      %v1208 = vrot.slane %v509, 1
      %v1209 = vsel %vm1204, %v1206, %v1208
      %v1210 = vrot.slane %v510, 1
      %v1211 = vrot.slane %v511, 1
      %v1212 = vsel %vm1204, %v1210, %v1211
      %v1213 = vrot.slane %v512, 1
      %v1214 = vsel %vm1204, %v1211, %v1213
      %v1215 = vrot.slane %v513, 1
      %v1216 = vrot.slane %v514, 1
      %v1217 = vsel %vm1204, %v1215, %v1216
      %v1218 = vrot.slane %v515, 1
      %v1219 = vsel %vm1204, %v1216, %v1218
      %v1220 = vrot.slane %v516, 1
      %v1221 = vrot.slane %v517, 1
      %v1222 = vsel %vm1204, %v1220, %v1221
      %v1223 = vrot.slane %v518, 1
      %v1224 = vsel %vm1204, %v1221, %v1223
      %v1233 = vcombine.low %v1207, %v1217
      %v1234 = vcombine.high %v1207, %v1217
      %v1236 = vunpack.c.l.s4 1983009808
      %v1237 = vunpack.c.0.s8 %v1236
      %v1238 = vlaneseq
      %v1239 = vshrl.u32 %v1238, 7
      %v1240 = vsub.s32 %v1237, %v1239
      %v1241 = vrot.slane %v1233, %v1240
      %v1243 = vunpack.c.l.s4 1983009808
      %v1244 = vunpack.c.0.s8 %v1243
      %v1245 = vlaneseq
      %v1246 = vshrl.u32 %v1245, 7
      %v1247 = vsub.s32 %v1244, %v1246
      %v1248 = vrot.slane %v1234, %v1247
      %v1249 = vcombine.low %v1212, %v1222
      %v1250 = vcombine.high %v1212, %v1222
      %v1252 = vunpack.c.l.s4 1983009808
      %v1253 = vunpack.c.0.s8 %v1252
      %v1254 = vlaneseq
      %v1255 = vshrl.u32 %v1254, 7
      %v1256 = vsub.s32 %v1253, %v1255
      %v1257 = vrot.slane %v1249, %v1256
      %v1259 = vunpack.c.l.s4 1983009808
      %v1260 = vunpack.c.0.s8 %v1259
      %v1261 = vlaneseq
      %v1262 = vshrl.u32 %v1261, 7
      %v1263 = vsub.s32 %v1260, %v1262
      %v1264 = vrot.slane %v1250, %v1263
      %v1265 = vcombine.low %v1241, %v1257
      %v1266 = vcombine.high %v1241, %v1257
      %v1268 = vunpack.c.l.s4 1934713408
      %v1269 = vunpack.c.0.s8 %v1268
      %v1270 = vlaneseq
      %v1271 = vshrl.u32 %v1270, 7
      %v1272 = vsub.s32 %v1269, %v1271
      %v1273 = vrot.slane %v1265, %v1272
      %v1275 = vunpack.c.l.s4 1934713408
      %v1276 = vunpack.c.0.s8 %v1275
      %v1277 = vlaneseq
      %v1278 = vshrl.u32 %v1277, 7
      %v1279 = vsub.s32 %v1276, %v1278
      %v1280 = vrot.slane %v1266, %v1279
      %v1281 = vcombine.low %v1248, %v1264
      %v1282 = vcombine.high %v1248, %v1264
      %v1284 = vunpack.c.l.s4 1934713408
      %v1285 = vunpack.c.0.s8 %v1284
      %v1286 = vlaneseq
      %v1287 = vshrl.u32 %v1286, 7
      %v1288 = vsub.s32 %v1285, %v1287
      %v1289 = vrot.slane %v1281, %v1288
      %v1291 = vunpack.c.l.s4 1934713408
      %v1292 = vunpack.c.0.s8 %v1291
      %v1293 = vlaneseq
      %v1294 = vshrl.u32 %v1293, 7
      %v1295 = vsub.s32 %v1292, %v1294
      %v1296 = vrot.slane %v1282, %v1295
      %v1297 = vcombine.high %v1273, 0.0
      %v1298 = vcombine.high %v1280, 0.0
      %v1299 = vcombine.high %v1289, 0.0
      %v1300 = vcombine.high %v1296, 0.0
      %v1301 = vcombine.low %v1209, %v1219
      %v1302 = vcombine.high %v1209, %v1219
      %v1304 = vunpack.c.l.s4 1983009808
      %v1305 = vunpack.c.0.s8 %v1304
      %v1306 = vlaneseq
      %v1307 = vshrl.u32 %v1306, 7
      %v1308 = vsub.s32 %v1305, %v1307
      %v1309 = vrot.slane %v1301, %v1308
      %v1311 = vunpack.c.l.s4 1983009808
      %v1312 = vunpack.c.0.s8 %v1311
      %v1313 = vlaneseq
      %v1314 = vshrl.u32 %v1313, 7
      %v1315 = vsub.s32 %v1312, %v1314
      %v1316 = vrot.slane %v1302, %v1315
      %v1317 = vcombine.low %v1214, %v1224
      %v1318 = vcombine.high %v1214, %v1224
      %v1320 = vunpack.c.l.s4 1983009808
      %v1321 = vunpack.c.0.s8 %v1320
      %v1322 = vlaneseq
      %v1323 = vshrl.u32 %v1322, 7
      %v1324 = vsub.s32 %v1321, %v1323
      %v1325 = vrot.slane %v1317, %v1324
      %v1327 = vunpack.c.l.s4 1983009808
      %v1328 = vunpack.c.0.s8 %v1327
      %v1329 = vlaneseq
      %v1330 = vshrl.u32 %v1329, 7
      %v1331 = vsub.s32 %v1328, %v1330
      %v1332 = vrot.slane %v1318, %v1331
      %v1333 = vcombine.low %v1309, %v1325
      %v1334 = vcombine.high %v1309, %v1325
      %v1336 = vunpack.c.l.s4 1934713408
      %v1337 = vunpack.c.0.s8 %v1336
      %v1338 = vlaneseq
      %v1339 = vshrl.u32 %v1338, 7
      %v1340 = vsub.s32 %v1337, %v1339
      %v1341 = vrot.slane %v1333, %v1340
      %v1343 = vunpack.c.l.s4 1934713408
      %v1344 = vunpack.c.0.s8 %v1343
      %v1345 = vlaneseq
      %v1346 = vshrl.u32 %v1345, 7
      %v1347 = vsub.s32 %v1344, %v1346
      %v1348 = vrot.slane %v1334, %v1347
      %v1349 = vcombine.low %v1316, %v1332
      %v1350 = vcombine.high %v1316, %v1332
      %v1352 = vunpack.c.l.s4 1934713408
      %v1353 = vunpack.c.0.s8 %v1352
      %v1354 = vlaneseq
      %v1355 = vshrl.u32 %v1354, 7
      %v1356 = vsub.s32 %v1353, %v1355
      %v1357 = vrot.slane %v1349, %v1356
      %v1359 = vunpack.c.l.s4 1934713408
      %v1360 = vunpack.c.0.s8 %v1359
      %v1361 = vlaneseq
      %v1362 = vshrl.u32 %v1361, 7
      %v1363 = vsub.s32 %v1360, %v1362
      %v1364 = vrot.slane %v1350, %v1363
      %v1365 = vcombine.high %v1341, 0.0
      %v1366 = vcombine.high %v1348, 0.0
      %v1367 = vcombine.high %v1357, 0.0
      %v1368 = vcombine.high %v1364, 0.0
      %1370 = vrot.lane.b32.xlu0 %v1297, 16
      %v1371 = vpop.permute.xlu0 %1370
      %1374 = vrot.lane.b32.xlu0 %v1280, 32
      %v1375 = vpop.permute.xlu0 %1374
      %1378 = vrot.lane.b32.xlu0 %v1298, 48
      %v1379 = vpop.permute.xlu0 %1378
      %1382 = vrot.lane.b32.xlu0 %v1289, 64
      %v1383 = vpop.permute.xlu0 %1382
      %1386 = vrot.lane.b32.xlu0 %v1299, 80
      %v1387 = vpop.permute.xlu0 %1386
      %1390 = vrot.lane.b32.xlu0 %v1296, 96
      %v1391 = vpop.permute.xlu0 %1390
      %1394 = vrot.lane.b32.xlu0 %v1300, 112
      %v1395 = vpop.permute.xlu0 %1394
      %1398 = vrot.lane.b32.xlu0 %v1365, 16
      %v1399 = vpop.permute.xlu0 %1398
      %1402 = vrot.lane.b32.xlu0 %v1348, 32
      %v1403 = vpop.permute.xlu0 %1402
      %1406 = vrot.lane.b32.xlu0 %v1366, 48
      %v1407 = vpop.permute.xlu0 %1406
      %1410 = vrot.lane.b32.xlu0 %v1357, 64
      %v1411 = vpop.permute.xlu0 %1410
      %1414 = vrot.lane.b32.xlu0 %v1367, 80
      %v1415 = vpop.permute.xlu0 %1414
      %1418 = vrot.lane.b32.xlu0 %v1364, 96
      %v1419 = vpop.permute.xlu0 %1418
      %1422 = vrot.lane.b32.xlu0 %v1368, 112
      %v1423 = vpop.permute.xlu0 %1422
      %v1425 = vsel %vm711, %v1273, %v1371
      %v1426 = vsel %vm713, %v1425, %v1375
      %v1427 = vsel %vm715, %v1426, %v1379
      %v1428 = vsel %vm717, %v1427, %v1383
      %v1429 = vsel %vm719, %v1428, %v1387
      %v1430 = vsel %vm721, %v1429, %v1391
      %v1431 = vsel %vm723, %v1430, %v1395
      %v1432 = vsel %vm711, %v1341, %v1399
      %v1433 = vsel %vm713, %v1432, %v1403
      %v1434 = vsel %vm715, %v1433, %v1407
      %v1435 = vsel %vm717, %v1434, %v1411
      %v1436 = vsel %vm719, %v1435, %v1415
      %v1437 = vsel %vm721, %v1436, %v1419
      %v1438 = vsel %vm723, %v1437, %v1423
      %1439 = vrot.lane.b32.xlu0 %v1207, 127
      %v1440 = vpop.permute.xlu0 %1439
      %1441 = vrot.lane.b32.xlu0 %v1209, 127
      %v1442 = vpop.permute.xlu0 %1441
      %1443 = vrot.lane.b32.xlu0 %v1212, 127
      %v1444 = vpop.permute.xlu0 %1443
      %1445 = vrot.lane.b32.xlu0 %v1214, 127
      %v1446 = vpop.permute.xlu0 %1445
      %1447 = vrot.lane.b32.xlu0 %v1217, 127
      %v1448 = vpop.permute.xlu0 %1447
      %1449 = vrot.lane.b32.xlu0 %v1219, 127
      %v1450 = vpop.permute.xlu0 %1449
      %1451 = vrot.lane.b32.xlu0 %v1222, 127
      %v1452 = vpop.permute.xlu0 %1451
      %1453 = vrot.lane.b32.xlu0 %v1224, 127
      %v1454 = vpop.permute.xlu0 %1453
      %v1463 = vcombine.low %v1440, %v1448
      %v1464 = vcombine.high %v1440, %v1448
      %v1466 = vunpack.c.l.s4 1983009808
      %v1467 = vunpack.c.0.s8 %v1466
      %v1468 = vlaneseq
      %v1469 = vshrl.u32 %v1468, 7
      %v1470 = vsub.s32 %v1467, %v1469
      %v1471 = vrot.slane %v1463, %v1470
      %v1473 = vunpack.c.l.s4 1983009808
      %v1474 = vunpack.c.0.s8 %v1473
      %v1475 = vlaneseq
      %v1476 = vshrl.u32 %v1475, 7
      %v1477 = vsub.s32 %v1474, %v1476
      %v1478 = vrot.slane %v1464, %v1477
      %v1479 = vcombine.low %v1444, %v1452
      %v1480 = vcombine.high %v1444, %v1452
      %v1482 = vunpack.c.l.s4 1983009808
      %v1483 = vunpack.c.0.s8 %v1482
      %v1484 = vlaneseq
      %v1485 = vshrl.u32 %v1484, 7
      %v1486 = vsub.s32 %v1483, %v1485
      %v1487 = vrot.slane %v1479, %v1486
      %v1489 = vunpack.c.l.s4 1983009808
      %v1490 = vunpack.c.0.s8 %v1489
      %v1491 = vlaneseq
      %v1492 = vshrl.u32 %v1491, 7
      %v1493 = vsub.s32 %v1490, %v1492
      %v1494 = vrot.slane %v1480, %v1493
      %v1495 = vcombine.low %v1471, %v1487
      %v1496 = vcombine.high %v1471, %v1487
      %v1498 = vunpack.c.l.s4 1934713408
      %v1499 = vunpack.c.0.s8 %v1498
      %v1500 = vlaneseq
      %v1501 = vshrl.u32 %v1500, 7
      %v1502 = vsub.s32 %v1499, %v1501
      %v1503 = vrot.slane %v1495, %v1502
      %v1505 = vunpack.c.l.s4 1934713408
      %v1506 = vunpack.c.0.s8 %v1505
      %v1507 = vlaneseq
      %v1508 = vshrl.u32 %v1507, 7
      %v1509 = vsub.s32 %v1506, %v1508
      %v1510 = vrot.slane %v1496, %v1509
      %v1511 = vcombine.low %v1478, %v1494
      %v1512 = vcombine.high %v1478, %v1494
      %v1514 = vunpack.c.l.s4 1934713408
      %v1515 = vunpack.c.0.s8 %v1514
      %v1516 = vlaneseq
      %v1517 = vshrl.u32 %v1516, 7
      %v1518 = vsub.s32 %v1515, %v1517
      %v1519 = vrot.slane %v1511, %v1518
      %v1521 = vunpack.c.l.s4 1934713408
      %v1522 = vunpack.c.0.s8 %v1521
      %v1523 = vlaneseq
      %v1524 = vshrl.u32 %v1523, 7
      %v1525 = vsub.s32 %v1522, %v1524
      %v1526 = vrot.slane %v1512, %v1525
      %v1527 = vcombine.high %v1503, 0.0
      %v1528 = vcombine.high %v1510, 0.0
      %v1529 = vcombine.high %v1519, 0.0
      %v1530 = vcombine.high %v1526, 0.0
      %v1531 = vcombine.low %v1442, %v1450
      %v1532 = vcombine.high %v1442, %v1450
      %v1534 = vunpack.c.l.s4 1983009808
      %v1535 = vunpack.c.0.s8 %v1534
      %v1536 = vlaneseq
      %v1537 = vshrl.u32 %v1536, 7
      %v1538 = vsub.s32 %v1535, %v1537
      %v1539 = vrot.slane %v1531, %v1538
      %v1541 = vunpack.c.l.s4 1983009808
      %v1542 = vunpack.c.0.s8 %v1541
      %v1543 = vlaneseq
      %v1544 = vshrl.u32 %v1543, 7
      %v1545 = vsub.s32 %v1542, %v1544
      %v1546 = vrot.slane %v1532, %v1545
      %v1547 = vcombine.low %v1446, %v1454
      %v1548 = vcombine.high %v1446, %v1454
      %v1550 = vunpack.c.l.s4 1983009808
      %v1551 = vunpack.c.0.s8 %v1550
      %v1552 = vlaneseq
      %v1553 = vshrl.u32 %v1552, 7
      %v1554 = vsub.s32 %v1551, %v1553
      %v1555 = vrot.slane %v1547, %v1554
      %v1557 = vunpack.c.l.s4 1983009808
      %v1558 = vunpack.c.0.s8 %v1557
      %v1559 = vlaneseq
      %v1560 = vshrl.u32 %v1559, 7
      %v1561 = vsub.s32 %v1558, %v1560
      %v1562 = vrot.slane %v1548, %v1561
      %v1563 = vcombine.low %v1539, %v1555
      %v1564 = vcombine.high %v1539, %v1555
      %v1566 = vunpack.c.l.s4 1934713408
      %v1567 = vunpack.c.0.s8 %v1566
      %v1568 = vlaneseq
      %v1569 = vshrl.u32 %v1568, 7
      %v1570 = vsub.s32 %v1567, %v1569
      %v1571 = vrot.slane %v1563, %v1570
      %v1573 = vunpack.c.l.s4 1934713408
      %v1574 = vunpack.c.0.s8 %v1573
      %v1575 = vlaneseq
      %v1576 = vshrl.u32 %v1575, 7
      %v1577 = vsub.s32 %v1574, %v1576
      %v1578 = vrot.slane %v1564, %v1577
      %v1579 = vcombine.low %v1546, %v1562
      %v1580 = vcombine.high %v1546, %v1562
      %v1582 = vunpack.c.l.s4 1934713408
      %v1583 = vunpack.c.0.s8 %v1582
      %v1584 = vlaneseq
      %v1585 = vshrl.u32 %v1584, 7
      %v1586 = vsub.s32 %v1583, %v1585
      %v1587 = vrot.slane %v1579, %v1586
      %v1589 = vunpack.c.l.s4 1934713408
      %v1590 = vunpack.c.0.s8 %v1589
      %v1591 = vlaneseq
      %v1592 = vshrl.u32 %v1591, 7
      %v1593 = vsub.s32 %v1590, %v1592
      %v1594 = vrot.slane %v1580, %v1593
      %v1595 = vcombine.high %v1571, 0.0
      %v1596 = vcombine.high %v1578, 0.0
      %v1597 = vcombine.high %v1587, 0.0
      %v1598 = vcombine.high %v1594, 0.0
      %1600 = vrot.lane.b32.xlu0 %v1527, 16
      %v1601 = vpop.permute.xlu0 %1600
      %1604 = vrot.lane.b32.xlu0 %v1510, 32
      %v1605 = vpop.permute.xlu0 %1604
      %1608 = vrot.lane.b32.xlu0 %v1528, 48
      %v1609 = vpop.permute.xlu0 %1608
      %1612 = vrot.lane.b32.xlu0 %v1519, 64
      %v1613 = vpop.permute.xlu0 %1612
      %1616 = vrot.lane.b32.xlu0 %v1529, 80
      %v1617 = vpop.permute.xlu0 %1616
      %1620 = vrot.lane.b32.xlu0 %v1526, 96
      %v1621 = vpop.permute.xlu0 %1620
      %1624 = vrot.lane.b32.xlu0 %v1530, 112
      %v1625 = vpop.permute.xlu0 %1624
      %1628 = vrot.lane.b32.xlu0 %v1595, 16
      %v1629 = vpop.permute.xlu0 %1628
      %1632 = vrot.lane.b32.xlu0 %v1578, 32
      %v1633 = vpop.permute.xlu0 %1632
      %1636 = vrot.lane.b32.xlu0 %v1596, 48
      %v1637 = vpop.permute.xlu0 %1636
      %1640 = vrot.lane.b32.xlu0 %v1587, 64
      %v1641 = vpop.permute.xlu0 %1640
      %1644 = vrot.lane.b32.xlu0 %v1597, 80
      %v1645 = vpop.permute.xlu0 %1644
      %1648 = vrot.lane.b32.xlu0 %v1594, 96
      %v1649 = vpop.permute.xlu0 %1648
      %1652 = vrot.lane.b32.xlu0 %v1598, 112
      %v1653 = vpop.permute.xlu0 %1652
      %v1655 = vsel %vm711, %v1503, %v1601
      %v1656 = vsel %vm713, %v1655, %v1605
      %v1657 = vsel %vm715, %v1656, %v1609
      %v1658 = vsel %vm717, %v1657, %v1613
      %v1659 = vsel %vm719, %v1658, %v1617
      %v1660 = vsel %vm721, %v1659, %v1621
      %v1661 = vsel %vm723, %v1660, %v1625
      %v1662 = vsel %vm711, %v1571, %v1629
      %v1663 = vsel %vm713, %v1662, %v1633
      %v1664 = vsel %vm715, %v1663, %v1637
      %v1665 = vsel %vm717, %v1664, %v1641
      %v1666 = vsel %vm719, %v1665, %v1645
      %v1667 = vsel %vm721, %v1666, %v1649
      %v1668 = vsel %vm723, %v1667, %v1653
      %1669 = vrot.lane.b32.xlu0 %v1207, 126
      %v1670 = vpop.permute.xlu0 %1669
      %1671 = vrot.lane.b32.xlu0 %v1209, 126
      %v1672 = vpop.permute.xlu0 %1671
      %1673 = vrot.lane.b32.xlu0 %v1212, 126
      %v1674 = vpop.permute.xlu0 %1673
      %1675 = vrot.lane.b32.xlu0 %v1214, 126
      %v1676 = vpop.permute.xlu0 %1675
      %1677 = vrot.lane.b32.xlu0 %v1217, 126
      %v1678 = vpop.permute.xlu0 %1677
      %1679 = vrot.lane.b32.xlu0 %v1219, 126
      %v1680 = vpop.permute.xlu0 %1679
      %1681 = vrot.lane.b32.xlu0 %v1222, 126
      %v1682 = vpop.permute.xlu0 %1681
      %1683 = vrot.lane.b32.xlu0 %v1224, 126
      %v1684 = vpop.permute.xlu0 %1683
      %v1693 = vcombine.low %v1670, %v1678
      %v1694 = vcombine.high %v1670, %v1678
      %v1696 = vunpack.c.l.s4 1983009808
      %v1697 = vunpack.c.0.s8 %v1696
      %v1698 = vlaneseq
      %v1699 = vshrl.u32 %v1698, 7
      %v1700 = vsub.s32 %v1697, %v1699
      %v1701 = vrot.slane %v1693, %v1700
      %v1703 = vunpack.c.l.s4 1983009808
      %v1704 = vunpack.c.0.s8 %v1703
      %v1705 = vlaneseq
      %v1706 = vshrl.u32 %v1705, 7
      %v1707 = vsub.s32 %v1704, %v1706
      %v1708 = vrot.slane %v1694, %v1707
      %v1709 = vcombine.low %v1674, %v1682
      %v1710 = vcombine.high %v1674, %v1682
      %v1712 = vunpack.c.l.s4 1983009808
      %v1713 = vunpack.c.0.s8 %v1712
      %v1714 = vlaneseq
      %v1715 = vshrl.u32 %v1714, 7
      %v1716 = vsub.s32 %v1713, %v1715
      %v1717 = vrot.slane %v1709, %v1716
      %v1719 = vunpack.c.l.s4 1983009808
      %v1720 = vunpack.c.0.s8 %v1719
      %v1721 = vlaneseq
      %v1722 = vshrl.u32 %v1721, 7
      %v1723 = vsub.s32 %v1720, %v1722
      %v1724 = vrot.slane %v1710, %v1723
      %v1725 = vcombine.low %v1701, %v1717
      %v1726 = vcombine.high %v1701, %v1717
      %v1728 = vunpack.c.l.s4 1934713408
      %v1729 = vunpack.c.0.s8 %v1728
      %v1730 = vlaneseq
      %v1731 = vshrl.u32 %v1730, 7
      %v1732 = vsub.s32 %v1729, %v1731
      %v1733 = vrot.slane %v1725, %v1732
      %v1735 = vunpack.c.l.s4 1934713408
      %v1736 = vunpack.c.0.s8 %v1735
      %v1737 = vlaneseq
      %v1738 = vshrl.u32 %v1737, 7
      %v1739 = vsub.s32 %v1736, %v1738
      %v1740 = vrot.slane %v1726, %v1739
      %v1741 = vcombine.low %v1708, %v1724
      %v1742 = vcombine.high %v1708, %v1724
      %v1744 = vunpack.c.l.s4 1934713408
      %v1745 = vunpack.c.0.s8 %v1744
      %v1746 = vlaneseq
      %v1747 = vshrl.u32 %v1746, 7
      %v1748 = vsub.s32 %v1745, %v1747
      %v1749 = vrot.slane %v1741, %v1748
      %v1751 = vunpack.c.l.s4 1934713408
      %v1752 = vunpack.c.0.s8 %v1751
      %v1753 = vlaneseq
      %v1754 = vshrl.u32 %v1753, 7
      %v1755 = vsub.s32 %v1752, %v1754
      %v1756 = vrot.slane %v1742, %v1755
      %v1757 = vcombine.high %v1733, 0.0
      %v1758 = vcombine.high %v1740, 0.0
      %v1759 = vcombine.high %v1749, 0.0
      %v1760 = vcombine.high %v1756, 0.0
      %v1761 = vcombine.low %v1672, %v1680
      %v1762 = vcombine.high %v1672, %v1680
      %v1764 = vunpack.c.l.s4 1983009808
      %v1765 = vunpack.c.0.s8 %v1764
      %v1766 = vlaneseq
      %v1767 = vshrl.u32 %v1766, 7
      %v1768 = vsub.s32 %v1765, %v1767
      %v1769 = vrot.slane %v1761, %v1768
      %v1771 = vunpack.c.l.s4 1983009808
      %v1772 = vunpack.c.0.s8 %v1771
      %v1773 = vlaneseq
      %v1774 = vshrl.u32 %v1773, 7
      %v1775 = vsub.s32 %v1772, %v1774
      %v1776 = vrot.slane %v1762, %v1775
      %v1777 = vcombine.low %v1676, %v1684
      %v1778 = vcombine.high %v1676, %v1684
      %v1780 = vunpack.c.l.s4 1983009808
      %v1781 = vunpack.c.0.s8 %v1780
      %v1782 = vlaneseq
      %v1783 = vshrl.u32 %v1782, 7
      %v1784 = vsub.s32 %v1781, %v1783
      %v1785 = vrot.slane %v1777, %v1784
      %v1787 = vunpack.c.l.s4 1983009808
      %v1788 = vunpack.c.0.s8 %v1787
      %v1789 = vlaneseq
      %v1790 = vshrl.u32 %v1789, 7
      %v1791 = vsub.s32 %v1788, %v1790
      %v1792 = vrot.slane %v1778, %v1791
      %v1793 = vcombine.low %v1769, %v1785
      %v1794 = vcombine.high %v1769, %v1785
      %v1796 = vunpack.c.l.s4 1934713408
      %v1797 = vunpack.c.0.s8 %v1796
      %v1798 = vlaneseq
      %v1799 = vshrl.u32 %v1798, 7
      %v1800 = vsub.s32 %v1797, %v1799
      %v1801 = vrot.slane %v1793, %v1800
      %v1803 = vunpack.c.l.s4 1934713408
      %v1804 = vunpack.c.0.s8 %v1803
      %v1805 = vlaneseq
      %v1806 = vshrl.u32 %v1805, 7
      %v1807 = vsub.s32 %v1804, %v1806
      %v1808 = vrot.slane %v1794, %v1807
      %v1809 = vcombine.low %v1776, %v1792
      %v1810 = vcombine.high %v1776, %v1792
      %v1812 = vunpack.c.l.s4 1934713408
      %v1813 = vunpack.c.0.s8 %v1812
      %v1814 = vlaneseq
      %v1815 = vshrl.u32 %v1814, 7
      %v1816 = vsub.s32 %v1813, %v1815
      %v1817 = vrot.slane %v1809, %v1816
      %v1819 = vunpack.c.l.s4 1934713408
      %v1820 = vunpack.c.0.s8 %v1819
      %v1821 = vlaneseq
      %v1822 = vshrl.u32 %v1821, 7
      %v1823 = vsub.s32 %v1820, %v1822
      %v1824 = vrot.slane %v1810, %v1823
      %v1825 = vcombine.high %v1801, 0.0
      %v1826 = vcombine.high %v1808, 0.0
      %v1827 = vcombine.high %v1817, 0.0
      %v1828 = vcombine.high %v1824, 0.0
      %1830 = vrot.lane.b32.xlu0 %v1757, 16
      %v1831 = vpop.permute.xlu0 %1830
      %1834 = vrot.lane.b32.xlu0 %v1740, 32
      %v1835 = vpop.permute.xlu0 %1834
      %1838 = vrot.lane.b32.xlu0 %v1758, 48
      %v1839 = vpop.permute.xlu0 %1838
      %1842 = vrot.lane.b32.xlu0 %v1749, 64
      %v1843 = vpop.permute.xlu0 %1842
      %1846 = vrot.lane.b32.xlu0 %v1759, 80
      %v1847 = vpop.permute.xlu0 %1846
      %1850 = vrot.lane.b32.xlu0 %v1756, 96
      %v1851 = vpop.permute.xlu0 %1850
      %1854 = vrot.lane.b32.xlu0 %v1760, 112
      %v1855 = vpop.permute.xlu0 %1854
      %1858 = vrot.lane.b32.xlu0 %v1825, 16
      %v1859 = vpop.permute.xlu0 %1858
      %1862 = vrot.lane.b32.xlu0 %v1808, 32
      %v1863 = vpop.permute.xlu0 %1862
      %1866 = vrot.lane.b32.xlu0 %v1826, 48
      %v1867 = vpop.permute.xlu0 %1866
      %1870 = vrot.lane.b32.xlu0 %v1817, 64
      %v1871 = vpop.permute.xlu0 %1870
      %1874 = vrot.lane.b32.xlu0 %v1827, 80
      %v1875 = vpop.permute.xlu0 %1874
      %1878 = vrot.lane.b32.xlu0 %v1824, 96
      %v1879 = vpop.permute.xlu0 %1878
      %1882 = vrot.lane.b32.xlu0 %v1828, 112
      %v1883 = vpop.permute.xlu0 %1882
      %v1885 = vsel %vm711, %v1733, %v1831
      %v1886 = vsel %vm713, %v1885, %v1835
      %v1887 = vsel %vm715, %v1886, %v1839
      %v1888 = vsel %vm717, %v1887, %v1843
      %v1889 = vsel %vm719, %v1888, %v1847
      %v1890 = vsel %vm721, %v1889, %v1851
      %v1891 = vsel %vm723, %v1890, %v1855
      %v1892 = vsel %vm711, %v1801, %v1859
      %v1893 = vsel %vm713, %v1892, %v1863
      %v1894 = vsel %vm715, %v1893, %v1867
      %v1895 = vsel %vm717, %v1894, %v1871
      %v1896 = vsel %vm719, %v1895, %v1875
      %v1897 = vsel %vm721, %v1896, %v1879
      %v1898 = vsel %vm723, %v1897, %v1883
      %vm1899 = vcmask 1045504
      %v1900 = vrot.slane %v507, 2
      %v1901 = vrot.slane %v508, 2
      %v1902 = vsel %vm1899, %v1900, %v1901
      %v1903 = vrot.slane %v509, 2
      %v1904 = vsel %vm1899, %v1901, %v1903
      %v1905 = vrot.slane %v510, 2
      %v1906 = vrot.slane %v511, 2
      %v1907 = vsel %vm1899, %v1905, %v1906
      %v1908 = vrot.slane %v512, 2
      %v1909 = vsel %vm1899, %v1906, %v1908
      %v1910 = vrot.slane %v513, 2
      %v1911 = vrot.slane %v514, 2
      %v1912 = vsel %vm1899, %v1910, %v1911
      %v1913 = vrot.slane %v515, 2
      %v1914 = vsel %vm1899, %v1911, %v1913
      %v1915 = vrot.slane %v516, 2
      %v1916 = vrot.slane %v517, 2
      %v1917 = vsel %vm1899, %v1915, %v1916
      %v1918 = vrot.slane %v518, 2
      %v1919 = vsel %vm1899, %v1916, %v1918
      %v1928 = vcombine.low %v1902, %v1912
      %v1929 = vcombine.high %v1902, %v1912
      %v1931 = vunpack.c.l.s4 1983009808
      %v1932 = vunpack.c.0.s8 %v1931
      %v1933 = vlaneseq
      %v1934 = vshrl.u32 %v1933, 7
      %v1935 = vsub.s32 %v1932, %v1934
      %v1936 = vrot.slane %v1928, %v1935
      %v1938 = vunpack.c.l.s4 1983009808
      %v1939 = vunpack.c.0.s8 %v1938
      %v1940 = vlaneseq
      %v1941 = vshrl.u32 %v1940, 7
      %v1942 = vsub.s32 %v1939, %v1941
      %v1943 = vrot.slane %v1929, %v1942
      %v1944 = vcombine.low %v1907, %v1917
      %v1945 = vcombine.high %v1907, %v1917
      %v1947 = vunpack.c.l.s4 1983009808
      %v1948 = vunpack.c.0.s8 %v1947
      %v1949 = vlaneseq
      %v1950 = vshrl.u32 %v1949, 7
      %v1951 = vsub.s32 %v1948, %v1950
      %v1952 = vrot.slane %v1944, %v1951
      %v1954 = vunpack.c.l.s4 1983009808
      %v1955 = vunpack.c.0.s8 %v1954
      %v1956 = vlaneseq
      %v1957 = vshrl.u32 %v1956, 7
      %v1958 = vsub.s32 %v1955, %v1957
      %v1959 = vrot.slane %v1945, %v1958
      %v1960 = vcombine.low %v1936, %v1952
      %v1961 = vcombine.high %v1936, %v1952
      %v1963 = vunpack.c.l.s4 1934713408
      %v1964 = vunpack.c.0.s8 %v1963
      %v1965 = vlaneseq
      %v1966 = vshrl.u32 %v1965, 7
      %v1967 = vsub.s32 %v1964, %v1966
      %v1968 = vrot.slane %v1960, %v1967
      %v1970 = vunpack.c.l.s4 1934713408
      %v1971 = vunpack.c.0.s8 %v1970
      %v1972 = vlaneseq
      %v1973 = vshrl.u32 %v1972, 7
      %v1974 = vsub.s32 %v1971, %v1973
      %v1975 = vrot.slane %v1961, %v1974
      %v1976 = vcombine.low %v1943, %v1959
      %v1977 = vcombine.high %v1943, %v1959
      %v1979 = vunpack.c.l.s4 1934713408
      %v1980 = vunpack.c.0.s8 %v1979
      %v1981 = vlaneseq
      %v1982 = vshrl.u32 %v1981, 7
      %v1983 = vsub.s32 %v1980, %v1982
      %v1984 = vrot.slane %v1976, %v1983
      %v1986 = vunpack.c.l.s4 1934713408
      %v1987 = vunpack.c.0.s8 %v1986
      %v1988 = vlaneseq
      %v1989 = vshrl.u32 %v1988, 7
      %v1990 = vsub.s32 %v1987, %v1989
      %v1991 = vrot.slane %v1977, %v1990
      %v1992 = vcombine.high %v1968, 0.0
      %v1993 = vcombine.high %v1975, 0.0
      %v1994 = vcombine.high %v1984, 0.0
      %v1995 = vcombine.high %v1991, 0.0
      %v1996 = vcombine.low %v1904, %v1914
      %v1997 = vcombine.high %v1904, %v1914
      %v1999 = vunpack.c.l.s4 1983009808
      %v2000 = vunpack.c.0.s8 %v1999
      %v2001 = vlaneseq
      %v2002 = vshrl.u32 %v2001, 7
      %v2003 = vsub.s32 %v2000, %v2002
      %v2004 = vrot.slane %v1996, %v2003
      %v2006 = vunpack.c.l.s4 1983009808
      %v2007 = vunpack.c.0.s8 %v2006
      %v2008 = vlaneseq
      %v2009 = vshrl.u32 %v2008, 7
      %v2010 = vsub.s32 %v2007, %v2009
      %v2011 = vrot.slane %v1997, %v2010
      %v2012 = vcombine.low %v1909, %v1919
      %v2013 = vcombine.high %v1909, %v1919
      %v2015 = vunpack.c.l.s4 1983009808
      %v2016 = vunpack.c.0.s8 %v2015
      %v2017 = vlaneseq
      %v2018 = vshrl.u32 %v2017, 7
      %v2019 = vsub.s32 %v2016, %v2018
      %v2020 = vrot.slane %v2012, %v2019
      %v2022 = vunpack.c.l.s4 1983009808
      %v2023 = vunpack.c.0.s8 %v2022
      %v2024 = vlaneseq
      %v2025 = vshrl.u32 %v2024, 7
      %v2026 = vsub.s32 %v2023, %v2025
      %v2027 = vrot.slane %v2013, %v2026
      %v2028 = vcombine.low %v2004, %v2020
      %v2029 = vcombine.high %v2004, %v2020
      %v2031 = vunpack.c.l.s4 1934713408
      %v2032 = vunpack.c.0.s8 %v2031
      %v2033 = vlaneseq
      %v2034 = vshrl.u32 %v2033, 7
      %v2035 = vsub.s32 %v2032, %v2034
      %v2036 = vrot.slane %v2028, %v2035
      %v2038 = vunpack.c.l.s4 1934713408
      %v2039 = vunpack.c.0.s8 %v2038
      %v2040 = vlaneseq
      %v2041 = vshrl.u32 %v2040, 7
      %v2042 = vsub.s32 %v2039, %v2041
      %v2043 = vrot.slane %v2029, %v2042
      %v2044 = vcombine.low %v2011, %v2027
      %v2045 = vcombine.high %v2011, %v2027
      %v2047 = vunpack.c.l.s4 1934713408
      %v2048 = vunpack.c.0.s8 %v2047
      %v2049 = vlaneseq
      %v2050 = vshrl.u32 %v2049, 7
      %v2051 = vsub.s32 %v2048, %v2050
      %v2052 = vrot.slane %v2044, %v2051
      %v2054 = vunpack.c.l.s4 1934713408
      %v2055 = vunpack.c.0.s8 %v2054
      %v2056 = vlaneseq
      %v2057 = vshrl.u32 %v2056, 7
      %v2058 = vsub.s32 %v2055, %v2057
      %v2059 = vrot.slane %v2045, %v2058
      %v2060 = vcombine.high %v2036, 0.0
      %v2061 = vcombine.high %v2043, 0.0
      %v2062 = vcombine.high %v2052, 0.0
      %v2063 = vcombine.high %v2059, 0.0
      %2065 = vrot.lane.b32.xlu0 %v1992, 16
      %v2066 = vpop.permute.xlu0 %2065
      %2069 = vrot.lane.b32.xlu0 %v1975, 32
      %v2070 = vpop.permute.xlu0 %2069
      %2073 = vrot.lane.b32.xlu0 %v1993, 48
      %v2074 = vpop.permute.xlu0 %2073
      %2077 = vrot.lane.b32.xlu0 %v1984, 64
      %v2078 = vpop.permute.xlu0 %2077
      %2081 = vrot.lane.b32.xlu0 %v1994, 80
      %v2082 = vpop.permute.xlu0 %2081
      %2085 = vrot.lane.b32.xlu0 %v1991, 96
      %v2086 = vpop.permute.xlu0 %2085
      %2089 = vrot.lane.b32.xlu0 %v1995, 112
      %v2090 = vpop.permute.xlu0 %2089
      %2093 = vrot.lane.b32.xlu0 %v2060, 16
      %v2094 = vpop.permute.xlu0 %2093
      %2097 = vrot.lane.b32.xlu0 %v2043, 32
      %v2098 = vpop.permute.xlu0 %2097
      %2101 = vrot.lane.b32.xlu0 %v2061, 48
      %v2102 = vpop.permute.xlu0 %2101
      %2105 = vrot.lane.b32.xlu0 %v2052, 64
      %v2106 = vpop.permute.xlu0 %2105
      %2109 = vrot.lane.b32.xlu0 %v2062, 80
      %v2110 = vpop.permute.xlu0 %2109
      %2113 = vrot.lane.b32.xlu0 %v2059, 96
      %v2114 = vpop.permute.xlu0 %2113
      %2117 = vrot.lane.b32.xlu0 %v2063, 112
      %v2118 = vpop.permute.xlu0 %2117
      %v2120 = vsel %vm711, %v1968, %v2066
      %v2121 = vsel %vm713, %v2120, %v2070
      %v2122 = vsel %vm715, %v2121, %v2074
      %v2123 = vsel %vm717, %v2122, %v2078
      %v2124 = vsel %vm719, %v2123, %v2082
      %v2125 = vsel %vm721, %v2124, %v2086
      %v2126 = vsel %vm723, %v2125, %v2090
      %v2127 = vsel %vm711, %v2036, %v2094
      %v2128 = vsel %vm713, %v2127, %v2098
      %v2129 = vsel %vm715, %v2128, %v2102
      %v2130 = vsel %vm717, %v2129, %v2106
      %v2131 = vsel %vm719, %v2130, %v2110
      %v2132 = vsel %vm721, %v2131, %v2114
      %v2133 = vsel %vm723, %v2132, %v2118
      %2134 = vrot.lane.b32.xlu0 %v1902, 127
      %v2135 = vpop.permute.xlu0 %2134
      %2136 = vrot.lane.b32.xlu0 %v1904, 127
      %v2137 = vpop.permute.xlu0 %2136
      %2138 = vrot.lane.b32.xlu0 %v1907, 127
      %v2139 = vpop.permute.xlu0 %2138
      %2140 = vrot.lane.b32.xlu0 %v1909, 127
      %v2141 = vpop.permute.xlu0 %2140
      %2142 = vrot.lane.b32.xlu0 %v1912, 127
      %v2143 = vpop.permute.xlu0 %2142
      %2144 = vrot.lane.b32.xlu0 %v1914, 127
      %v2145 = vpop.permute.xlu0 %2144
      %2146 = vrot.lane.b32.xlu0 %v1917, 127
      %v2147 = vpop.permute.xlu0 %2146
      %2148 = vrot.lane.b32.xlu0 %v1919, 127
      %v2149 = vpop.permute.xlu0 %2148
      %v2158 = vcombine.low %v2135, %v2143
      %v2159 = vcombine.high %v2135, %v2143
      %v2161 = vunpack.c.l.s4 1983009808
      %v2162 = vunpack.c.0.s8 %v2161
      %v2163 = vlaneseq
      %v2164 = vshrl.u32 %v2163, 7
      %v2165 = vsub.s32 %v2162, %v2164
      %v2166 = vrot.slane %v2158, %v2165
      %v2168 = vunpack.c.l.s4 1983009808
      %v2169 = vunpack.c.0.s8 %v2168
      %v2170 = vlaneseq
      %v2171 = vshrl.u32 %v2170, 7
      %v2172 = vsub.s32 %v2169, %v2171
      %v2173 = vrot.slane %v2159, %v2172
      %v2174 = vcombine.low %v2139, %v2147
      %v2175 = vcombine.high %v2139, %v2147
      %v2177 = vunpack.c.l.s4 1983009808
      %v2178 = vunpack.c.0.s8 %v2177
      %v2179 = vlaneseq
      %v2180 = vshrl.u32 %v2179, 7
      %v2181 = vsub.s32 %v2178, %v2180
      %v2182 = vrot.slane %v2174, %v2181
      %v2184 = vunpack.c.l.s4 1983009808
      %v2185 = vunpack.c.0.s8 %v2184
      %v2186 = vlaneseq
      %v2187 = vshrl.u32 %v2186, 7
      %v2188 = vsub.s32 %v2185, %v2187
      %v2189 = vrot.slane %v2175, %v2188
      %v2190 = vcombine.low %v2166, %v2182
      %v2191 = vcombine.high %v2166, %v2182
      %v2193 = vunpack.c.l.s4 1934713408
      %v2194 = vunpack.c.0.s8 %v2193
      %v2195 = vlaneseq
      %v2196 = vshrl.u32 %v2195, 7
      %v2197 = vsub.s32 %v2194, %v2196
      %v2198 = vrot.slane %v2190, %v2197
      %v2200 = vunpack.c.l.s4 1934713408
      %v2201 = vunpack.c.0.s8 %v2200
      %v2202 = vlaneseq
      %v2203 = vshrl.u32 %v2202, 7
      %v2204 = vsub.s32 %v2201, %v2203
      %v2205 = vrot.slane %v2191, %v2204
      %v2206 = vcombine.low %v2173, %v2189
      %v2207 = vcombine.high %v2173, %v2189
      %v2209 = vunpack.c.l.s4 1934713408
      %v2210 = vunpack.c.0.s8 %v2209
      %v2211 = vlaneseq
      %v2212 = vshrl.u32 %v2211, 7
      %v2213 = vsub.s32 %v2210, %v2212
      %v2214 = vrot.slane %v2206, %v2213
      %v2216 = vunpack.c.l.s4 1934713408
      %v2217 = vunpack.c.0.s8 %v2216
      %v2218 = vlaneseq
      %v2219 = vshrl.u32 %v2218, 7
      %v2220 = vsub.s32 %v2217, %v2219
      %v2221 = vrot.slane %v2207, %v2220
      %v2222 = vcombine.high %v2198, 0.0
      %v2223 = vcombine.high %v2205, 0.0
      %v2224 = vcombine.high %v2214, 0.0
      %v2225 = vcombine.high %v2221, 0.0
      %v2226 = vcombine.low %v2137, %v2145
      %v2227 = vcombine.high %v2137, %v2145
      %v2229 = vunpack.c.l.s4 1983009808
      %v2230 = vunpack.c.0.s8 %v2229
      %v2231 = vlaneseq
      %v2232 = vshrl.u32 %v2231, 7
      %v2233 = vsub.s32 %v2230, %v2232
      %v2234 = vrot.slane %v2226, %v2233
      %v2236 = vunpack.c.l.s4 1983009808
      %v2237 = vunpack.c.0.s8 %v2236
      %v2238 = vlaneseq
      %v2239 = vshrl.u32 %v2238, 7
      %v2240 = vsub.s32 %v2237, %v2239
      %v2241 = vrot.slane %v2227, %v2240
      %v2242 = vcombine.low %v2141, %v2149
      %v2243 = vcombine.high %v2141, %v2149
      %v2245 = vunpack.c.l.s4 1983009808
      %v2246 = vunpack.c.0.s8 %v2245
      %v2247 = vlaneseq
      %v2248 = vshrl.u32 %v2247, 7
      %v2249 = vsub.s32 %v2246, %v2248
      %v2250 = vrot.slane %v2242, %v2249
      %v2252 = vunpack.c.l.s4 1983009808
      %v2253 = vunpack.c.0.s8 %v2252
      %v2254 = vlaneseq
      %v2255 = vshrl.u32 %v2254, 7
      %v2256 = vsub.s32 %v2253, %v2255
      %v2257 = vrot.slane %v2243, %v2256
      %v2258 = vcombine.low %v2234, %v2250
      %v2259 = vcombine.high %v2234, %v2250
      %v2261 = vunpack.c.l.s4 1934713408
      %v2262 = vunpack.c.0.s8 %v2261
      %v2263 = vlaneseq
      %v2264 = vshrl.u32 %v2263, 7
      %v2265 = vsub.s32 %v2262, %v2264
      %v2266 = vrot.slane %v2258, %v2265
      %v2268 = vunpack.c.l.s4 1934713408
      %v2269 = vunpack.c.0.s8 %v2268
      %v2270 = vlaneseq
      %v2271 = vshrl.u32 %v2270, 7
      %v2272 = vsub.s32 %v2269, %v2271
      %v2273 = vrot.slane %v2259, %v2272
      %v2274 = vcombine.low %v2241, %v2257
      %v2275 = vcombine.high %v2241, %v2257
      %v2277 = vunpack.c.l.s4 1934713408
      %v2278 = vunpack.c.0.s8 %v2277
      %v2279 = vlaneseq
      %v2280 = vshrl.u32 %v2279, 7
      %v2281 = vsub.s32 %v2278, %v2280
      %v2282 = vrot.slane %v2274, %v2281
      %v2284 = vunpack.c.l.s4 1934713408
      %v2285 = vunpack.c.0.s8 %v2284
      %v2286 = vlaneseq
      %v2287 = vshrl.u32 %v2286, 7
      %v2288 = vsub.s32 %v2285, %v2287
      %v2289 = vrot.slane %v2275, %v2288
      %v2290 = vcombine.high %v2266, 0.0
      %v2291 = vcombine.high %v2273, 0.0
      %v2292 = vcombine.high %v2282, 0.0
      %v2293 = vcombine.high %v2289, 0.0
      %2295 = vrot.lane.b32.xlu0 %v2222, 16
      %v2296 = vpop.permute.xlu0 %2295
      %2299 = vrot.lane.b32.xlu0 %v2205, 32
      %v2300 = vpop.permute.xlu0 %2299
      %2303 = vrot.lane.b32.xlu0 %v2223, 48
      %v2304 = vpop.permute.xlu0 %2303
      %2307 = vrot.lane.b32.xlu0 %v2214, 64
      %v2308 = vpop.permute.xlu0 %2307
      %2311 = vrot.lane.b32.xlu0 %v2224, 80
      %v2312 = vpop.permute.xlu0 %2311
      %2315 = vrot.lane.b32.xlu0 %v2221, 96
      %v2316 = vpop.permute.xlu0 %2315
      %2319 = vrot.lane.b32.xlu0 %v2225, 112
      %v2320 = vpop.permute.xlu0 %2319
      %2323 = vrot.lane.b32.xlu0 %v2290, 16
      %v2324 = vpop.permute.xlu0 %2323
      %2327 = vrot.lane.b32.xlu0 %v2273, 32
      %v2328 = vpop.permute.xlu0 %2327
      %2331 = vrot.lane.b32.xlu0 %v2291, 48
      %v2332 = vpop.permute.xlu0 %2331
      %2335 = vrot.lane.b32.xlu0 %v2282, 64
      %v2336 = vpop.permute.xlu0 %2335
      %2339 = vrot.lane.b32.xlu0 %v2292, 80
      %v2340 = vpop.permute.xlu0 %2339
      %2343 = vrot.lane.b32.xlu0 %v2289, 96
      %v2344 = vpop.permute.xlu0 %2343
      %2347 = vrot.lane.b32.xlu0 %v2293, 112
      %v2348 = vpop.permute.xlu0 %2347
      %v2350 = vsel %vm711, %v2198, %v2296
      %v2351 = vsel %vm713, %v2350, %v2300
      %v2352 = vsel %vm715, %v2351, %v2304
      %v2353 = vsel %vm717, %v2352, %v2308
      %v2354 = vsel %vm719, %v2353, %v2312
      %v2355 = vsel %vm721, %v2354, %v2316
      %v2356 = vsel %vm723, %v2355, %v2320
      %v2357 = vsel %vm711, %v2266, %v2324
      %v2358 = vsel %vm713, %v2357, %v2328
      %v2359 = vsel %vm715, %v2358, %v2332
      %v2360 = vsel %vm717, %v2359, %v2336
      %v2361 = vsel %vm719, %v2360, %v2340
      %v2362 = vsel %vm721, %v2361, %v2344
      %v2363 = vsel %vm723, %v2362, %v2348
      %2364 = vrot.lane.b32.xlu0 %v1902, 126
      %v2365 = vpop.permute.xlu0 %2364
      %2366 = vrot.lane.b32.xlu0 %v1904, 126
      %v2367 = vpop.permute.xlu0 %2366
      %2368 = vrot.lane.b32.xlu0 %v1907, 126
      %v2369 = vpop.permute.xlu0 %2368
      %2370 = vrot.lane.b32.xlu0 %v1909, 126
      %v2371 = vpop.permute.xlu0 %2370
      %2372 = vrot.lane.b32.xlu0 %v1912, 126
      %v2373 = vpop.permute.xlu0 %2372
      %2374 = vrot.lane.b32.xlu0 %v1914, 126
      %v2375 = vpop.permute.xlu0 %2374
      %2376 = vrot.lane.b32.xlu0 %v1917, 126
      %v2377 = vpop.permute.xlu0 %2376
      %2378 = vrot.lane.b32.xlu0 %v1919, 126
      %v2379 = vpop.permute.xlu0 %2378
      %v2388 = vcombine.low %v2365, %v2373
      %v2389 = vcombine.high %v2365, %v2373
      %v2391 = vunpack.c.l.s4 1983009808
      %v2392 = vunpack.c.0.s8 %v2391
      %v2393 = vlaneseq
      %v2394 = vshrl.u32 %v2393, 7
      %v2395 = vsub.s32 %v2392, %v2394
      %v2396 = vrot.slane %v2388, %v2395
      %v2398 = vunpack.c.l.s4 1983009808
      %v2399 = vunpack.c.0.s8 %v2398
      %v2400 = vlaneseq
      %v2401 = vshrl.u32 %v2400, 7
      %v2402 = vsub.s32 %v2399, %v2401
      %v2403 = vrot.slane %v2389, %v2402
      %v2404 = vcombine.low %v2369, %v2377
      %v2405 = vcombine.high %v2369, %v2377
      %v2407 = vunpack.c.l.s4 1983009808
      %v2408 = vunpack.c.0.s8 %v2407
      %v2409 = vlaneseq
      %v2410 = vshrl.u32 %v2409, 7
      %v2411 = vsub.s32 %v2408, %v2410
      %v2412 = vrot.slane %v2404, %v2411
      %v2414 = vunpack.c.l.s4 1983009808
      %v2415 = vunpack.c.0.s8 %v2414
      %v2416 = vlaneseq
      %v2417 = vshrl.u32 %v2416, 7
      %v2418 = vsub.s32 %v2415, %v2417
      %v2419 = vrot.slane %v2405, %v2418
      %v2420 = vcombine.low %v2396, %v2412
      %v2421 = vcombine.high %v2396, %v2412
      %v2423 = vunpack.c.l.s4 1934713408
      %v2424 = vunpack.c.0.s8 %v2423
      %v2425 = vlaneseq
      %v2426 = vshrl.u32 %v2425, 7
      %v2427 = vsub.s32 %v2424, %v2426
      %v2428 = vrot.slane %v2420, %v2427
      %v2430 = vunpack.c.l.s4 1934713408
      %v2431 = vunpack.c.0.s8 %v2430
      %v2432 = vlaneseq
      %v2433 = vshrl.u32 %v2432, 7
      %v2434 = vsub.s32 %v2431, %v2433
      %v2435 = vrot.slane %v2421, %v2434
      %v2436 = vcombine.low %v2403, %v2419
      %v2437 = vcombine.high %v2403, %v2419
      %v2439 = vunpack.c.l.s4 1934713408
      %v2440 = vunpack.c.0.s8 %v2439
      %v2441 = vlaneseq
      %v2442 = vshrl.u32 %v2441, 7
      %v2443 = vsub.s32 %v2440, %v2442
      %v2444 = vrot.slane %v2436, %v2443
      %v2446 = vunpack.c.l.s4 1934713408
      %v2447 = vunpack.c.0.s8 %v2446
      %v2448 = vlaneseq
      %v2449 = vshrl.u32 %v2448, 7
      %v2450 = vsub.s32 %v2447, %v2449
      %v2451 = vrot.slane %v2437, %v2450
      %v2452 = vcombine.high %v2428, 0.0
      %v2453 = vcombine.high %v2435, 0.0
      %v2454 = vcombine.high %v2444, 0.0
      %v2455 = vcombine.high %v2451, 0.0
      %v2456 = vcombine.low %v2367, %v2375
      %v2457 = vcombine.high %v2367, %v2375
      %v2459 = vunpack.c.l.s4 1983009808
      %v2460 = vunpack.c.0.s8 %v2459
      %v2461 = vlaneseq
      %v2462 = vshrl.u32 %v2461, 7
      %v2463 = vsub.s32 %v2460, %v2462
      %v2464 = vrot.slane %v2456, %v2463
      %v2466 = vunpack.c.l.s4 1983009808
      %v2467 = vunpack.c.0.s8 %v2466
      %v2468 = vlaneseq
      %v2469 = vshrl.u32 %v2468, 7
      %v2470 = vsub.s32 %v2467, %v2469
      %v2471 = vrot.slane %v2457, %v2470
      %v2472 = vcombine.low %v2371, %v2379
      %v2473 = vcombine.high %v2371, %v2379
      %v2475 = vunpack.c.l.s4 1983009808
      %v2476 = vunpack.c.0.s8 %v2475
      %v2477 = vlaneseq
      %v2478 = vshrl.u32 %v2477, 7
      %v2479 = vsub.s32 %v2476, %v2478
      %v2480 = vrot.slane %v2472, %v2479
      %v2482 = vunpack.c.l.s4 1983009808
      %v2483 = vunpack.c.0.s8 %v2482
      %v2484 = vlaneseq
      %v2485 = vshrl.u32 %v2484, 7
      %v2486 = vsub.s32 %v2483, %v2485
      %v2487 = vrot.slane %v2473, %v2486
      %v2488 = vcombine.low %v2464, %v2480
      %v2489 = vcombine.high %v2464, %v2480
      %v2491 = vunpack.c.l.s4 1934713408
      %v2492 = vunpack.c.0.s8 %v2491
      %v2493 = vlaneseq
      %v2494 = vshrl.u32 %v2493, 7
      %v2495 = vsub.s32 %v2492, %v2494
      %v2496 = vrot.slane %v2488, %v2495
      %v2498 = vunpack.c.l.s4 1934713408
      %v2499 = vunpack.c.0.s8 %v2498
      %v2500 = vlaneseq
      %v2501 = vshrl.u32 %v2500, 7
      %v2502 = vsub.s32 %v2499, %v2501
      %v2503 = vrot.slane %v2489, %v2502
      %v2504 = vcombine.low %v2471, %v2487
      %v2505 = vcombine.high %v2471, %v2487
      %v2507 = vunpack.c.l.s4 1934713408
      %v2508 = vunpack.c.0.s8 %v2507
      %v2509 = vlaneseq
      %v2510 = vshrl.u32 %v2509, 7
      %v2511 = vsub.s32 %v2508, %v2510
      %v2512 = vrot.slane %v2504, %v2511
      %v2514 = vunpack.c.l.s4 1934713408
      %v2515 = vunpack.c.0.s8 %v2514
      %v2516 = vlaneseq
      %v2517 = vshrl.u32 %v2516, 7
      %v2518 = vsub.s32 %v2515, %v2517
      %v2519 = vrot.slane %v2505, %v2518
      %v2520 = vcombine.high %v2496, 0.0
      %v2521 = vcombine.high %v2503, 0.0
      %v2522 = vcombine.high %v2512, 0.0
      %v2523 = vcombine.high %v2519, 0.0
      %2525 = vrot.lane.b32.xlu0 %v2452, 16
      %v2526 = vpop.permute.xlu0 %2525
      %2529 = vrot.lane.b32.xlu0 %v2435, 32
      %v2530 = vpop.permute.xlu0 %2529
      %2533 = vrot.lane.b32.xlu0 %v2453, 48
      %v2534 = vpop.permute.xlu0 %2533
      %2537 = vrot.lane.b32.xlu0 %v2444, 64
      %v2538 = vpop.permute.xlu0 %2537
      %2541 = vrot.lane.b32.xlu0 %v2454, 80
      %v2542 = vpop.permute.xlu0 %2541
      %2545 = vrot.lane.b32.xlu0 %v2451, 96
      %v2546 = vpop.permute.xlu0 %2545
      %2549 = vrot.lane.b32.xlu0 %v2455, 112
      %v2550 = vpop.permute.xlu0 %2549
      %2553 = vrot.lane.b32.xlu0 %v2520, 16
      %v2554 = vpop.permute.xlu0 %2553
      %2557 = vrot.lane.b32.xlu0 %v2503, 32
      %v2558 = vpop.permute.xlu0 %2557
      %2561 = vrot.lane.b32.xlu0 %v2521, 48
      %v2562 = vpop.permute.xlu0 %2561
      %2565 = vrot.lane.b32.xlu0 %v2512, 64
      %v2566 = vpop.permute.xlu0 %2565
      %2569 = vrot.lane.b32.xlu0 %v2522, 80
      %v2570 = vpop.permute.xlu0 %2569
      %2573 = vrot.lane.b32.xlu0 %v2519, 96
      %v2574 = vpop.permute.xlu0 %2573
      %2577 = vrot.lane.b32.xlu0 %v2523, 112
      %v2578 = vpop.permute.xlu0 %2577
      %v2580 = vsel %vm711, %v2428, %v2526
      %v2581 = vsel %vm713, %v2580, %v2530
      %v2582 = vsel %vm715, %v2581, %v2534
      %v2583 = vsel %vm717, %v2582, %v2538
      %v2584 = vsel %vm719, %v2583, %v2542
      %v2585 = vsel %vm721, %v2584, %v2546
      %v2586 = vsel %vm723, %v2585, %v2550
      %v2587 = vsel %vm711, %v2496, %v2554
      %v2588 = vsel %vm713, %v2587, %v2558
      %v2589 = vsel %vm715, %v2588, %v2562
      %v2590 = vsel %vm717, %v2589, %v2566
      %v2591 = vsel %vm719, %v2590, %v2570
      %v2592 = vsel %vm721, %v2591, %v2574
      %v2593 = vsel %vm723, %v2592, %v2578
      %v2596 = vrot.slane %v962, 4
      %v2597 = vrot.slane %v969, 4
      %v2602 = vrot.slane %v1431, 4
      %v2603 = vrot.slane %v1438, 4
      %v2608 = vrot.slane %v1891, 4
      %v2609 = vrot.slane %v1898, 4
      %v2614 = vrot.slane %v2356, 4
      %v2615 = vrot.slane %v2363, 4
      %vm2618 = vcmask 1043456
      %v2619 = vsel %vm2618, %v724, %v2596
      %v2620 = vsel %vm2618, %v731, %v2597
      %v2621 = vsel %vm2618, %v1192, %v2602
      %v2622 = vsel %vm2618, %v1199, %v2603
      %v2623 = vsel %vm2618, %v1661, %v2608
      %v2624 = vsel %vm2618, %v1668, %v2609
      %v2625 = vsel %vm2618, %v2126, %v2614
      %v2626 = vsel %vm2618, %v2133, %v2615
      %v2627 = vpack.c.bf16 %v395, %v395
      %v2628 = vpack.c.bf16 %v2621, %v2619
      %v2629 = vpack.c.bf16 %v2622, %v2620
      %v2630 = vpack.c.bf16 %v2625, %v2623
      %v2631 = vpack.c.bf16 %v2626, %v2624
      %v2632 = vpack.c.bf16 %v2586, %v2586
      %v2633 = vpack.c.bf16 %v2593, %v2593
      %vm2634 = vcmask 293888
      %v2636 = vsel %vm2634, %v2627, 0
      %vm2638 = vcmask 1041408
      %v2640 = vsel %vm2638, %v2632, 0
      %v2643 = vsel %vm2638, %v2633, 0
      %2645 = vmatprep.subr.bf16.mxu0 %v2629
      %2646 = vmatpush1.bf16.msra.mxu0 %v2628
      %2647 = vmatprep.subr.bf16.mxu0 %v2631
      %2648 = vmatpush1.bf16.msra.mxu0 %v2630
      %2649 = vmatprep.subr.bf16.mxu0 %v2643
      %2650 = vmatpush1.bf16.msra.mxu0 %v2640
      %2651 = vmatprep.subr.bf16.mxu0 0
      %2652 = vmatpush1.bf16.msra.mxu0 0
      %2653 = vmatprep.subr.bf16.mxu0 0
      %2654 = vmatpush1.bf16.msra.mxu0 0
      %2655 = vmatprep.subr.bf16.mxu0 0
      %2656 = vmatpush1.bf16.msra.mxu0 0
      %2657 = vmatprep.subr.bf16.mxu0 0
      %2658 = vmatpush1.bf16.msra.mxu0 0
      %2659 = vmatprep.subr.bf16.mxu0 0
      %2660 = vmatpush1.bf16.msra.mxu0 0
      %2661 = vmatprep.subr.bf16.mxu0 0
      %2662 = vmatpush1.bf16.msra.mxu0 0
      %2663 = vmatprep.subr.bf16.mxu0 0
      %2664 = vmatpush1.bf16.msra.mxu0 0
      %2665 = vmatprep.subr.bf16.mxu0 0
      %2666 = vmatpush1.bf16.msra.mxu0 0
      %2667 = vmatprep.subr.bf16.mxu0 0
      %2668 = vmatpush1.bf16.msra.mxu0 0
      %2669 = vmatprep.subr.bf16.mxu0 0
      %2670 = vmatpush1.bf16.msra.mxu0 0
      %2671 = vmatprep.subr.bf16.mxu0 0
      %2672 = vmatpush1.bf16.msra.mxu0 0
      %2673 = vmatprep.subr.bf16.mxu0 0
      %2674 = vmatpush1.bf16.msra.mxu0 0
      %2675 = vmatprep.subr.bf16.mxu0 0
      %2676 = vmatpush1.bf16.msra.mxu0 0
      %2677 = vmatprep.mubr.bf16.mxu0 0
      %2678 = vmatmul.mubr.bf16.gmra.mrb[0].mxu0 %v2636
      %v2679 = vpop.f32.mrb[0].mxu0
      %v2680 = vadd.f32 0.0, %v2679
      %v2681 = vpop.f32.mrb[0].mxu0
      %v2682 = vadd.f32 0.0, %v2681
      %v2683 = vpop.f32.mrb[0].mxu0
      %v2684 = vpop.f32.mrb[0].mxu0
      %2685 = vdwg.mxu0
      %2686 = vst [vmem:[%s210] sm:$0xff] %v2680
      %2687 = vst [vmem:[%s210 + $0x8] sm:$0xff] %v2682
      %v2688 = vadd.f32 %v2680, %v2682
      %2689 = vadd.xlane.f32.xlu0 %v2688
      %v2690 = vpop.xlane.xlu0 %2689
      %2691 = vst.msk [vmem:[%s214] sm:$0xff] %vm493, %v2690
      %v2692 = vmul.f32 %v2680, %v2680
      %v2693 = vmul.f32 %v2682, %v2682
      %v2694 = vadd.f32 %v2692, %v2693
      %2695 = vadd.xlane.f32.xlu0 %v2694
      %v2696 = vpop.xlane.xlu0 %2695
      %2697 = vst.msk [vmem:[%s218] sm:$0xff] %vm493, %v2696
      %p2698 = scmp.lt.s32.totalorder %s16, 1
      %s2699 = scalar_select %p2698, %s16, 1
      %s2700 = smul.addr %s2699, 2
      %s2701 = smul.addr %s2700, 8
      %s2702 = scalar_lea.vmem %s2, %s2701
      %p2703 = scmp.lt.s32.totalorder %s16, 1
      %s2704 = scalar_select %p2703, %s16, 1
      %s2705 = smul.addr %s2704, 8
      %s2706 = scalar_lea.vmem %s3, %s2705
      %p2707 = scmp.lt.s32.totalorder %s16, 1
      %s2708 = scalar_select %p2707, %s16, 1
      %s2709 = smul.addr %s2708, 8
      %s2710 = scalar_lea.vmem %s4, %s2709
      // Predicated region
      $region29: #{conv_block_d_forward.3} parent=27 // pred_check
        %p2711 = pneg %p81
      $region30: #{conv_block_d_forward.3} parent=27 // pred_check_branch
        %2713 = sbr.rel (%p2711) target = $region32
      $region31: #{conv_block_d_forward.3} parent=27 // pred_region
        _
      $region32: #{conv_block_d_forward.3} parent=27 // pred_fallthru
        _
      // Predicated region
      $region33: #{conv_block_d_forward.3} parent=27 // pred_check
        %p2714 = pneg %p107
      $region34: #{conv_block_d_forward.3} parent=27 // pred_check_branch
        %2716 = sbr.rel (%p2714) target = $region36
      $region35: #{conv_block_d_forward.3} parent=27 // pred_region
        _
      $region36: #{conv_block_d_forward.3} parent=27 // pred_fallthru
        _
      // Predicated region
      $region37: #{conv_block_d_forward.3} parent=27 // pred_check
        %p2717 = pneg %p133
      $region38: #{conv_block_d_forward.3} parent=27 // pred_check_branch
        %2719 = sbr.rel (%p2717) target = $region40
      $region39: #{conv_block_d_forward.3} parent=27 // pred_region
        _
      $region40: #{conv_block_d_forward.3} parent=27 // pred_fallthru
        _
    $region28: #{conv_block_d_forward.3} parent=5 // pred_fallthru
      _
    %p2720 = scmp.le.s32.totalorder 2, %s11
    // Predicated region
    $region41: #{conv_block_d_forward.3} parent=5 // pred_check
      %p2721 = pneg %p2720
    $region42: #{conv_block_d_forward.3} parent=5 // pred_check_branch
      %2723 = sbr.rel (%p2721) target = $region44
    $region43: #{conv_block_d_forward.3} parent=5 // pred_region
      %s2724 = ssub.s32 %s11, 2
      // Predicated region
      $region45: #{conv_block_d_forward.3} parent=43 // pred_check
        %p2725 = pneg %p87
      $region46: #{conv_block_d_forward.3} parent=43 // pred_check_branch
        %2727 = sbr.rel (%p2725) target = $region48
      $region47: #{conv_block_d_forward.3} parent=43 // pred_region
        %p2728 = scmp.lt.s32.totalorder %s17, 1
        %s2729 = scalar_select %p2728, %s17, 1
        %s2730 = smul.addr %s2729, 2
        %s2731 = smul.addr %s2730, 8
        %s2732 = scalar_lea.vmem %s2, %s2731
      $region48: #{conv_block_d_forward.3} parent=43 // pred_fallthru
        _
      // Predicated region
      $region49: #{conv_block_d_forward.3} parent=43 // pred_check
        %p2733 = pneg %p113
      $region50: #{conv_block_d_forward.3} parent=43 // pred_check_branch
        %2735 = sbr.rel (%p2733) target = $region52
      $region51: #{conv_block_d_forward.3} parent=43 // pred_region
        %p2736 = scmp.lt.s32.totalorder %s17, 1
        %s2737 = scalar_select %p2736, %s17, 1
        %s2738 = smul.addr %s2737, 8
        %s2739 = scalar_lea.vmem %s3, %s2738
      $region52: #{conv_block_d_forward.3} parent=43 // pred_fallthru
        _
      // Predicated region
      $region53: #{conv_block_d_forward.3} parent=43 // pred_check
        %p2740 = pneg %p139
      $region54: #{conv_block_d_forward.3} parent=43 // pred_check_branch
        %2742 = sbr.rel (%p2740) target = $region56
      $region55: #{conv_block_d_forward.3} parent=43 // pred_region
        %p2743 = scmp.lt.s32.totalorder %s17, 1
        %s2744 = scalar_select %p2743, %s17, 1
        %s2745 = smul.addr %s2744, 8
        %s2746 = scalar_lea.vmem %s4, %s2745
      $region56: #{conv_block_d_forward.3} parent=43 // pred_fallthru
        _
    $region44: #{conv_block_d_forward.3} parent=5 // pred_fallthru
      _
  $region6: #{conv_block_d_forward.3} parent=0 // loop_footer
    %s15 = sadd.s32 1, %s11
  $region7: #{conv_block_d_forward.3} parent=0 // loop_footer_branch
    %10 = sbr.rel target = $region3
  $region8: #{conv_block_d_forward.3} parent=0 // loop_exit
    _

// kernel: conv_block_d_forward.4
$region0: #{conv_block_d_forward.4}
  #allocation0 [shape = 'u32[]', space=smem, size = 0x4, offset = 0x4, fixed_abs, tag = 'smem constant byte address 0x4 - core index']
  #allocation1 [shape = 'u32[144,128]{1,0:T(1,128)}', space=vmem, size = 0x12000, scoped, tag = 'internal scratch']
  %s0 = inlined_call_operand.vmem [shape: f32[2,8,256], index: 0, kind: input, shape index: {}]
  %s1 = inlined_call_operand.vmem [shape: f32[8,1], index: 1, kind: input, shape index: {}]
  %s2 = inlined_call_operand.vmem [shape: f32[8,1], index: 2, kind: input, shape index: {}]
  %s3 = inlined_call_operand.vmem [shape: f32[8,72], index: 3, kind: input, shape index: {}]
  %s4 = inlined_call_operand.vmem [shape: f32[2,8,256], index: 4, kind: output, shape index: {0}]
  %s5 = inlined_call_operand.vmem [shape: f32[2,8,1], index: 5, kind: output, shape index: {1}]
  %s6 = inlined_call_operand.vmem [shape: f32[2,8,1], index: 6, kind: output, shape index: {2}]
  %7 = xla_tuple %s4, %s5, %s6
  %s8 = sld [smem:[#allocation0]]
  $region65: #{conv_block_d_forward.4} parent=0
    _
  %s10 = ssub.s32 1, %s8
  %s11 = scalar_select 0, %s10, %s8
  loop: start=0, step=1, limit=4
  $region2: #{conv_block_d_forward.4} parent=0 // loop_pre_header
    _
  $region3: #{conv_block_d_forward.4} parent=0 // loop_header
    %s13 = sphi 0, %s17
    %p14 = scmp.ge.s32.totalorder %s13, 4
    %s23 = sphi 0, %s25
    %s26 = sphi 0, %s23
    %s27 = sphi 0, %s26
    %s43 = sphi 0, %s27
    %s47 = sphi 0, %s47
    %s49 = sphi 0, %s47
    %s50 = sphi 0, %s49
    %s64 = sphi 0, %s50
    %s68 = sphi 0, %s68
    %s70 = sphi 0, %s68
    %s71 = sphi 0, %s70
    %s85 = sphi 0, %s71
    %s89 = sphi 0, %s89
    %s91 = sphi 0, %s89
    %s92 = sphi 0, %s91
    %s106 = sphi 0, %s92
    %s112 = sphi 0, %s114
    %s115 = sphi 0, %s112
    %s116 = sphi 0, %s115
    %s132 = sphi 0, %s116
    %s138 = sphi 0, %s140
    %s141 = sphi 0, %s138
    %s142 = sphi 0, %s141
    %s158 = sphi 0, %s142
    %s164 = sphi 0, %s166
    %s167 = sphi 0, %s164
    %s168 = sphi 0, %s167
    %s184 = sphi 0, %s168
  $region4: #{conv_block_d_forward.4} parent=0 // loop_header_branch
    %16 = sbr.rel (%p14) target = $region8
  $region5: #{conv_block_d_forward.4} parent=0 // loop_body
    %s18 = ssub.s32 %s13, 1
    %s19 = ssub.s32 %s13, 2
    %s20 = sadd.s32 %s13, 1
    %s21 = ssub.s32 %s13, %s20
    %p22 = scmp.eq.s32.totalorder %s21, 0
    %s24 = sadd.s32 %s23, 1
    %s25 = scalar_select %p22, %s23, %s24
    %p28 = pneg %p22
    %p29 = scmp.eq.s32.totalorder %s13, 1
    %p30 = por %p28, %p29
    %p31 = scmp.ne.s32.totalorder %s23, %s26
    %p32 = scmp.eq.s32.totalorder %s13, 0
    %p33 = por %p31, %p32
    %p34 = scmp.ne.s32.totalorder %s23, %s26
    %p35 = scmp.eq.s32.totalorder %s18, 1
    %p36 = por %p34, %p35
    %p37 = scmp.ne.s32.totalorder %s26, %s27
    %p38 = scmp.eq.s32.totalorder %s18, 0
    %p39 = por %p37, %p38
    %p40 = scmp.ne.s32.totalorder %s26, %s27
    %p41 = scmp.eq.s32.totalorder %s19, 1
    %p42 = por %p40, %p41
    %p44 = scmp.ne.s32.totalorder %s27, %s43
    %p45 = scmp.eq.s32.totalorder %s19, 0
    %p46 = por %p44, %p45
    %s48 = sadd.s32 %s47, 1
    %p51 = scmp.eq.s32.totalorder %s13, 1
    %p52 = scmp.ne.s32.totalorder %s47, %s49
    %p53 = scmp.eq.s32.totalorder %s13, 0
    %p54 = por %p52, %p53
    %p55 = scmp.ne.s32.totalorder %s47, %s49
    %p56 = scmp.eq.s32.totalorder %s18, 1
    %p57 = por %p55, %p56
    %p58 = scmp.ne.s32.totalorder %s49, %s50
    %p59 = scmp.eq.s32.totalorder %s18, 0
    %p60 = por %p58, %p59
    %p61 = scmp.ne.s32.totalorder %s49, %s50
    %p62 = scmp.eq.s32.totalorder %s19, 1
    %p63 = por %p61, %p62
    %p65 = scmp.ne.s32.totalorder %s50, %s64
    %p66 = scmp.eq.s32.totalorder %s19, 0
    %p67 = por %p65, %p66
    %s69 = sadd.s32 %s68, 1
    %p72 = scmp.eq.s32.totalorder %s13, 1
    %p73 = scmp.ne.s32.totalorder %s68, %s70
    %p74 = scmp.eq.s32.totalorder %s13, 0
    %p75 = por %p73, %p74
    %p76 = scmp.ne.s32.totalorder %s68, %s70
    %p77 = scmp.eq.s32.totalorder %s18, 1
    %p78 = por %p76, %p77
    %p79 = scmp.ne.s32.totalorder %s70, %s71
    %p80 = scmp.eq.s32.totalorder %s18, 0
    %p81 = por %p79, %p80
    %p82 = scmp.ne.s32.totalorder %s70, %s71
    %p83 = scmp.eq.s32.totalorder %s19, 1
    %p84 = por %p82, %p83
    %p86 = scmp.ne.s32.totalorder %s71, %s85
    %p87 = scmp.eq.s32.totalorder %s19, 0
    %p88 = por %p86, %p87
    %s90 = sadd.s32 %s89, 1
    %p93 = scmp.eq.s32.totalorder %s13, 1
    %p94 = scmp.ne.s32.totalorder %s89, %s91
    %p95 = scmp.eq.s32.totalorder %s13, 0
    %p96 = por %p94, %p95
    %p97 = scmp.ne.s32.totalorder %s89, %s91
    %p98 = scmp.eq.s32.totalorder %s18, 1
    %p99 = por %p97, %p98
    %p100 = scmp.ne.s32.totalorder %s91, %s92
    %p101 = scmp.eq.s32.totalorder %s18, 0
    %p102 = por %p100, %p101
    %p103 = scmp.ne.s32.totalorder %s91, %s92
    %p104 = scmp.eq.s32.totalorder %s19, 1
    %p105 = por %p103, %p104
    %p107 = scmp.ne.s32.totalorder %s92, %s106
    %p108 = scmp.eq.s32.totalorder %s19, 0
    %p109 = por %p107, %p108
    %s110 = ssub.s32 %s13, %s20
    %p111 = scmp.eq.s32.totalorder %s110, 0
    %s113 = sadd.s32 %s112, 1
    %s114 = scalar_select %p111, %s112, %s113
    %p117 = pneg %p111
    %p118 = scmp.eq.s32.totalorder %s13, 1
    %p119 = por %p117, %p118
    %p120 = scmp.ne.s32.totalorder %s112, %s115
    %p121 = scmp.eq.s32.totalorder %s13, 0
    %p122 = por %p120, %p121
    %p123 = scmp.ne.s32.totalorder %s112, %s115
    %p124 = scmp.eq.s32.totalorder %s18, 1
    %p125 = por %p123, %p124
    %p126 = scmp.ne.s32.totalorder %s115, %s116
    %p127 = scmp.eq.s32.totalorder %s18, 0
    %p128 = por %p126, %p127
    %p129 = scmp.ne.s32.totalorder %s115, %s116
    %p130 = scmp.eq.s32.totalorder %s19, 1
    %p131 = por %p129, %p130
    %p133 = scmp.ne.s32.totalorder %s116, %s132
    %p134 = scmp.eq.s32.totalorder %s19, 0
    %p135 = por %p133, %p134
    %s136 = ssub.s32 %s13, %s20
    %p137 = scmp.eq.s32.totalorder %s136, 0
    %s139 = sadd.s32 %s138, 1
    %s140 = scalar_select %p137, %s138, %s139
    %p143 = pneg %p137
    %p144 = scmp.eq.s32.totalorder %s13, 1
    %p145 = por %p143, %p144
    %p146 = scmp.ne.s32.totalorder %s138, %s141
    %p147 = scmp.eq.s32.totalorder %s13, 0
    %p148 = por %p146, %p147
    %p149 = scmp.ne.s32.totalorder %s138, %s141
    %p150 = scmp.eq.s32.totalorder %s18, 1
    %p151 = por %p149, %p150
    %p152 = scmp.ne.s32.totalorder %s141, %s142
    %p153 = scmp.eq.s32.totalorder %s18, 0
    %p154 = por %p152, %p153
    %p155 = scmp.ne.s32.totalorder %s141, %s142
    %p156 = scmp.eq.s32.totalorder %s19, 1
    %p157 = por %p155, %p156
    %p159 = scmp.ne.s32.totalorder %s142, %s158
    %p160 = scmp.eq.s32.totalorder %s19, 0
    %p161 = por %p159, %p160
    %s162 = ssub.s32 %s13, %s20
    %p163 = scmp.eq.s32.totalorder %s162, 0
    %s165 = sadd.s32 %s164, 1
    %s166 = scalar_select %p163, %s164, %s165
    %p169 = pneg %p163
    %p170 = scmp.eq.s32.totalorder %s13, 1
    %p171 = por %p169, %p170
    %p172 = scmp.ne.s32.totalorder %s164, %s167
    %p173 = scmp.eq.s32.totalorder %s13, 0
    %p174 = por %p172, %p173
    %p175 = scmp.ne.s32.totalorder %s164, %s167
    %p176 = scmp.eq.s32.totalorder %s18, 1
    %p177 = por %p175, %p176
    %p178 = scmp.ne.s32.totalorder %s167, %s168
    %p179 = scmp.eq.s32.totalorder %s18, 0
    %p180 = por %p178, %p179
    %p181 = scmp.ne.s32.totalorder %s167, %s168
    %p182 = scmp.eq.s32.totalorder %s19, 1
    %p183 = por %p181, %p182
    %p185 = scmp.ne.s32.totalorder %s168, %s184
    %p186 = scmp.eq.s32.totalorder %s19, 0
    %p187 = por %p185, %p186
    %p188 = scmp.le.s32.totalorder 1, %s13
    %p189 = scmp.lt.s32.totalorder %s13, 3
    %p190 = pnand %p188, %p189
    %p191 = pneg %p190
    // Predicated region
    $region9: #{conv_block_d_forward.4} parent=5 // pred_check
      _
    $region10: #{conv_block_d_forward.4} parent=5 // pred_check_branch
      %193 = sbr.rel (%p190) target = $region12
    $region11: #{conv_block_d_forward.4} parent=5 // pred_region
      %s194 = ssub.s32 %s13, 1
      // Predicated region
      $region13: #{conv_block_d_forward.4} parent=11 // pred_check
        %p195 = pneg %p60
      $region14: #{conv_block_d_forward.4} parent=11 // pred_check_branch
        %197 = sbr.rel (%p195) target = $region16
      $region15: #{conv_block_d_forward.4} parent=11 // pred_region
        _
      $region16: #{conv_block_d_forward.4} parent=11 // pred_fallthru
        _
      // Predicated region
      $region17: #{conv_block_d_forward.4} parent=11 // pred_check
        %p198 = pneg %p81
      $region18: #{conv_block_d_forward.4} parent=11 // pred_check_branch
        %200 = sbr.rel (%p198) target = $region20
      $region19: #{conv_block_d_forward.4} parent=11 // pred_region
        _
      $region20: #{conv_block_d_forward.4} parent=11 // pred_fallthru
        _
      // Predicated region
      $region21: #{conv_block_d_forward.4} parent=11 // pred_check
        %p201 = pneg %p102
      $region22: #{conv_block_d_forward.4} parent=11 // pred_check_branch
        %203 = sbr.rel (%p201) target = $region24
      $region23: #{conv_block_d_forward.4} parent=11 // pred_region
        _
      $region24: #{conv_block_d_forward.4} parent=11 // pred_fallthru
        _
    $region12: #{conv_block_d_forward.4} parent=5 // pred_fallthru
      _
    %p204 = scmp.lt.s32.totalorder %s13, 2
    // Predicated region
    $region25: #{conv_block_d_forward.4} parent=5 // pred_check
      %p205 = pneg %p204
    $region26: #{conv_block_d_forward.4} parent=5 // pred_check_branch
      %207 = sbr.rel (%p205) target = $region28
    $region27: #{conv_block_d_forward.4} parent=5 // pred_region
      // Predicated region
      $region29: #{conv_block_d_forward.4} parent=27 // pred_check
        %p208 = pneg %p33
      $region30: #{conv_block_d_forward.4} parent=27 // pred_check_branch
        %210 = sbr.rel (%p208) target = $region32
      $region31: #{conv_block_d_forward.4} parent=27 // pred_region
        %p211 = scmp.lt.s32.totalorder %s13, 1
        %s212 = scalar_select %p211, %s13, 1
        %s213 = smul.addr %s212, 2
        %s214 = smul.addr %s213, 8
        %s215 = scalar_lea.vmem %s0, %s214
      $region32: #{conv_block_d_forward.4} parent=27 // pred_fallthru
        _
    $region28: #{conv_block_d_forward.4} parent=5 // pred_fallthru
      _
    %p216 = scmp.le.s32.totalorder 1, %s13
    %p217 = scmp.lt.s32.totalorder %s13, 3
    %p218 = pnand %p216, %p217
    %p219 = pneg %p218
    // Predicated region
    $region33: #{conv_block_d_forward.4} parent=5 // pred_check
      _
    $region34: #{conv_block_d_forward.4} parent=5 // pred_check_branch
      %221 = sbr.rel (%p218) target = $region36
    $region35: #{conv_block_d_forward.4} parent=5 // pred_region
      %s222 = ssub.s32 %s13, 1
      %p223 = scmp.lt.s32.totalorder %s18, 1
      %s224 = scalar_select %p223, %s18, 1
      %s225 = smul.addr %s224, 2
      %s226 = smul.addr %s225, 8
      %s227 = scalar_lea.vmem %s0, %s226
      %p228 = pneg %p39
      %p229 = pneg %p36
      %p230 = pneg %p60
      %p231 = pneg %p57
      %p232 = pneg %p81
      %p233 = pneg %p78
      %p234 = pneg %p102
      %p235 = pneg %p99
      %p236 = pneg %p128
      %p237 = pneg %p125
      %p238 = scmp.lt.s32.totalorder %s18, 1
      %s239 = scalar_select %p238, %s18, 1
      %s240 = smul.addr %s239, 2
      %s241 = smul.addr %s240, 8
      %s242 = scalar_lea.vmem %s4, %s241
      %p243 = pneg %p154
      %p244 = pneg %p151
      %p245 = scmp.lt.s32.totalorder %s18, 1
      %s246 = scalar_select %p245, %s18, 1
      %s247 = smul.addr %s246, 8
      %s248 = scalar_lea.vmem %s5, %s247
      %p249 = pneg %p180
      %p250 = pneg %p177
      %p251 = scmp.lt.s32.totalorder %s18, 1
      %s252 = scalar_select %p251, %s18, 1
      %s253 = smul.addr %s252, 8
      %s254 = scalar_lea.vmem %s6, %s253
      %p255 = scmp.lt.s32.totalorder %s18, 1
      %s256 = scalar_select %p255, %s18, 1
      %s257 = smul.addr %s256, 2
      %s258 = smul.addr %s257, 8
      %s259 = scalar_lea.vmem %s0, %s258
      %p260 = scmp.lt.s32.totalorder %s18, 1
      %s261 = scalar_select %p260, %s18, 1
      %s262 = smul.addr %s261, 2
      %s263 = smul.addr %s262, 8
      %s264 = scalar_lea.vmem %s4, %s263
      %p265 = scmp.lt.s32.totalorder %s18, 1
      %s266 = scalar_select %p265, %s18, 1
      %s267 = smul.addr %s266, 8
      %s268 = scalar_lea.vmem %s5, %s267
      %p269 = scmp.lt.s32.totalorder %s18, 1
      %s270 = scalar_select %p269, %s18, 1
      %s271 = smul.addr %s270, 8
      %s272 = scalar_lea.vmem %s6, %s271
      %v274 = vld [vmem:[%s259] sm:$0xff]
      %v275 = vld [vmem:[%s259 + $0x8] sm:$0xff]
      %v276 = vld [vmem:[%s1] sm:$0xff]
      %278 = vset.pattern.permute.xlu0 0
      %279 = vperm.xlu0 %278, %v276
      %v280 = vpop.permute.xlu0 %279
      %v282 = vmul.f32 %v274, %v280
      %v283 = vmul.f32 %v275, %v280
      %v284 = vld [vmem:[%s2] sm:$0xff]
      %286 = vset.pattern.permute.xlu0 0
      %287 = vperm.xlu0 %286, %v284
      %v288 = vpop.permute.xlu0 %287
      %v290 = vadd.f32 %v282, %v288
      %v291 = vadd.f32 %v283, %v288
      %v292 = vmax.f32 %v290, 0.0
      %v293 = vmax.f32 %v291, 0.0
      %295 = vrot.lane.b32.xlu0 %v292, 112
      %v296 = vpop.permute.xlu0 %295
      %298 = vrot.lane.b32.xlu0 %v292, 96
      %v299 = vpop.permute.xlu0 %298
      %301 = vrot.lane.b32.xlu0 %v292, 80
      %v302 = vpop.permute.xlu0 %301
      %304 = vrot.lane.b32.xlu0 %v292, 64
      %v305 = vpop.permute.xlu0 %304
      %307 = vrot.lane.b32.xlu0 %v292, 48
      %v308 = vpop.permute.xlu0 %307
      %310 = vrot.lane.b32.xlu0 %v292, 32
      %v311 = vpop.permute.xlu0 %310
      %313 = vrot.lane.b32.xlu0 %v292, 16
      %v314 = vpop.permute.xlu0 %313
      %317 = vrot.lane.b32.xlu0 %v293, 112
      %v318 = vpop.permute.xlu0 %317
      %320 = vrot.lane.b32.xlu0 %v293, 96
      %v321 = vpop.permute.xlu0 %320
      %323 = vrot.lane.b32.xlu0 %v293, 80
      %v324 = vpop.permute.xlu0 %323
      %326 = vrot.lane.b32.xlu0 %v293, 64
      %v327 = vpop.permute.xlu0 %326
      %329 = vrot.lane.b32.xlu0 %v293, 48
      %v330 = vpop.permute.xlu0 %329
      %332 = vrot.lane.b32.xlu0 %v293, 32
      %v333 = vpop.permute.xlu0 %332
      %335 = vrot.lane.b32.xlu0 %v293, 16
      %v336 = vpop.permute.xlu0 %335
      %v338 = vcombine.low %v292, %v299
      %v339 = vcombine.high %v292, %v299
      %v341 = vunpack.c.l.s4 1983009808
      %v342 = vunpack.c.0.s8 %v341
      %v343 = vlaneseq
      %v344 = vshrl.u32 %v343, 7
      %v345 = vsub.s32 %v342, %v344
      %v346 = vrot.slane %v338, %v345
      %v348 = vunpack.c.l.s4 1983009808
      %v349 = vunpack.c.0.s8 %v348
      %v350 = vlaneseq
      %v351 = vshrl.u32 %v350, 7
      %v352 = vsub.s32 %v349, %v351
      %v353 = vrot.slane %v339, %v352
      %v354 = vcombine.low %v296, %v302
      %v355 = vcombine.high %v296, %v302
      %v357 = vunpack.c.l.s4 1983009808
      %v358 = vunpack.c.0.s8 %v357
      %v359 = vlaneseq
      %v360 = vshrl.u32 %v359, 7
      %v361 = vsub.s32 %v358, %v360
      %v362 = vrot.slane %v354, %v361
      %v364 = vunpack.c.l.s4 1983009808
      %v365 = vunpack.c.0.s8 %v364
      %v366 = vlaneseq
      %v367 = vshrl.u32 %v366, 7
      %v368 = vsub.s32 %v365, %v367
      %v369 = vrot.slane %v355, %v368
      %v370 = vcombine.low %v305, %v311
      %v371 = vcombine.high %v305, %v311
      %v373 = vunpack.c.l.s4 1983009808
      %v374 = vunpack.c.0.s8 %v373
      %v375 = vlaneseq
      %v376 = vshrl.u32 %v375, 7
      %v377 = vsub.s32 %v374, %v376
      %v378 = vrot.slane %v370, %v377
      %v380 = vunpack.c.l.s4 1983009808
      %v381 = vunpack.c.0.s8 %v380
      %v382 = vlaneseq
      %v383 = vshrl.u32 %v382, 7
      %v384 = vsub.s32 %v381, %v383
      %v385 = vrot.slane %v371, %v384
      %v386 = vcombine.low %v308, %v314
      %v387 = vcombine.high %v308, %v314
      %v389 = vunpack.c.l.s4 1983009808
      %v390 = vunpack.c.0.s8 %v389
      %v391 = vlaneseq
      %v392 = vshrl.u32 %v391, 7
      %v393 = vsub.s32 %v390, %v392
      %v394 = vrot.slane %v386, %v393
      %v396 = vunpack.c.l.s4 1983009808
      %v397 = vunpack.c.0.s8 %v396
      %v398 = vlaneseq
      %v399 = vshrl.u32 %v398, 7
      %v400 = vsub.s32 %v397, %v399
      %v401 = vrot.slane %v387, %v400
      %v402 = vcombine.low %v346, %v362
      %v403 = vcombine.high %v346, %v362
      %v405 = vunpack.c.l.s4 1934713408
      %v406 = vunpack.c.0.s8 %v405
      %v407 = vlaneseq
      %v408 = vshrl.u32 %v407, 7
      %v409 = vsub.s32 %v406, %v408
      %v410 = vrot.slane %v402, %v409
      %v412 = vunpack.c.l.s4 1934713408
      %v413 = vunpack.c.0.s8 %v412
      %v414 = vlaneseq
      %v415 = vshrl.u32 %v414, 7
      %v416 = vsub.s32 %v413, %v415
      %v417 = vrot.slane %v403, %v416
      %v418 = vcombine.low %v353, %v369
      %v419 = vcombine.high %v353, %v369
      %v421 = vunpack.c.l.s4 1934713408
      %v422 = vunpack.c.0.s8 %v421
      %v423 = vlaneseq
      %v424 = vshrl.u32 %v423, 7
      %v425 = vsub.s32 %v422, %v424
      %v426 = vrot.slane %v418, %v425
      %v428 = vunpack.c.l.s4 1934713408
      %v429 = vunpack.c.0.s8 %v428
      %v430 = vlaneseq
      %v431 = vshrl.u32 %v430, 7
      %v432 = vsub.s32 %v429, %v431
      %v433 = vrot.slane %v419, %v432
      %v434 = vcombine.low %v378, %v394
      %v435 = vcombine.high %v378, %v394
      %v437 = vunpack.c.l.s4 1934713408
      %v438 = vunpack.c.0.s8 %v437
      %v439 = vlaneseq
      %v440 = vshrl.u32 %v439, 7
      %v441 = vsub.s32 %v438, %v440
      %v442 = vrot.slane %v434, %v441
      %v444 = vunpack.c.l.s4 1934713408
      %v445 = vunpack.c.0.s8 %v444
      %v446 = vlaneseq
      %v447 = vshrl.u32 %v446, 7
      %v448 = vsub.s32 %v445, %v447
      %v449 = vrot.slane %v435, %v448
      %v450 = vcombine.low %v385, %v401
      %v451 = vcombine.high %v385, %v401
      %v453 = vunpack.c.l.s4 1934713408
      %v454 = vunpack.c.0.s8 %v453
      %v455 = vlaneseq
      %v456 = vshrl.u32 %v455, 7
      %v457 = vsub.s32 %v454, %v456
      %v458 = vrot.slane %v450, %v457
      %v460 = vunpack.c.l.s4 1934713408
      %v461 = vunpack.c.0.s8 %v460
      %v462 = vlaneseq
      %v463 = vshrl.u32 %v462, 7
      %v464 = vsub.s32 %v461, %v463
      %v465 = vrot.slane %v451, %v464
      %v466 = vcombine.low %v410, %v442
      %v467 = vcombine.high %v410, %v442
      %v468 = vcombine.low %v417, %v449
      %v469 = vcombine.high %v417, %v449
      %v470 = vcombine.low %v426, %v458
      %v471 = vcombine.high %v426, %v458
      %v472 = vcombine.low %v433, %v465
      %v473 = vcombine.high %v433, %v465
      %v474 = vcombine.low %v293, %v321
      %v475 = vcombine.high %v293, %v321
      %v477 = vunpack.c.l.s4 1983009808
      %v478 = vunpack.c.0.s8 %v477
      %v479 = vlaneseq
      %v480 = vshrl.u32 %v479, 7
      %v481 = vsub.s32 %v478, %v480
      %v482 = vrot.slane %v474, %v481
      %v484 = vunpack.c.l.s4 1983009808
      %v485 = vunpack.c.0.s8 %v484
      %v486 = vlaneseq
      %v487 = vshrl.u32 %v486, 7
      %v488 = vsub.s32 %v485, %v487
      %v489 = vrot.slane %v475, %v488
      %v490 = vcombine.low %v318, %v324
      %v491 = vcombine.high %v318, %v324
      %v493 = vunpack.c.l.s4 1983009808
      %v494 = vunpack.c.0.s8 %v493
      %v495 = vlaneseq
      %v496 = vshrl.u32 %v495, 7
      %v497 = vsub.s32 %v494, %v496
      %v498 = vrot.slane %v490, %v497
      %v500 = vunpack.c.l.s4 1983009808
      %v501 = vunpack.c.0.s8 %v500
      %v502 = vlaneseq
      %v503 = vshrl.u32 %v502, 7
      %v504 = vsub.s32 %v501, %v503
      %v505 = vrot.slane %v491, %v504
      %v506 = vcombine.low %v327, %v333
      %v507 = vcombine.high %v327, %v333
      %v509 = vunpack.c.l.s4 1983009808
      %v510 = vunpack.c.0.s8 %v509
      %v511 = vlaneseq
      %v512 = vshrl.u32 %v511, 7
      %v513 = vsub.s32 %v510, %v512
      %v514 = vrot.slane %v506, %v513
      %v516 = vunpack.c.l.s4 1983009808
      %v517 = vunpack.c.0.s8 %v516
      %v518 = vlaneseq
      %v519 = vshrl.u32 %v518, 7
      %v520 = vsub.s32 %v517, %v519
      %v521 = vrot.slane %v507, %v520
      %v522 = vcombine.low %v330, %v336
      %v523 = vcombine.high %v330, %v336
      %v525 = vunpack.c.l.s4 1983009808
      %v526 = vunpack.c.0.s8 %v525
      %v527 = vlaneseq
      %v528 = vshrl.u32 %v527, 7
      %v529 = vsub.s32 %v526, %v528
      %v530 = vrot.slane %v522, %v529
      %v532 = vunpack.c.l.s4 1983009808
      %v533 = vunpack.c.0.s8 %v532
      %v534 = vlaneseq
      %v535 = vshrl.u32 %v534, 7
      %v536 = vsub.s32 %v533, %v535
      %v537 = vrot.slane %v523, %v536
      %v538 = vcombine.low %v482, %v498
      %v539 = vcombine.high %v482, %v498
      %v541 = vunpack.c.l.s4 1934713408
      %v542 = vunpack.c.0.s8 %v541
      %v543 = vlaneseq
      %v544 = vshrl.u32 %v543, 7
      %v545 = vsub.s32 %v542, %v544
      %v546 = vrot.slane %v538, %v545
      %v548 = vunpack.c.l.s4 1934713408
      %v549 = vunpack.c.0.s8 %v548
      %v550 = vlaneseq
      %v551 = vshrl.u32 %v550, 7
      %v552 = vsub.s32 %v549, %v551
      %v553 = vrot.slane %v539, %v552
      %v554 = vcombine.low %v489, %v505
      %v555 = vcombine.high %v489, %v505
      %v557 = vunpack.c.l.s4 1934713408
      %v558 = vunpack.c.0.s8 %v557
      %v559 = vlaneseq
      %v560 = vshrl.u32 %v559, 7
      %v561 = vsub.s32 %v558, %v560
      %v562 = vrot.slane %v554, %v561
      %v564 = vunpack.c.l.s4 1934713408
      %v565 = vunpack.c.0.s8 %v564
      %v566 = vlaneseq
      %v567 = vshrl.u32 %v566, 7
      %v568 = vsub.s32 %v565, %v567
      %v569 = vrot.slane %v555, %v568
      %v570 = vcombine.low %v514, %v530
      %v571 = vcombine.high %v514, %v530
      %v573 = vunpack.c.l.s4 1934713408
      %v574 = vunpack.c.0.s8 %v573
      %v575 = vlaneseq
      %v576 = vshrl.u32 %v575, 7
      %v577 = vsub.s32 %v574, %v576
      %v578 = vrot.slane %v570, %v577
      %v580 = vunpack.c.l.s4 1934713408
      %v581 = vunpack.c.0.s8 %v580
      %v582 = vlaneseq
      %v583 = vshrl.u32 %v582, 7
      %v584 = vsub.s32 %v581, %v583
      %v585 = vrot.slane %v571, %v584
      %v586 = vcombine.low %v521, %v537
      %v587 = vcombine.high %v521, %v537
      %v589 = vunpack.c.l.s4 1934713408
      %v590 = vunpack.c.0.s8 %v589
      %v591 = vlaneseq
      %v592 = vshrl.u32 %v591, 7
      %v593 = vsub.s32 %v590, %v592
      %v594 = vrot.slane %v586, %v593
      %v596 = vunpack.c.l.s4 1934713408
      %v597 = vunpack.c.0.s8 %v596
      %v598 = vlaneseq
      %v599 = vshrl.u32 %v598, 7
      %v600 = vsub.s32 %v597, %v599
      %v601 = vrot.slane %v587, %v600
      %v602 = vcombine.low %v546, %v578
      %v603 = vcombine.high %v546, %v578
      %v604 = vcombine.low %v553, %v585
      %v605 = vcombine.high %v553, %v585
      %v606 = vcombine.low %v562, %v594
      %v607 = vcombine.high %v562, %v594
      %v608 = vcombine.low %v569, %v601
      %v609 = vcombine.high %v569, %v601
      %v610 = vld [vmem:[%s3] sm:$0xff]
      %vm627 = vcmask 1040384
      %v628 = vrot.slane %v466, 7
      %v629 = vrot.slane %v602, 7
      %v630 = vsel %vm627, %v628, %v629
      %v631 = vrot.slane %v467, 7
      %v632 = vrot.slane %v603, 7
      %v633 = vsel %vm627, %v631, %v632
      %v634 = vrot.slane %v468, 7
      %v635 = vrot.slane %v604, 7
      %v636 = vsel %vm627, %v634, %v635
      %v637 = vrot.slane %v469, 7
      %v638 = vrot.slane %v605, 7
      %v639 = vsel %vm627, %v637, %v638
      %v640 = vrot.slane %v470, 7
      %v641 = vrot.slane %v606, 7
      %v642 = vsel %vm627, %v640, %v641
      %v643 = vrot.slane %v471, 7
      %v644 = vrot.slane %v607, 7
      %v645 = vsel %vm627, %v643, %v644
      %v646 = vrot.slane %v472, 7
      %v647 = vrot.slane %v608, 7
      %v648 = vsel %vm627, %v646, %v647
      %v649 = vrot.slane %v473, 7
      %v650 = vrot.slane %v609, 7
      %v651 = vsel %vm627, %v649, %v650
      %v668 = vsel %vm627, 0.0, %v628
      %v669 = vsel %vm627, 0.0, %v631
      %v670 = vsel %vm627, 0.0, %v634
      %v671 = vsel %vm627, 0.0, %v637
      %v672 = vsel %vm627, 0.0, %v640
      %v673 = vsel %vm627, 0.0, %v643
      %v674 = vsel %vm627, 0.0, %v646
      %v675 = vsel %vm627, 0.0, %v649
      %v676 = vsel %vm627, %v629, 0.0
      %v677 = vsel %vm627, %v632, 0.0
      %v678 = vsel %vm627, %v635, 0.0
      %v679 = vsel %vm627, %v638, 0.0
      %v680 = vsel %vm627, %v641, 0.0
      %v681 = vsel %vm627, %v644, 0.0
      %v682 = vsel %vm627, %v647, 0.0
      %v683 = vsel %vm627, %v650, 0.0
      %700 = vrot.lane.b32.xlu0 %v668, 1
      %v701 = vpop.permute.xlu0 %700
      %702 = vrot.lane.b32.xlu0 %v630, 1
      %v703 = vpop.permute.xlu0 %702
      %704 = vrot.lane.b32.xlu0 %v676, 1
      %v705 = vpop.permute.xlu0 %704
      %706 = vrot.lane.b32.xlu0 %v669, 1
      %v707 = vpop.permute.xlu0 %706
      %708 = vrot.lane.b32.xlu0 %v633, 1
      %v709 = vpop.permute.xlu0 %708
      %710 = vrot.lane.b32.xlu0 %v677, 1
      %v711 = vpop.permute.xlu0 %710
      %712 = vrot.lane.b32.xlu0 %v670, 1
      %v713 = vpop.permute.xlu0 %712
      %714 = vrot.lane.b32.xlu0 %v636, 1
      %v715 = vpop.permute.xlu0 %714
      %716 = vrot.lane.b32.xlu0 %v678, 1
      %v717 = vpop.permute.xlu0 %716
      %718 = vrot.lane.b32.xlu0 %v671, 1
      %v719 = vpop.permute.xlu0 %718
      %720 = vrot.lane.b32.xlu0 %v639, 1
      %v721 = vpop.permute.xlu0 %720
      %722 = vrot.lane.b32.xlu0 %v679, 1
      %v723 = vpop.permute.xlu0 %722
      %724 = vrot.lane.b32.xlu0 %v672, 1
      %v725 = vpop.permute.xlu0 %724
      %726 = vrot.lane.b32.xlu0 %v642, 1
      %v727 = vpop.permute.xlu0 %726
      %728 = vrot.lane.b32.xlu0 %v680, 1
      %v729 = vpop.permute.xlu0 %728
      %730 = vrot.lane.b32.xlu0 %v673, 1
      %v731 = vpop.permute.xlu0 %730
      %732 = vrot.lane.b32.xlu0 %v645, 1
      %v733 = vpop.permute.xlu0 %732
      %734 = vrot.lane.b32.xlu0 %v681, 1
      %v735 = vpop.permute.xlu0 %734
      %736 = vrot.lane.b32.xlu0 %v674, 1
      %v737 = vpop.permute.xlu0 %736
      %738 = vrot.lane.b32.xlu0 %v648, 1
      %v739 = vpop.permute.xlu0 %738
      %740 = vrot.lane.b32.xlu0 %v682, 1
      %v741 = vpop.permute.xlu0 %740
      %742 = vrot.lane.b32.xlu0 %v675, 1
      %v743 = vpop.permute.xlu0 %742
      %744 = vrot.lane.b32.xlu0 %v651, 1
      %v745 = vpop.permute.xlu0 %744
      %746 = vrot.lane.b32.xlu0 %v683, 1
      %v747 = vpop.permute.xlu0 %746
      %vm772 = vcmask 7168
      %v773 = vsel %vm772, 0.0, %v701
      %v774 = vsel %vm772, 0.0, %v703
      %v775 = vsel %vm772, 0.0, %v705
      %v776 = vsel %vm772, 0.0, %v707
      %v777 = vsel %vm772, 0.0, %v709
      %v778 = vsel %vm772, 0.0, %v711
      %v779 = vsel %vm772, 0.0, %v713
      %v780 = vsel %vm772, 0.0, %v715
      %v781 = vsel %vm772, 0.0, %v717
      %v782 = vsel %vm772, 0.0, %v719
      %v783 = vsel %vm772, 0.0, %v721
      %v784 = vsel %vm772, 0.0, %v723
      %v785 = vsel %vm772, 0.0, %v725
      %v786 = vsel %vm772, 0.0, %v727
      %v787 = vsel %vm772, 0.0, %v729
      %v788 = vsel %vm772, 0.0, %v731
      %v789 = vsel %vm772, 0.0, %v733
      %v790 = vsel %vm772, 0.0, %v735
      %v791 = vsel %vm772, 0.0, %v737
      %v792 = vsel %vm772, 0.0, %v739
      %v793 = vsel %vm772, 0.0, %v741
      %v794 = vsel %vm772, 0.0, %v743
      %v795 = vsel %vm772, 0.0, %v745
      %v796 = vsel %vm772, 0.0, %v747
      %vm797 = vcmask 138240
      %v798 = vsel %vm797, %v773, 0.0
      %v799 = vsel %vm797, %v774, 0.0
      %v800 = vsel %vm797, %v775, 0.0
      %v801 = vsel %vm797, %v776, 0.0
      %v802 = vsel %vm797, %v777, 0.0
      %v803 = vsel %vm797, %v778, 0.0
      %v804 = vsel %vm797, %v779, 0.0
      %v805 = vsel %vm797, %v780, 0.0
      %v806 = vsel %vm797, %v781, 0.0
      %v807 = vsel %vm797, %v782, 0.0
      %v808 = vsel %vm797, %v783, 0.0
      %v809 = vsel %vm797, %v784, 0.0
      %v810 = vsel %vm797, %v785, 0.0
      %v811 = vsel %vm797, %v786, 0.0
      %v812 = vsel %vm797, %v787, 0.0
      %v813 = vsel %vm797, %v788, 0.0
      %v814 = vsel %vm797, %v789, 0.0
      %v815 = vsel %vm797, %v790, 0.0
      %v816 = vsel %vm797, %v791, 0.0
      %v817 = vsel %vm797, %v792, 0.0
      %v818 = vsel %vm797, %v793, 0.0
      %v819 = vsel %vm797, %v794, 0.0
      %v820 = vsel %vm797, %v795, 0.0
      %v821 = vsel %vm797, %v796, 0.0
      %v822 = vcombine.low %v798, %v804
      %v823 = vcombine.high %v798, %v804
      %v825 = vunpack.c.l.s4 1983009808
      %v826 = vunpack.c.0.s8 %v825
      %v827 = vlaneseq
      %v828 = vshrl.u32 %v827, 7
      %v829 = vsub.s32 %v826, %v828
      %v830 = vrot.slane %v822, %v829
      %v832 = vunpack.c.l.s4 1983009808
      %v833 = vunpack.c.0.s8 %v832
      %v834 = vlaneseq
      %v835 = vshrl.u32 %v834, 7
      %v836 = vsub.s32 %v833, %v835
      %v837 = vrot.slane %v823, %v836
      %v838 = vcombine.low %v801, %v807
      %v839 = vcombine.high %v801, %v807
      %v841 = vunpack.c.l.s4 1983009808
      %v842 = vunpack.c.0.s8 %v841
      %v843 = vlaneseq
      %v844 = vshrl.u32 %v843, 7
      %v845 = vsub.s32 %v842, %v844
      %v846 = vrot.slane %v838, %v845
      %v848 = vunpack.c.l.s4 1983009808
      %v849 = vunpack.c.0.s8 %v848
      %v850 = vlaneseq
      %v851 = vshrl.u32 %v850, 7
      %v852 = vsub.s32 %v849, %v851
      %v853 = vrot.slane %v839, %v852
      %v854 = vcombine.low %v810, %v816
      %v855 = vcombine.high %v810, %v816
      %v857 = vunpack.c.l.s4 1983009808
      %v858 = vunpack.c.0.s8 %v857
      %v859 = vlaneseq
      %v860 = vshrl.u32 %v859, 7
      %v861 = vsub.s32 %v858, %v860
      %v862 = vrot.slane %v854, %v861
      %v864 = vunpack.c.l.s4 1983009808
      %v865 = vunpack.c.0.s8 %v864
      %v866 = vlaneseq
      %v867 = vshrl.u32 %v866, 7
      %v868 = vsub.s32 %v865, %v867
      %v869 = vrot.slane %v855, %v868
      %v870 = vcombine.low %v813, %v819
      %v871 = vcombine.high %v813, %v819
      %v873 = vunpack.c.l.s4 1983009808
      %v874 = vunpack.c.0.s8 %v873
      %v875 = vlaneseq
      %v876 = vshrl.u32 %v875, 7
      %v877 = vsub.s32 %v874, %v876
      %v878 = vrot.slane %v870, %v877
      %v880 = vunpack.c.l.s4 1983009808
      %v881 = vunpack.c.0.s8 %v880
      %v882 = vlaneseq
      %v883 = vshrl.u32 %v882, 7
      %v884 = vsub.s32 %v881, %v883
      %v885 = vrot.slane %v871, %v884
      %v886 = vcombine.low %v830, %v846
      %v887 = vcombine.high %v830, %v846
      %v889 = vunpack.c.l.s4 1934713408
      %v890 = vunpack.c.0.s8 %v889
      %v891 = vlaneseq
      %v892 = vshrl.u32 %v891, 7
      %v893 = vsub.s32 %v890, %v892
      %v894 = vrot.slane %v886, %v893
      %v896 = vunpack.c.l.s4 1934713408
      %v897 = vunpack.c.0.s8 %v896
      %v898 = vlaneseq
      %v899 = vshrl.u32 %v898, 7
      %v900 = vsub.s32 %v897, %v899
      %v901 = vrot.slane %v887, %v900
      %v902 = vcombine.low %v837, %v853
      %v903 = vcombine.high %v837, %v853
      %v905 = vunpack.c.l.s4 1934713408
      %v906 = vunpack.c.0.s8 %v905
      %v907 = vlaneseq
      %v908 = vshrl.u32 %v907, 7
      %v909 = vsub.s32 %v906, %v908
      %v910 = vrot.slane %v902, %v909
      %v912 = vunpack.c.l.s4 1934713408
      %v913 = vunpack.c.0.s8 %v912
      %v914 = vlaneseq
      %v915 = vshrl.u32 %v914, 7
      %v916 = vsub.s32 %v913, %v915
      %v917 = vrot.slane %v903, %v916
      %v918 = vcombine.low %v862, %v878
      %v919 = vcombine.high %v862, %v878
      %v921 = vunpack.c.l.s4 1934713408
      %v922 = vunpack.c.0.s8 %v921
      %v923 = vlaneseq
      %v924 = vshrl.u32 %v923, 7
      %v925 = vsub.s32 %v922, %v924
      %v926 = vrot.slane %v918, %v925
      %v928 = vunpack.c.l.s4 1934713408
      %v929 = vunpack.c.0.s8 %v928
      %v930 = vlaneseq
      %v931 = vshrl.u32 %v930, 7
      %v932 = vsub.s32 %v929, %v931
      %v933 = vrot.slane %v919, %v932
      %v934 = vcombine.low %v869, %v885
      %v935 = vcombine.high %v869, %v885
      %v937 = vunpack.c.l.s4 1934713408
      %v938 = vunpack.c.0.s8 %v937
      %v939 = vlaneseq
      %v940 = vshrl.u32 %v939, 7
      %v941 = vsub.s32 %v938, %v940
      %v942 = vrot.slane %v934, %v941
      %v944 = vunpack.c.l.s4 1934713408
      %v945 = vunpack.c.0.s8 %v944
      %v946 = vlaneseq
      %v947 = vshrl.u32 %v946, 7
      %v948 = vsub.s32 %v945, %v947
      %v949 = vrot.slane %v935, %v948
      %v950 = vcombine.low %v894, %v926
      %v951 = vcombine.high %v894, %v926
      %v952 = vcombine.low %v901, %v933
      %v953 = vcombine.high %v901, %v933
      %v954 = vcombine.low %v910, %v942
      %v955 = vcombine.high %v910, %v942
      %v956 = vcombine.low %v917, %v949
      %v957 = vcombine.high %v917, %v949
      %v958 = vcombine.low %v799, %v805
      %v959 = vcombine.high %v799, %v805
      %v961 = vunpack.c.l.s4 1983009808
      %v962 = vunpack.c.0.s8 %v961
      %v963 = vlaneseq
      %v964 = vshrl.u32 %v963, 7
      %v965 = vsub.s32 %v962, %v964
      %v966 = vrot.slane %v958, %v965
      %v968 = vunpack.c.l.s4 1983009808
      %v969 = vunpack.c.0.s8 %v968
      %v970 = vlaneseq
      %v971 = vshrl.u32 %v970, 7
      %v972 = vsub.s32 %v969, %v971
      %v973 = vrot.slane %v959, %v972
      %v974 = vcombine.low %v802, %v808
      %v975 = vcombine.high %v802, %v808
      %v977 = vunpack.c.l.s4 1983009808
      %v978 = vunpack.c.0.s8 %v977
      %v979 = vlaneseq
      %v980 = vshrl.u32 %v979, 7
      %v981 = vsub.s32 %v978, %v980
      %v982 = vrot.slane %v974, %v981
      %v984 = vunpack.c.l.s4 1983009808
      %v985 = vunpack.c.0.s8 %v984
      %v986 = vlaneseq
      %v987 = vshrl.u32 %v986, 7
      %v988 = vsub.s32 %v985, %v987
      %v989 = vrot.slane %v975, %v988
      %v990 = vcombine.low %v811, %v817
      %v991 = vcombine.high %v811, %v817
      %v993 = vunpack.c.l.s4 1983009808
      %v994 = vunpack.c.0.s8 %v993
      %v995 = vlaneseq
      %v996 = vshrl.u32 %v995, 7
      %v997 = vsub.s32 %v994, %v996
      %v998 = vrot.slane %v990, %v997
      %v1000 = vunpack.c.l.s4 1983009808
      %v1001 = vunpack.c.0.s8 %v1000
      %v1002 = vlaneseq
      %v1003 = vshrl.u32 %v1002, 7
      %v1004 = vsub.s32 %v1001, %v1003
      %v1005 = vrot.slane %v991, %v1004
      %v1006 = vcombine.low %v814, %v820
      %v1007 = vcombine.high %v814, %v820
      %v1009 = vunpack.c.l.s4 1983009808
      %v1010 = vunpack.c.0.s8 %v1009
      %v1011 = vlaneseq
      %v1012 = vshrl.u32 %v1011, 7
      %v1013 = vsub.s32 %v1010, %v1012
      %v1014 = vrot.slane %v1006, %v1013
      %v1016 = vunpack.c.l.s4 1983009808
      %v1017 = vunpack.c.0.s8 %v1016
      %v1018 = vlaneseq
      %v1019 = vshrl.u32 %v1018, 7
      %v1020 = vsub.s32 %v1017, %v1019
      %v1021 = vrot.slane %v1007, %v1020
      %v1022 = vcombine.low %v966, %v982
      %v1023 = vcombine.high %v966, %v982
      %v1025 = vunpack.c.l.s4 1934713408
      %v1026 = vunpack.c.0.s8 %v1025
      %v1027 = vlaneseq
      %v1028 = vshrl.u32 %v1027, 7
      %v1029 = vsub.s32 %v1026, %v1028
      %v1030 = vrot.slane %v1022, %v1029
      %v1032 = vunpack.c.l.s4 1934713408
      %v1033 = vunpack.c.0.s8 %v1032
      %v1034 = vlaneseq
      %v1035 = vshrl.u32 %v1034, 7
      %v1036 = vsub.s32 %v1033, %v1035
      %v1037 = vrot.slane %v1023, %v1036
      %v1038 = vcombine.low %v973, %v989
      %v1039 = vcombine.high %v973, %v989
      %v1041 = vunpack.c.l.s4 1934713408
      %v1042 = vunpack.c.0.s8 %v1041
      %v1043 = vlaneseq
      %v1044 = vshrl.u32 %v1043, 7
      %v1045 = vsub.s32 %v1042, %v1044
      %v1046 = vrot.slane %v1038, %v1045
      %v1048 = vunpack.c.l.s4 1934713408
      %v1049 = vunpack.c.0.s8 %v1048
      %v1050 = vlaneseq
      %v1051 = vshrl.u32 %v1050, 7
      %v1052 = vsub.s32 %v1049, %v1051
      %v1053 = vrot.slane %v1039, %v1052
      %v1054 = vcombine.low %v998, %v1014
      %v1055 = vcombine.high %v998, %v1014
      %v1057 = vunpack.c.l.s4 1934713408
      %v1058 = vunpack.c.0.s8 %v1057
      %v1059 = vlaneseq
      %v1060 = vshrl.u32 %v1059, 7
      %v1061 = vsub.s32 %v1058, %v1060
      %v1062 = vrot.slane %v1054, %v1061
      %v1064 = vunpack.c.l.s4 1934713408
      %v1065 = vunpack.c.0.s8 %v1064
      %v1066 = vlaneseq
      %v1067 = vshrl.u32 %v1066, 7
      %v1068 = vsub.s32 %v1065, %v1067
      %v1069 = vrot.slane %v1055, %v1068
      %v1070 = vcombine.low %v1005, %v1021
      %v1071 = vcombine.high %v1005, %v1021
      %v1073 = vunpack.c.l.s4 1934713408
      %v1074 = vunpack.c.0.s8 %v1073
      %v1075 = vlaneseq
      %v1076 = vshrl.u32 %v1075, 7
      %v1077 = vsub.s32 %v1074, %v1076
      %v1078 = vrot.slane %v1070, %v1077
      %v1080 = vunpack.c.l.s4 1934713408
      %v1081 = vunpack.c.0.s8 %v1080
      %v1082 = vlaneseq
      %v1083 = vshrl.u32 %v1082, 7
      %v1084 = vsub.s32 %v1081, %v1083
      %v1085 = vrot.slane %v1071, %v1084
      %v1086 = vcombine.low %v1030, %v1062
      %v1087 = vcombine.high %v1030, %v1062
      %v1088 = vcombine.low %v1037, %v1069
      %v1089 = vcombine.high %v1037, %v1069
      %v1090 = vcombine.low %v1046, %v1078
      %v1091 = vcombine.high %v1046, %v1078
      %v1092 = vcombine.low %v1053, %v1085
      %v1093 = vcombine.high %v1053, %v1085
      %1095 = vrot.lane.b32.xlu0 %v951, 16
      %v1096 = vpop.permute.xlu0 %1095
      %1099 = vrot.lane.b32.xlu0 %v952, 32
      %v1100 = vpop.permute.xlu0 %1099
      %1103 = vrot.lane.b32.xlu0 %v953, 48
      %v1104 = vpop.permute.xlu0 %1103
      %1107 = vrot.lane.b32.xlu0 %v954, 64
      %v1108 = vpop.permute.xlu0 %1107
      %1111 = vrot.lane.b32.xlu0 %v955, 80
      %v1112 = vpop.permute.xlu0 %1111
      %1115 = vrot.lane.b32.xlu0 %v956, 96
      %v1116 = vpop.permute.xlu0 %1115
      %1119 = vrot.lane.b32.xlu0 %v957, 112
      %v1120 = vpop.permute.xlu0 %1119
      %1123 = vrot.lane.b32.xlu0 %v1087, 16
      %v1124 = vpop.permute.xlu0 %1123
      %1127 = vrot.lane.b32.xlu0 %v1088, 32
      %v1128 = vpop.permute.xlu0 %1127
      %1131 = vrot.lane.b32.xlu0 %v1089, 48
      %v1132 = vpop.permute.xlu0 %1131
      %1135 = vrot.lane.b32.xlu0 %v1090, 64
      %v1136 = vpop.permute.xlu0 %1135
      %1139 = vrot.lane.b32.xlu0 %v1091, 80
      %v1140 = vpop.permute.xlu0 %1139
      %1143 = vrot.lane.b32.xlu0 %v1092, 96
      %v1144 = vpop.permute.xlu0 %1143
      %1147 = vrot.lane.b32.xlu0 %v1093, 112
      %v1148 = vpop.permute.xlu0 %1147
      %vm1150 = vcmask 130048
      %v1151 = vsel %vm1150, %v950, %v1096
      %vm1152 = vcmask 261120
      %v1153 = vsel %vm1152, %v1151, %v1100
      %vm1154 = vcmask 392192
      %v1155 = vsel %vm1154, %v1153, %v1104
      %vm1156 = vcmask 523264
      %v1157 = vsel %vm1156, %v1155, %v1108
      %vm1158 = vcmask 654336
      %v1159 = vsel %vm1158, %v1157, %v1112
      %vm1160 = vcmask 785408
      %v1161 = vsel %vm1160, %v1159, %v1116
      %vm1162 = vcmask 916480
      %v1163 = vsel %vm1162, %v1161, %v1120
      %v1164 = vsel %vm1150, %v1086, %v1124
      %v1165 = vsel %vm1152, %v1164, %v1128
      %v1166 = vsel %vm1154, %v1165, %v1132
      %v1167 = vsel %vm1156, %v1166, %v1136
      %v1168 = vsel %vm1158, %v1167, %v1140
      %v1169 = vsel %vm1160, %v1168, %v1144
      %v1170 = vsel %vm1162, %v1169, %v1148
      %1187 = vrot.lane.b32.xlu0 %v798, 127
      %v1188 = vpop.permute.xlu0 %1187
      %1189 = vrot.lane.b32.xlu0 %v799, 127
      %v1190 = vpop.permute.xlu0 %1189
      %1191 = vrot.lane.b32.xlu0 %v801, 127
      %v1192 = vpop.permute.xlu0 %1191
      %1193 = vrot.lane.b32.xlu0 %v802, 127
      %v1194 = vpop.permute.xlu0 %1193
      %1195 = vrot.lane.b32.xlu0 %v804, 127
      %v1196 = vpop.permute.xlu0 %1195
      %1197 = vrot.lane.b32.xlu0 %v805, 127
      %v1198 = vpop.permute.xlu0 %1197
      %1199 = vrot.lane.b32.xlu0 %v807, 127
      %v1200 = vpop.permute.xlu0 %1199
      %1201 = vrot.lane.b32.xlu0 %v808, 127
      %v1202 = vpop.permute.xlu0 %1201
      %1203 = vrot.lane.b32.xlu0 %v810, 127
      %v1204 = vpop.permute.xlu0 %1203
      %1205 = vrot.lane.b32.xlu0 %v811, 127
      %v1206 = vpop.permute.xlu0 %1205
      %1207 = vrot.lane.b32.xlu0 %v813, 127
      %v1208 = vpop.permute.xlu0 %1207
      %1209 = vrot.lane.b32.xlu0 %v814, 127
      %v1210 = vpop.permute.xlu0 %1209
      %1211 = vrot.lane.b32.xlu0 %v816, 127
      %v1212 = vpop.permute.xlu0 %1211
      %1213 = vrot.lane.b32.xlu0 %v817, 127
      %v1214 = vpop.permute.xlu0 %1213
      %1215 = vrot.lane.b32.xlu0 %v819, 127
      %v1216 = vpop.permute.xlu0 %1215
      %1217 = vrot.lane.b32.xlu0 %v820, 127
      %v1218 = vpop.permute.xlu0 %1217
      %v1235 = vcombine.low %v1188, %v1196
      %v1236 = vcombine.high %v1188, %v1196
      %v1238 = vunpack.c.l.s4 1983009808
      %v1239 = vunpack.c.0.s8 %v1238
      %v1240 = vlaneseq
      %v1241 = vshrl.u32 %v1240, 7
      %v1242 = vsub.s32 %v1239, %v1241
      %v1243 = vrot.slane %v1235, %v1242
      %v1245 = vunpack.c.l.s4 1983009808
      %v1246 = vunpack.c.0.s8 %v1245
      %v1247 = vlaneseq
      %v1248 = vshrl.u32 %v1247, 7
      %v1249 = vsub.s32 %v1246, %v1248
      %v1250 = vrot.slane %v1236, %v1249
      %v1251 = vcombine.low %v1192, %v1200
      %v1252 = vcombine.high %v1192, %v1200
      %v1254 = vunpack.c.l.s4 1983009808
      %v1255 = vunpack.c.0.s8 %v1254
      %v1256 = vlaneseq
      %v1257 = vshrl.u32 %v1256, 7
      %v1258 = vsub.s32 %v1255, %v1257
      %v1259 = vrot.slane %v1251, %v1258
      %v1261 = vunpack.c.l.s4 1983009808
      %v1262 = vunpack.c.0.s8 %v1261
      %v1263 = vlaneseq
      %v1264 = vshrl.u32 %v1263, 7
      %v1265 = vsub.s32 %v1262, %v1264
      %v1266 = vrot.slane %v1252, %v1265
      %v1267 = vcombine.low %v1204, %v1212
      %v1268 = vcombine.high %v1204, %v1212
      %v1270 = vunpack.c.l.s4 1983009808
      %v1271 = vunpack.c.0.s8 %v1270
      %v1272 = vlaneseq
      %v1273 = vshrl.u32 %v1272, 7
      %v1274 = vsub.s32 %v1271, %v1273
      %v1275 = vrot.slane %v1267, %v1274
      %v1277 = vunpack.c.l.s4 1983009808
      %v1278 = vunpack.c.0.s8 %v1277
      %v1279 = vlaneseq
      %v1280 = vshrl.u32 %v1279, 7
      %v1281 = vsub.s32 %v1278, %v1280
      %v1282 = vrot.slane %v1268, %v1281
      %v1283 = vcombine.low %v1208, %v1216
      %v1284 = vcombine.high %v1208, %v1216
      %v1286 = vunpack.c.l.s4 1983009808
      %v1287 = vunpack.c.0.s8 %v1286
      %v1288 = vlaneseq
      %v1289 = vshrl.u32 %v1288, 7
      %v1290 = vsub.s32 %v1287, %v1289
      %v1291 = vrot.slane %v1283, %v1290
      %v1293 = vunpack.c.l.s4 1983009808
      %v1294 = vunpack.c.0.s8 %v1293
      %v1295 = vlaneseq
      %v1296 = vshrl.u32 %v1295, 7
      %v1297 = vsub.s32 %v1294, %v1296
      %v1298 = vrot.slane %v1284, %v1297
      %v1299 = vcombine.low %v1243, %v1259
      %v1300 = vcombine.high %v1243, %v1259
      %v1302 = vunpack.c.l.s4 1934713408
      %v1303 = vunpack.c.0.s8 %v1302
      %v1304 = vlaneseq
      %v1305 = vshrl.u32 %v1304, 7
      %v1306 = vsub.s32 %v1303, %v1305
      %v1307 = vrot.slane %v1299, %v1306
      %v1309 = vunpack.c.l.s4 1934713408
      %v1310 = vunpack.c.0.s8 %v1309
      %v1311 = vlaneseq
      %v1312 = vshrl.u32 %v1311, 7
      %v1313 = vsub.s32 %v1310, %v1312
      %v1314 = vrot.slane %v1300, %v1313
      %v1315 = vcombine.low %v1250, %v1266
      %v1316 = vcombine.high %v1250, %v1266
      %v1318 = vunpack.c.l.s4 1934713408
      %v1319 = vunpack.c.0.s8 %v1318
      %v1320 = vlaneseq
      %v1321 = vshrl.u32 %v1320, 7
      %v1322 = vsub.s32 %v1319, %v1321
      %v1323 = vrot.slane %v1315, %v1322
      %v1325 = vunpack.c.l.s4 1934713408
      %v1326 = vunpack.c.0.s8 %v1325
      %v1327 = vlaneseq
      %v1328 = vshrl.u32 %v1327, 7
      %v1329 = vsub.s32 %v1326, %v1328
      %v1330 = vrot.slane %v1316, %v1329
      %v1331 = vcombine.low %v1275, %v1291
      %v1332 = vcombine.high %v1275, %v1291
      %v1334 = vunpack.c.l.s4 1934713408
      %v1335 = vunpack.c.0.s8 %v1334
      %v1336 = vlaneseq
      %v1337 = vshrl.u32 %v1336, 7
      %v1338 = vsub.s32 %v1335, %v1337
      %v1339 = vrot.slane %v1331, %v1338
      %v1341 = vunpack.c.l.s4 1934713408
      %v1342 = vunpack.c.0.s8 %v1341
      %v1343 = vlaneseq
      %v1344 = vshrl.u32 %v1343, 7
      %v1345 = vsub.s32 %v1342, %v1344
      %v1346 = vrot.slane %v1332, %v1345
      %v1347 = vcombine.low %v1282, %v1298
      %v1348 = vcombine.high %v1282, %v1298
      %v1350 = vunpack.c.l.s4 1934713408
      %v1351 = vunpack.c.0.s8 %v1350
      %v1352 = vlaneseq
      %v1353 = vshrl.u32 %v1352, 7
      %v1354 = vsub.s32 %v1351, %v1353
      %v1355 = vrot.slane %v1347, %v1354
      %v1357 = vunpack.c.l.s4 1934713408
      %v1358 = vunpack.c.0.s8 %v1357
      %v1359 = vlaneseq
      %v1360 = vshrl.u32 %v1359, 7
      %v1361 = vsub.s32 %v1358, %v1360
      %v1362 = vrot.slane %v1348, %v1361
      %v1363 = vcombine.low %v1307, %v1339
      %v1364 = vcombine.high %v1307, %v1339
      %v1365 = vcombine.low %v1314, %v1346
      %v1366 = vcombine.high %v1314, %v1346
      %v1367 = vcombine.low %v1323, %v1355
      %v1368 = vcombine.high %v1323, %v1355
      %v1369 = vcombine.low %v1330, %v1362
      %v1370 = vcombine.high %v1330, %v1362
      %v1371 = vcombine.low %v1190, %v1198
      %v1372 = vcombine.high %v1190, %v1198
      %v1374 = vunpack.c.l.s4 1983009808
      %v1375 = vunpack.c.0.s8 %v1374
      %v1376 = vlaneseq
      %v1377 = vshrl.u32 %v1376, 7
      %v1378 = vsub.s32 %v1375, %v1377
      %v1379 = vrot.slane %v1371, %v1378
      %v1381 = vunpack.c.l.s4 1983009808
      %v1382 = vunpack.c.0.s8 %v1381
      %v1383 = vlaneseq
      %v1384 = vshrl.u32 %v1383, 7
      %v1385 = vsub.s32 %v1382, %v1384
      %v1386 = vrot.slane %v1372, %v1385
      %v1387 = vcombine.low %v1194, %v1202
      %v1388 = vcombine.high %v1194, %v1202
      %v1390 = vunpack.c.l.s4 1983009808
      %v1391 = vunpack.c.0.s8 %v1390
      %v1392 = vlaneseq
      %v1393 = vshrl.u32 %v1392, 7
      %v1394 = vsub.s32 %v1391, %v1393
      %v1395 = vrot.slane %v1387, %v1394
      %v1397 = vunpack.c.l.s4 1983009808
      %v1398 = vunpack.c.0.s8 %v1397
      %v1399 = vlaneseq
      %v1400 = vshrl.u32 %v1399, 7
      %v1401 = vsub.s32 %v1398, %v1400
      %v1402 = vrot.slane %v1388, %v1401
      %v1403 = vcombine.low %v1206, %v1214
      %v1404 = vcombine.high %v1206, %v1214
      %v1406 = vunpack.c.l.s4 1983009808
      %v1407 = vunpack.c.0.s8 %v1406
      %v1408 = vlaneseq
      %v1409 = vshrl.u32 %v1408, 7
      %v1410 = vsub.s32 %v1407, %v1409
      %v1411 = vrot.slane %v1403, %v1410
      %v1413 = vunpack.c.l.s4 1983009808
      %v1414 = vunpack.c.0.s8 %v1413
      %v1415 = vlaneseq
      %v1416 = vshrl.u32 %v1415, 7
      %v1417 = vsub.s32 %v1414, %v1416
      %v1418 = vrot.slane %v1404, %v1417
      %v1419 = vcombine.low %v1210, %v1218
      %v1420 = vcombine.high %v1210, %v1218
      %v1422 = vunpack.c.l.s4 1983009808
      %v1423 = vunpack.c.0.s8 %v1422
      %v1424 = vlaneseq
      %v1425 = vshrl.u32 %v1424, 7
      %v1426 = vsub.s32 %v1423, %v1425
      %v1427 = vrot.slane %v1419, %v1426
      %v1429 = vunpack.c.l.s4 1983009808
      %v1430 = vunpack.c.0.s8 %v1429
      %v1431 = vlaneseq
      %v1432 = vshrl.u32 %v1431, 7
      %v1433 = vsub.s32 %v1430, %v1432
      %v1434 = vrot.slane %v1420, %v1433
      %v1435 = vcombine.low %v1379, %v1395
      %v1436 = vcombine.high %v1379, %v1395
      %v1438 = vunpack.c.l.s4 1934713408
      %v1439 = vunpack.c.0.s8 %v1438
      %v1440 = vlaneseq
      %v1441 = vshrl.u32 %v1440, 7
      %v1442 = vsub.s32 %v1439, %v1441
      %v1443 = vrot.slane %v1435, %v1442
      %v1445 = vunpack.c.l.s4 1934713408
      %v1446 = vunpack.c.0.s8 %v1445
      %v1447 = vlaneseq
      %v1448 = vshrl.u32 %v1447, 7
      %v1449 = vsub.s32 %v1446, %v1448
      %v1450 = vrot.slane %v1436, %v1449
      %v1451 = vcombine.low %v1386, %v1402
      %v1452 = vcombine.high %v1386, %v1402
      %v1454 = vunpack.c.l.s4 1934713408
      %v1455 = vunpack.c.0.s8 %v1454
      %v1456 = vlaneseq
      %v1457 = vshrl.u32 %v1456, 7
      %v1458 = vsub.s32 %v1455, %v1457
      %v1459 = vrot.slane %v1451, %v1458
      %v1461 = vunpack.c.l.s4 1934713408
      %v1462 = vunpack.c.0.s8 %v1461
      %v1463 = vlaneseq
      %v1464 = vshrl.u32 %v1463, 7
      %v1465 = vsub.s32 %v1462, %v1464
      %v1466 = vrot.slane %v1452, %v1465
      %v1467 = vcombine.low %v1411, %v1427
      %v1468 = vcombine.high %v1411, %v1427
      %v1470 = vunpack.c.l.s4 1934713408
      %v1471 = vunpack.c.0.s8 %v1470
      %v1472 = vlaneseq
      %v1473 = vshrl.u32 %v1472, 7
      %v1474 = vsub.s32 %v1471, %v1473
      %v1475 = vrot.slane %v1467, %v1474
      %v1477 = vunpack.c.l.s4 1934713408
      %v1478 = vunpack.c.0.s8 %v1477
      %v1479 = vlaneseq
      %v1480 = vshrl.u32 %v1479, 7
      %v1481 = vsub.s32 %v1478, %v1480
      %v1482 = vrot.slane %v1468, %v1481
      %v1483 = vcombine.low %v1418, %v1434
      %v1484 = vcombine.high %v1418, %v1434
      %v1486 = vunpack.c.l.s4 1934713408
      %v1487 = vunpack.c.0.s8 %v1486
      %v1488 = vlaneseq
      %v1489 = vshrl.u32 %v1488, 7
      %v1490 = vsub.s32 %v1487, %v1489
      %v1491 = vrot.slane %v1483, %v1490
      %v1493 = vunpack.c.l.s4 1934713408
      %v1494 = vunpack.c.0.s8 %v1493
      %v1495 = vlaneseq
      %v1496 = vshrl.u32 %v1495, 7
      %v1497 = vsub.s32 %v1494, %v1496
      %v1498 = vrot.slane %v1484, %v1497
      %v1499 = vcombine.low %v1443, %v1475
      %v1500 = vcombine.high %v1443, %v1475
      %v1501 = vcombine.low %v1450, %v1482
      %v1502 = vcombine.high %v1450, %v1482
      %v1503 = vcombine.low %v1459, %v1491
      %v1504 = vcombine.high %v1459, %v1491
      %v1505 = vcombine.low %v1466, %v1498
      %v1506 = vcombine.high %v1466, %v1498
      %1508 = vrot.lane.b32.xlu0 %v1364, 16
      %v1509 = vpop.permute.xlu0 %1508
      %1512 = vrot.lane.b32.xlu0 %v1365, 32
      %v1513 = vpop.permute.xlu0 %1512
      %1516 = vrot.lane.b32.xlu0 %v1366, 48
      %v1517 = vpop.permute.xlu0 %1516
      %1520 = vrot.lane.b32.xlu0 %v1367, 64
      %v1521 = vpop.permute.xlu0 %1520
      %1524 = vrot.lane.b32.xlu0 %v1368, 80
      %v1525 = vpop.permute.xlu0 %1524
      %1528 = vrot.lane.b32.xlu0 %v1369, 96
      %v1529 = vpop.permute.xlu0 %1528
      %1532 = vrot.lane.b32.xlu0 %v1370, 112
      %v1533 = vpop.permute.xlu0 %1532
      %1536 = vrot.lane.b32.xlu0 %v1500, 16
      %v1537 = vpop.permute.xlu0 %1536
      %1540 = vrot.lane.b32.xlu0 %v1501, 32
      %v1541 = vpop.permute.xlu0 %1540
      %1544 = vrot.lane.b32.xlu0 %v1502, 48
      %v1545 = vpop.permute.xlu0 %1544
      %1548 = vrot.lane.b32.xlu0 %v1503, 64
      %v1549 = vpop.permute.xlu0 %1548
      %1552 = vrot.lane.b32.xlu0 %v1504, 80
      %v1553 = vpop.permute.xlu0 %1552
      %1556 = vrot.lane.b32.xlu0 %v1505, 96
      %v1557 = vpop.permute.xlu0 %1556
      %1560 = vrot.lane.b32.xlu0 %v1506, 112
      %v1561 = vpop.permute.xlu0 %1560
      %v1563 = vsel %vm1150, %v1363, %v1509
      %v1564 = vsel %vm1152, %v1563, %v1513
      %v1565 = vsel %vm1154, %v1564, %v1517
      %v1566 = vsel %vm1156, %v1565, %v1521
      %v1567 = vsel %vm1158, %v1566, %v1525
      %v1568 = vsel %vm1160, %v1567, %v1529
      %v1569 = vsel %vm1162, %v1568, %v1533
      %v1570 = vsel %vm1150, %v1499, %v1537
      %v1571 = vsel %vm1152, %v1570, %v1541
      %v1572 = vsel %vm1154, %v1571, %v1545
      %v1573 = vsel %vm1156, %v1572, %v1549
      %v1574 = vsel %vm1158, %v1573, %v1553
      %v1575 = vsel %vm1160, %v1574, %v1557
      %v1576 = vsel %vm1162, %v1575, %v1561
      %1577 = vrot.lane.b32.xlu0 %v798, 126
      %v1578 = vpop.permute.xlu0 %1577
      %1579 = vrot.lane.b32.xlu0 %v799, 126
      %v1580 = vpop.permute.xlu0 %1579
      %1581 = vrot.lane.b32.xlu0 %v801, 126
      %v1582 = vpop.permute.xlu0 %1581
      %1583 = vrot.lane.b32.xlu0 %v802, 126
      %v1584 = vpop.permute.xlu0 %1583
      %1585 = vrot.lane.b32.xlu0 %v804, 126
      %v1586 = vpop.permute.xlu0 %1585
      %1587 = vrot.lane.b32.xlu0 %v805, 126
      %v1588 = vpop.permute.xlu0 %1587
      %1589 = vrot.lane.b32.xlu0 %v807, 126
      %v1590 = vpop.permute.xlu0 %1589
      %1591 = vrot.lane.b32.xlu0 %v808, 126
      %v1592 = vpop.permute.xlu0 %1591
      %1593 = vrot.lane.b32.xlu0 %v810, 126
      %v1594 = vpop.permute.xlu0 %1593
      %1595 = vrot.lane.b32.xlu0 %v811, 126
      %v1596 = vpop.permute.xlu0 %1595
      %1597 = vrot.lane.b32.xlu0 %v813, 126
      %v1598 = vpop.permute.xlu0 %1597
      %1599 = vrot.lane.b32.xlu0 %v814, 126
      %v1600 = vpop.permute.xlu0 %1599
      %1601 = vrot.lane.b32.xlu0 %v816, 126
      %v1602 = vpop.permute.xlu0 %1601
      %1603 = vrot.lane.b32.xlu0 %v817, 126
      %v1604 = vpop.permute.xlu0 %1603
      %1605 = vrot.lane.b32.xlu0 %v819, 126
      %v1606 = vpop.permute.xlu0 %1605
      %1607 = vrot.lane.b32.xlu0 %v820, 126
      %v1608 = vpop.permute.xlu0 %1607
      %v1625 = vcombine.low %v1578, %v1586
      %v1626 = vcombine.high %v1578, %v1586
      %v1628 = vunpack.c.l.s4 1983009808
      %v1629 = vunpack.c.0.s8 %v1628
      %v1630 = vlaneseq
      %v1631 = vshrl.u32 %v1630, 7
      %v1632 = vsub.s32 %v1629, %v1631
      %v1633 = vrot.slane %v1625, %v1632
      %v1635 = vunpack.c.l.s4 1983009808
      %v1636 = vunpack.c.0.s8 %v1635
      %v1637 = vlaneseq
      %v1638 = vshrl.u32 %v1637, 7
      %v1639 = vsub.s32 %v1636, %v1638
      %v1640 = vrot.slane %v1626, %v1639
      %v1641 = vcombine.low %v1582, %v1590
      %v1642 = vcombine.high %v1582, %v1590
      %v1644 = vunpack.c.l.s4 1983009808
      %v1645 = vunpack.c.0.s8 %v1644
      %v1646 = vlaneseq
      %v1647 = vshrl.u32 %v1646, 7
      %v1648 = vsub.s32 %v1645, %v1647
      %v1649 = vrot.slane %v1641, %v1648
      %v1651 = vunpack.c.l.s4 1983009808
      %v1652 = vunpack.c.0.s8 %v1651
      %v1653 = vlaneseq
      %v1654 = vshrl.u32 %v1653, 7
      %v1655 = vsub.s32 %v1652, %v1654
      %v1656 = vrot.slane %v1642, %v1655
      %v1657 = vcombine.low %v1594, %v1602
      %v1658 = vcombine.high %v1594, %v1602
      %v1660 = vunpack.c.l.s4 1983009808
      %v1661 = vunpack.c.0.s8 %v1660
      %v1662 = vlaneseq
      %v1663 = vshrl.u32 %v1662, 7
      %v1664 = vsub.s32 %v1661, %v1663
      %v1665 = vrot.slane %v1657, %v1664
      %v1667 = vunpack.c.l.s4 1983009808
      %v1668 = vunpack.c.0.s8 %v1667
      %v1669 = vlaneseq
      %v1670 = vshrl.u32 %v1669, 7
      %v1671 = vsub.s32 %v1668, %v1670
      %v1672 = vrot.slane %v1658, %v1671
      %v1673 = vcombine.low %v1598, %v1606
      %v1674 = vcombine.high %v1598, %v1606
      %v1676 = vunpack.c.l.s4 1983009808
      %v1677 = vunpack.c.0.s8 %v1676
      %v1678 = vlaneseq
      %v1679 = vshrl.u32 %v1678, 7
      %v1680 = vsub.s32 %v1677, %v1679
      %v1681 = vrot.slane %v1673, %v1680
      %v1683 = vunpack.c.l.s4 1983009808
      %v1684 = vunpack.c.0.s8 %v1683
      %v1685 = vlaneseq
      %v1686 = vshrl.u32 %v1685, 7
      %v1687 = vsub.s32 %v1684, %v1686
      %v1688 = vrot.slane %v1674, %v1687
      %v1689 = vcombine.low %v1633, %v1649
      %v1690 = vcombine.high %v1633, %v1649
      %v1692 = vunpack.c.l.s4 1934713408
      %v1693 = vunpack.c.0.s8 %v1692
      %v1694 = vlaneseq
      %v1695 = vshrl.u32 %v1694, 7
      %v1696 = vsub.s32 %v1693, %v1695
      %v1697 = vrot.slane %v1689, %v1696
      %v1699 = vunpack.c.l.s4 1934713408
      %v1700 = vunpack.c.0.s8 %v1699
      %v1701 = vlaneseq
      %v1702 = vshrl.u32 %v1701, 7
      %v1703 = vsub.s32 %v1700, %v1702
      %v1704 = vrot.slane %v1690, %v1703
      %v1705 = vcombine.low %v1640, %v1656
      %v1706 = vcombine.high %v1640, %v1656
      %v1708 = vunpack.c.l.s4 1934713408
      %v1709 = vunpack.c.0.s8 %v1708
      %v1710 = vlaneseq
      %v1711 = vshrl.u32 %v1710, 7
      %v1712 = vsub.s32 %v1709, %v1711
      %v1713 = vrot.slane %v1705, %v1712
      %v1715 = vunpack.c.l.s4 1934713408
      %v1716 = vunpack.c.0.s8 %v1715
      %v1717 = vlaneseq
      %v1718 = vshrl.u32 %v1717, 7
      %v1719 = vsub.s32 %v1716, %v1718
      %v1720 = vrot.slane %v1706, %v1719
      %v1721 = vcombine.low %v1665, %v1681
      %v1722 = vcombine.high %v1665, %v1681
      %v1724 = vunpack.c.l.s4 1934713408
      %v1725 = vunpack.c.0.s8 %v1724
      %v1726 = vlaneseq
      %v1727 = vshrl.u32 %v1726, 7
      %v1728 = vsub.s32 %v1725, %v1727
      %v1729 = vrot.slane %v1721, %v1728
      %v1731 = vunpack.c.l.s4 1934713408
      %v1732 = vunpack.c.0.s8 %v1731
      %v1733 = vlaneseq
      %v1734 = vshrl.u32 %v1733, 7
      %v1735 = vsub.s32 %v1732, %v1734
      %v1736 = vrot.slane %v1722, %v1735
      %v1737 = vcombine.low %v1672, %v1688
      %v1738 = vcombine.high %v1672, %v1688
      %v1740 = vunpack.c.l.s4 1934713408
      %v1741 = vunpack.c.0.s8 %v1740
      %v1742 = vlaneseq
      %v1743 = vshrl.u32 %v1742, 7
      %v1744 = vsub.s32 %v1741, %v1743
      %v1745 = vrot.slane %v1737, %v1744
      %v1747 = vunpack.c.l.s4 1934713408
      %v1748 = vunpack.c.0.s8 %v1747
      %v1749 = vlaneseq
      %v1750 = vshrl.u32 %v1749, 7
      %v1751 = vsub.s32 %v1748, %v1750
      %v1752 = vrot.slane %v1738, %v1751
      %v1753 = vcombine.low %v1697, %v1729
      %v1754 = vcombine.high %v1697, %v1729
      %v1755 = vcombine.low %v1704, %v1736
      %v1756 = vcombine.high %v1704, %v1736
      %v1757 = vcombine.low %v1713, %v1745
      %v1758 = vcombine.high %v1713, %v1745
      %v1759 = vcombine.low %v1720, %v1752
      %v1760 = vcombine.high %v1720, %v1752
      %v1761 = vcombine.low %v1580, %v1588
      %v1762 = vcombine.high %v1580, %v1588
      %v1764 = vunpack.c.l.s4 1983009808
      %v1765 = vunpack.c.0.s8 %v1764
      %v1766 = vlaneseq
      %v1767 = vshrl.u32 %v1766, 7
      %v1768 = vsub.s32 %v1765, %v1767
      %v1769 = vrot.slane %v1761, %v1768
      %v1771 = vunpack.c.l.s4 1983009808
      %v1772 = vunpack.c.0.s8 %v1771
      %v1773 = vlaneseq
      %v1774 = vshrl.u32 %v1773, 7
      %v1775 = vsub.s32 %v1772, %v1774
      %v1776 = vrot.slane %v1762, %v1775
      %v1777 = vcombine.low %v1584, %v1592
      %v1778 = vcombine.high %v1584, %v1592
      %v1780 = vunpack.c.l.s4 1983009808
      %v1781 = vunpack.c.0.s8 %v1780
      %v1782 = vlaneseq
      %v1783 = vshrl.u32 %v1782, 7
      %v1784 = vsub.s32 %v1781, %v1783
      %v1785 = vrot.slane %v1777, %v1784
      %v1787 = vunpack.c.l.s4 1983009808
      %v1788 = vunpack.c.0.s8 %v1787
      %v1789 = vlaneseq
      %v1790 = vshrl.u32 %v1789, 7
      %v1791 = vsub.s32 %v1788, %v1790
      %v1792 = vrot.slane %v1778, %v1791
      %v1793 = vcombine.low %v1596, %v1604
      %v1794 = vcombine.high %v1596, %v1604
      %v1796 = vunpack.c.l.s4 1983009808
      %v1797 = vunpack.c.0.s8 %v1796
      %v1798 = vlaneseq
      %v1799 = vshrl.u32 %v1798, 7
      %v1800 = vsub.s32 %v1797, %v1799
      %v1801 = vrot.slane %v1793, %v1800
      %v1803 = vunpack.c.l.s4 1983009808
      %v1804 = vunpack.c.0.s8 %v1803
      %v1805 = vlaneseq
      %v1806 = vshrl.u32 %v1805, 7
      %v1807 = vsub.s32 %v1804, %v1806
      %v1808 = vrot.slane %v1794, %v1807
      %v1809 = vcombine.low %v1600, %v1608
      %v1810 = vcombine.high %v1600, %v1608
      %v1812 = vunpack.c.l.s4 1983009808
      %v1813 = vunpack.c.0.s8 %v1812
      %v1814 = vlaneseq
      %v1815 = vshrl.u32 %v1814, 7
      %v1816 = vsub.s32 %v1813, %v1815
      %v1817 = vrot.slane %v1809, %v1816
      %v1819 = vunpack.c.l.s4 1983009808
      %v1820 = vunpack.c.0.s8 %v1819
      %v1821 = vlaneseq
      %v1822 = vshrl.u32 %v1821, 7
      %v1823 = vsub.s32 %v1820, %v1822
      %v1824 = vrot.slane %v1810, %v1823
      %v1825 = vcombine.low %v1769, %v1785
      %v1826 = vcombine.high %v1769, %v1785
      %v1828 = vunpack.c.l.s4 1934713408
      %v1829 = vunpack.c.0.s8 %v1828
      %v1830 = vlaneseq
      %v1831 = vshrl.u32 %v1830, 7
      %v1832 = vsub.s32 %v1829, %v1831
      %v1833 = vrot.slane %v1825, %v1832
      %v1835 = vunpack.c.l.s4 1934713408
      %v1836 = vunpack.c.0.s8 %v1835
      %v1837 = vlaneseq
      %v1838 = vshrl.u32 %v1837, 7
      %v1839 = vsub.s32 %v1836, %v1838
      %v1840 = vrot.slane %v1826, %v1839
      %v1841 = vcombine.low %v1776, %v1792
      %v1842 = vcombine.high %v1776, %v1792
      %v1844 = vunpack.c.l.s4 1934713408
      %v1845 = vunpack.c.0.s8 %v1844
      %v1846 = vlaneseq
      %v1847 = vshrl.u32 %v1846, 7
      %v1848 = vsub.s32 %v1845, %v1847
      %v1849 = vrot.slane %v1841, %v1848
      %v1851 = vunpack.c.l.s4 1934713408
      %v1852 = vunpack.c.0.s8 %v1851
      %v1853 = vlaneseq
      %v1854 = vshrl.u32 %v1853, 7
      %v1855 = vsub.s32 %v1852, %v1854
      %v1856 = vrot.slane %v1842, %v1855
      %v1857 = vcombine.low %v1801, %v1817
      %v1858 = vcombine.high %v1801, %v1817
      %v1860 = vunpack.c.l.s4 1934713408
      %v1861 = vunpack.c.0.s8 %v1860
      %v1862 = vlaneseq
      %v1863 = vshrl.u32 %v1862, 7
      %v1864 = vsub.s32 %v1861, %v1863
      %v1865 = vrot.slane %v1857, %v1864
      %v1867 = vunpack.c.l.s4 1934713408
      %v1868 = vunpack.c.0.s8 %v1867
      %v1869 = vlaneseq
      %v1870 = vshrl.u32 %v1869, 7
      %v1871 = vsub.s32 %v1868, %v1870
      %v1872 = vrot.slane %v1858, %v1871
      %v1873 = vcombine.low %v1808, %v1824
      %v1874 = vcombine.high %v1808, %v1824
      %v1876 = vunpack.c.l.s4 1934713408
      %v1877 = vunpack.c.0.s8 %v1876
      %v1878 = vlaneseq
      %v1879 = vshrl.u32 %v1878, 7
      %v1880 = vsub.s32 %v1877, %v1879
      %v1881 = vrot.slane %v1873, %v1880
      %v1883 = vunpack.c.l.s4 1934713408
      %v1884 = vunpack.c.0.s8 %v1883
      %v1885 = vlaneseq
      %v1886 = vshrl.u32 %v1885, 7
      %v1887 = vsub.s32 %v1884, %v1886
      %v1888 = vrot.slane %v1874, %v1887
      %v1889 = vcombine.low %v1833, %v1865
      %v1890 = vcombine.high %v1833, %v1865
      %v1891 = vcombine.low %v1840, %v1872
      %v1892 = vcombine.high %v1840, %v1872
      %v1893 = vcombine.low %v1849, %v1881
      %v1894 = vcombine.high %v1849, %v1881
      %v1895 = vcombine.low %v1856, %v1888
      %v1896 = vcombine.high %v1856, %v1888
      %1898 = vrot.lane.b32.xlu0 %v1754, 16
      %v1899 = vpop.permute.xlu0 %1898
      %1902 = vrot.lane.b32.xlu0 %v1755, 32
      %v1903 = vpop.permute.xlu0 %1902
      %1906 = vrot.lane.b32.xlu0 %v1756, 48
      %v1907 = vpop.permute.xlu0 %1906
      %1910 = vrot.lane.b32.xlu0 %v1757, 64
      %v1911 = vpop.permute.xlu0 %1910
      %1914 = vrot.lane.b32.xlu0 %v1758, 80
      %v1915 = vpop.permute.xlu0 %1914
      %1918 = vrot.lane.b32.xlu0 %v1759, 96
      %v1919 = vpop.permute.xlu0 %1918
      %1922 = vrot.lane.b32.xlu0 %v1760, 112
      %v1923 = vpop.permute.xlu0 %1922
      %1926 = vrot.lane.b32.xlu0 %v1890, 16
      %v1927 = vpop.permute.xlu0 %1926
      %1930 = vrot.lane.b32.xlu0 %v1891, 32
      %v1931 = vpop.permute.xlu0 %1930
      %1934 = vrot.lane.b32.xlu0 %v1892, 48
      %v1935 = vpop.permute.xlu0 %1934
      %1938 = vrot.lane.b32.xlu0 %v1893, 64
      %v1939 = vpop.permute.xlu0 %1938
      %1942 = vrot.lane.b32.xlu0 %v1894, 80
      %v1943 = vpop.permute.xlu0 %1942
      %1946 = vrot.lane.b32.xlu0 %v1895, 96
      %v1947 = vpop.permute.xlu0 %1946
      %1950 = vrot.lane.b32.xlu0 %v1896, 112
      %v1951 = vpop.permute.xlu0 %1950
      %v1953 = vsel %vm1150, %v1753, %v1899
      %v1954 = vsel %vm1152, %v1953, %v1903
      %v1955 = vsel %vm1154, %v1954, %v1907
      %v1956 = vsel %vm1156, %v1955, %v1911
      %v1957 = vsel %vm1158, %v1956, %v1915
      %v1958 = vsel %vm1160, %v1957, %v1919
      %v1959 = vsel %vm1162, %v1958, %v1923
      %v1960 = vsel %vm1150, %v1889, %v1927
      %v1961 = vsel %vm1152, %v1960, %v1931
      %v1962 = vsel %vm1154, %v1961, %v1935
      %v1963 = vsel %vm1156, %v1962, %v1939
      %v1964 = vsel %vm1158, %v1963, %v1943
      %v1965 = vsel %vm1160, %v1964, %v1947
      %v1966 = vsel %vm1162, %v1965, %v1951
      %vm1975 = vcmask 1046528
      %v1976 = vrot.slane %v798, 1
      %v1977 = vrot.slane %v799, 1
      %v1978 = vsel %vm1975, %v1976, %v1977
      %v1979 = vrot.slane %v800, 1
      %v1980 = vsel %vm1975, %v1977, %v1979
      %v1981 = vrot.slane %v801, 1
      %v1982 = vrot.slane %v802, 1
      %v1983 = vsel %vm1975, %v1981, %v1982
      %v1984 = vrot.slane %v803, 1
      %v1985 = vsel %vm1975, %v1982, %v1984
      %v1986 = vrot.slane %v804, 1
      %v1987 = vrot.slane %v805, 1
      %v1988 = vsel %vm1975, %v1986, %v1987
      %v1989 = vrot.slane %v806, 1
      %v1990 = vsel %vm1975, %v1987, %v1989
      %v1991 = vrot.slane %v807, 1
      %v1992 = vrot.slane %v808, 1
      %v1993 = vsel %vm1975, %v1991, %v1992
      %v1994 = vrot.slane %v809, 1
      %v1995 = vsel %vm1975, %v1992, %v1994
      %v1996 = vrot.slane %v810, 1
      %v1997 = vrot.slane %v811, 1
      %v1998 = vsel %vm1975, %v1996, %v1997
      %v1999 = vrot.slane %v812, 1
      %v2000 = vsel %vm1975, %v1997, %v1999
      %v2001 = vrot.slane %v813, 1
      %v2002 = vrot.slane %v814, 1
      %v2003 = vsel %vm1975, %v2001, %v2002
      %v2004 = vrot.slane %v815, 1
      %v2005 = vsel %vm1975, %v2002, %v2004
      %v2006 = vrot.slane %v816, 1
      %v2007 = vrot.slane %v817, 1
      %v2008 = vsel %vm1975, %v2006, %v2007
      %v2009 = vrot.slane %v818, 1
      %v2010 = vsel %vm1975, %v2007, %v2009
      %v2011 = vrot.slane %v819, 1
      %v2012 = vrot.slane %v820, 1
      %v2013 = vsel %vm1975, %v2011, %v2012
      %v2014 = vrot.slane %v821, 1
      %v2015 = vsel %vm1975, %v2012, %v2014
      %v2032 = vcombine.low %v1978, %v1988
      %v2033 = vcombine.high %v1978, %v1988
      %v2035 = vunpack.c.l.s4 1983009808
      %v2036 = vunpack.c.0.s8 %v2035
      %v2037 = vlaneseq
      %v2038 = vshrl.u32 %v2037, 7
      %v2039 = vsub.s32 %v2036, %v2038
      %v2040 = vrot.slane %v2032, %v2039
      %v2042 = vunpack.c.l.s4 1983009808
      %v2043 = vunpack.c.0.s8 %v2042
      %v2044 = vlaneseq
      %v2045 = vshrl.u32 %v2044, 7
      %v2046 = vsub.s32 %v2043, %v2045
      %v2047 = vrot.slane %v2033, %v2046
      %v2048 = vcombine.low %v1983, %v1993
      %v2049 = vcombine.high %v1983, %v1993
      %v2051 = vunpack.c.l.s4 1983009808
      %v2052 = vunpack.c.0.s8 %v2051
      %v2053 = vlaneseq
      %v2054 = vshrl.u32 %v2053, 7
      %v2055 = vsub.s32 %v2052, %v2054
      %v2056 = vrot.slane %v2048, %v2055
      %v2058 = vunpack.c.l.s4 1983009808
      %v2059 = vunpack.c.0.s8 %v2058
      %v2060 = vlaneseq
      %v2061 = vshrl.u32 %v2060, 7
      %v2062 = vsub.s32 %v2059, %v2061
      %v2063 = vrot.slane %v2049, %v2062
      %v2064 = vcombine.low %v1998, %v2008
      %v2065 = vcombine.high %v1998, %v2008
      %v2067 = vunpack.c.l.s4 1983009808
      %v2068 = vunpack.c.0.s8 %v2067
      %v2069 = vlaneseq
      %v2070 = vshrl.u32 %v2069, 7
      %v2071 = vsub.s32 %v2068, %v2070
      %v2072 = vrot.slane %v2064, %v2071
      %v2074 = vunpack.c.l.s4 1983009808
      %v2075 = vunpack.c.0.s8 %v2074
      %v2076 = vlaneseq
      %v2077 = vshrl.u32 %v2076, 7
      %v2078 = vsub.s32 %v2075, %v2077
      %v2079 = vrot.slane %v2065, %v2078
      %v2080 = vcombine.low %v2003, %v2013
      %v2081 = vcombine.high %v2003, %v2013
      %v2083 = vunpack.c.l.s4 1983009808
      %v2084 = vunpack.c.0.s8 %v2083
      %v2085 = vlaneseq
      %v2086 = vshrl.u32 %v2085, 7
      %v2087 = vsub.s32 %v2084, %v2086
      %v2088 = vrot.slane %v2080, %v2087
      %v2090 = vunpack.c.l.s4 1983009808
      %v2091 = vunpack.c.0.s8 %v2090
      %v2092 = vlaneseq
      %v2093 = vshrl.u32 %v2092, 7
      %v2094 = vsub.s32 %v2091, %v2093
      %v2095 = vrot.slane %v2081, %v2094
      %v2096 = vcombine.low %v2040, %v2056
      %v2097 = vcombine.high %v2040, %v2056
      %v2099 = vunpack.c.l.s4 1934713408
      %v2100 = vunpack.c.0.s8 %v2099
      %v2101 = vlaneseq
      %v2102 = vshrl.u32 %v2101, 7
      %v2103 = vsub.s32 %v2100, %v2102
      %v2104 = vrot.slane %v2096, %v2103
      %v2106 = vunpack.c.l.s4 1934713408
      %v2107 = vunpack.c.0.s8 %v2106
      %v2108 = vlaneseq
      %v2109 = vshrl.u32 %v2108, 7
      %v2110 = vsub.s32 %v2107, %v2109
      %v2111 = vrot.slane %v2097, %v2110
      %v2112 = vcombine.low %v2047, %v2063
      %v2113 = vcombine.high %v2047, %v2063
      %v2115 = vunpack.c.l.s4 1934713408
      %v2116 = vunpack.c.0.s8 %v2115
      %v2117 = vlaneseq
      %v2118 = vshrl.u32 %v2117, 7
      %v2119 = vsub.s32 %v2116, %v2118
      %v2120 = vrot.slane %v2112, %v2119
      %v2122 = vunpack.c.l.s4 1934713408
      %v2123 = vunpack.c.0.s8 %v2122
      %v2124 = vlaneseq
      %v2125 = vshrl.u32 %v2124, 7
      %v2126 = vsub.s32 %v2123, %v2125
      %v2127 = vrot.slane %v2113, %v2126
      %v2128 = vcombine.low %v2072, %v2088
      %v2129 = vcombine.high %v2072, %v2088
      %v2131 = vunpack.c.l.s4 1934713408
      %v2132 = vunpack.c.0.s8 %v2131
      %v2133 = vlaneseq
      %v2134 = vshrl.u32 %v2133, 7
      %v2135 = vsub.s32 %v2132, %v2134
      %v2136 = vrot.slane %v2128, %v2135
      %v2138 = vunpack.c.l.s4 1934713408
      %v2139 = vunpack.c.0.s8 %v2138
      %v2140 = vlaneseq
      %v2141 = vshrl.u32 %v2140, 7
      %v2142 = vsub.s32 %v2139, %v2141
      %v2143 = vrot.slane %v2129, %v2142
      %v2144 = vcombine.low %v2079, %v2095
      %v2145 = vcombine.high %v2079, %v2095
      %v2147 = vunpack.c.l.s4 1934713408
      %v2148 = vunpack.c.0.s8 %v2147
      %v2149 = vlaneseq
      %v2150 = vshrl.u32 %v2149, 7
      %v2151 = vsub.s32 %v2148, %v2150
      %v2152 = vrot.slane %v2144, %v2151
      %v2154 = vunpack.c.l.s4 1934713408
      %v2155 = vunpack.c.0.s8 %v2154
      %v2156 = vlaneseq
      %v2157 = vshrl.u32 %v2156, 7
      %v2158 = vsub.s32 %v2155, %v2157
      %v2159 = vrot.slane %v2145, %v2158
      %v2160 = vcombine.low %v2104, %v2136
      %v2161 = vcombine.high %v2104, %v2136
      %v2162 = vcombine.low %v2111, %v2143
      %v2163 = vcombine.high %v2111, %v2143
      %v2164 = vcombine.low %v2120, %v2152
      %v2165 = vcombine.high %v2120, %v2152
      %v2166 = vcombine.low %v2127, %v2159
      %v2167 = vcombine.high %v2127, %v2159
      %v2168 = vcombine.low %v1980, %v1990
      %v2169 = vcombine.high %v1980, %v1990
      %v2171 = vunpack.c.l.s4 1983009808
      %v2172 = vunpack.c.0.s8 %v2171
      %v2173 = vlaneseq
      %v2174 = vshrl.u32 %v2173, 7
      %v2175 = vsub.s32 %v2172, %v2174
      %v2176 = vrot.slane %v2168, %v2175
      %v2178 = vunpack.c.l.s4 1983009808
      %v2179 = vunpack.c.0.s8 %v2178
      %v2180 = vlaneseq
      %v2181 = vshrl.u32 %v2180, 7
      %v2182 = vsub.s32 %v2179, %v2181
      %v2183 = vrot.slane %v2169, %v2182
      %v2184 = vcombine.low %v1985, %v1995
      %v2185 = vcombine.high %v1985, %v1995
      %v2187 = vunpack.c.l.s4 1983009808
      %v2188 = vunpack.c.0.s8 %v2187
      %v2189 = vlaneseq
      %v2190 = vshrl.u32 %v2189, 7
      %v2191 = vsub.s32 %v2188, %v2190
      %v2192 = vrot.slane %v2184, %v2191
      %v2194 = vunpack.c.l.s4 1983009808
      %v2195 = vunpack.c.0.s8 %v2194
      %v2196 = vlaneseq
      %v2197 = vshrl.u32 %v2196, 7
      %v2198 = vsub.s32 %v2195, %v2197
      %v2199 = vrot.slane %v2185, %v2198
      %v2200 = vcombine.low %v2000, %v2010
      %v2201 = vcombine.high %v2000, %v2010
      %v2203 = vunpack.c.l.s4 1983009808
      %v2204 = vunpack.c.0.s8 %v2203
      %v2205 = vlaneseq
      %v2206 = vshrl.u32 %v2205, 7
      %v2207 = vsub.s32 %v2204, %v2206
      %v2208 = vrot.slane %v2200, %v2207
      %v2210 = vunpack.c.l.s4 1983009808
      %v2211 = vunpack.c.0.s8 %v2210
      %v2212 = vlaneseq
      %v2213 = vshrl.u32 %v2212, 7
      %v2214 = vsub.s32 %v2211, %v2213
      %v2215 = vrot.slane %v2201, %v2214
      %v2216 = vcombine.low %v2005, %v2015
      %v2217 = vcombine.high %v2005, %v2015
      %v2219 = vunpack.c.l.s4 1983009808
      %v2220 = vunpack.c.0.s8 %v2219
      %v2221 = vlaneseq
      %v2222 = vshrl.u32 %v2221, 7
      %v2223 = vsub.s32 %v2220, %v2222
      %v2224 = vrot.slane %v2216, %v2223
      %v2226 = vunpack.c.l.s4 1983009808
      %v2227 = vunpack.c.0.s8 %v2226
      %v2228 = vlaneseq
      %v2229 = vshrl.u32 %v2228, 7
      %v2230 = vsub.s32 %v2227, %v2229
      %v2231 = vrot.slane %v2217, %v2230
      %v2232 = vcombine.low %v2176, %v2192
      %v2233 = vcombine.high %v2176, %v2192
      %v2235 = vunpack.c.l.s4 1934713408
      %v2236 = vunpack.c.0.s8 %v2235
      %v2237 = vlaneseq
      %v2238 = vshrl.u32 %v2237, 7
      %v2239 = vsub.s32 %v2236, %v2238
      %v2240 = vrot.slane %v2232, %v2239
      %v2242 = vunpack.c.l.s4 1934713408
      %v2243 = vunpack.c.0.s8 %v2242
      %v2244 = vlaneseq
      %v2245 = vshrl.u32 %v2244, 7
      %v2246 = vsub.s32 %v2243, %v2245
      %v2247 = vrot.slane %v2233, %v2246
      %v2248 = vcombine.low %v2183, %v2199
      %v2249 = vcombine.high %v2183, %v2199
      %v2251 = vunpack.c.l.s4 1934713408
      %v2252 = vunpack.c.0.s8 %v2251
      %v2253 = vlaneseq
      %v2254 = vshrl.u32 %v2253, 7
      %v2255 = vsub.s32 %v2252, %v2254
      %v2256 = vrot.slane %v2248, %v2255
      %v2258 = vunpack.c.l.s4 1934713408
      %v2259 = vunpack.c.0.s8 %v2258
      %v2260 = vlaneseq
      %v2261 = vshrl.u32 %v2260, 7
      %v2262 = vsub.s32 %v2259, %v2261
      %v2263 = vrot.slane %v2249, %v2262
      %v2264 = vcombine.low %v2208, %v2224
      %v2265 = vcombine.high %v2208, %v2224
      %v2267 = vunpack.c.l.s4 1934713408
      %v2268 = vunpack.c.0.s8 %v2267
      %v2269 = vlaneseq
      %v2270 = vshrl.u32 %v2269, 7
      %v2271 = vsub.s32 %v2268, %v2270
      %v2272 = vrot.slane %v2264, %v2271
      %v2274 = vunpack.c.l.s4 1934713408
      %v2275 = vunpack.c.0.s8 %v2274
      %v2276 = vlaneseq
      %v2277 = vshrl.u32 %v2276, 7
      %v2278 = vsub.s32 %v2275, %v2277
      %v2279 = vrot.slane %v2265, %v2278
      %v2280 = vcombine.low %v2215, %v2231
      %v2281 = vcombine.high %v2215, %v2231
      %v2283 = vunpack.c.l.s4 1934713408
      %v2284 = vunpack.c.0.s8 %v2283
      %v2285 = vlaneseq
      %v2286 = vshrl.u32 %v2285, 7
      %v2287 = vsub.s32 %v2284, %v2286
      %v2288 = vrot.slane %v2280, %v2287
      %v2290 = vunpack.c.l.s4 1934713408
      %v2291 = vunpack.c.0.s8 %v2290
      %v2292 = vlaneseq
      %v2293 = vshrl.u32 %v2292, 7
      %v2294 = vsub.s32 %v2291, %v2293
      %v2295 = vrot.slane %v2281, %v2294
      %v2296 = vcombine.low %v2240, %v2272
      %v2297 = vcombine.high %v2240, %v2272
      %v2298 = vcombine.low %v2247, %v2279
      %v2299 = vcombine.high %v2247, %v2279
      %v2300 = vcombine.low %v2256, %v2288
      %v2301 = vcombine.high %v2256, %v2288
      %v2302 = vcombine.low %v2263, %v2295
      %v2303 = vcombine.high %v2263, %v2295
      %2305 = vrot.lane.b32.xlu0 %v2161, 16
      %v2306 = vpop.permute.xlu0 %2305
      %2309 = vrot.lane.b32.xlu0 %v2162, 32
      %v2310 = vpop.permute.xlu0 %2309
      %2313 = vrot.lane.b32.xlu0 %v2163, 48
      %v2314 = vpop.permute.xlu0 %2313
      %2317 = vrot.lane.b32.xlu0 %v2164, 64
      %v2318 = vpop.permute.xlu0 %2317
      %2321 = vrot.lane.b32.xlu0 %v2165, 80
      %v2322 = vpop.permute.xlu0 %2321
      %2325 = vrot.lane.b32.xlu0 %v2166, 96
      %v2326 = vpop.permute.xlu0 %2325
      %2329 = vrot.lane.b32.xlu0 %v2167, 112
      %v2330 = vpop.permute.xlu0 %2329
      %2333 = vrot.lane.b32.xlu0 %v2297, 16
      %v2334 = vpop.permute.xlu0 %2333
      %2337 = vrot.lane.b32.xlu0 %v2298, 32
      %v2338 = vpop.permute.xlu0 %2337
      %2341 = vrot.lane.b32.xlu0 %v2299, 48
      %v2342 = vpop.permute.xlu0 %2341
      %2345 = vrot.lane.b32.xlu0 %v2300, 64
      %v2346 = vpop.permute.xlu0 %2345
      %2349 = vrot.lane.b32.xlu0 %v2301, 80
      %v2350 = vpop.permute.xlu0 %2349
      %2353 = vrot.lane.b32.xlu0 %v2302, 96
      %v2354 = vpop.permute.xlu0 %2353
      %2357 = vrot.lane.b32.xlu0 %v2303, 112
      %v2358 = vpop.permute.xlu0 %2357
      %v2360 = vsel %vm1150, %v2160, %v2306
      %v2361 = vsel %vm1152, %v2360, %v2310
      %v2362 = vsel %vm1154, %v2361, %v2314
      %v2363 = vsel %vm1156, %v2362, %v2318
      %v2364 = vsel %vm1158, %v2363, %v2322
      %v2365 = vsel %vm1160, %v2364, %v2326
      %v2366 = vsel %vm1162, %v2365, %v2330
      %v2367 = vsel %vm1150, %v2296, %v2334
      %v2368 = vsel %vm1152, %v2367, %v2338
      %v2369 = vsel %vm1154, %v2368, %v2342
      %v2370 = vsel %vm1156, %v2369, %v2346
      %v2371 = vsel %vm1158, %v2370, %v2350
      %v2372 = vsel %vm1160, %v2371, %v2354
      %v2373 = vsel %vm1162, %v2372, %v2358
      %2374 = vrot.lane.b32.xlu0 %v1978, 127
      %v2375 = vpop.permute.xlu0 %2374
      %2376 = vrot.lane.b32.xlu0 %v1980, 127
      %v2377 = vpop.permute.xlu0 %2376
      %2378 = vrot.lane.b32.xlu0 %v1983, 127
      %v2379 = vpop.permute.xlu0 %2378
      %2380 = vrot.lane.b32.xlu0 %v1985, 127
      %v2381 = vpop.permute.xlu0 %2380
      %2382 = vrot.lane.b32.xlu0 %v1988, 127
      %v2383 = vpop.permute.xlu0 %2382
      %2384 = vrot.lane.b32.xlu0 %v1990, 127
      %v2385 = vpop.permute.xlu0 %2384
      %2386 = vrot.lane.b32.xlu0 %v1993, 127
      %v2387 = vpop.permute.xlu0 %2386
      %2388 = vrot.lane.b32.xlu0 %v1995, 127
      %v2389 = vpop.permute.xlu0 %2388
      %2390 = vrot.lane.b32.xlu0 %v1998, 127
      %v2391 = vpop.permute.xlu0 %2390
      %2392 = vrot.lane.b32.xlu0 %v2000, 127
      %v2393 = vpop.permute.xlu0 %2392
      %2394 = vrot.lane.b32.xlu0 %v2003, 127
      %v2395 = vpop.permute.xlu0 %2394
      %2396 = vrot.lane.b32.xlu0 %v2005, 127
      %v2397 = vpop.permute.xlu0 %2396
      %2398 = vrot.lane.b32.xlu0 %v2008, 127
      %v2399 = vpop.permute.xlu0 %2398
      %2400 = vrot.lane.b32.xlu0 %v2010, 127
      %v2401 = vpop.permute.xlu0 %2400
      %2402 = vrot.lane.b32.xlu0 %v2013, 127
      %v2403 = vpop.permute.xlu0 %2402
      %2404 = vrot.lane.b32.xlu0 %v2015, 127
      %v2405 = vpop.permute.xlu0 %2404
      %v2422 = vcombine.low %v2375, %v2383
      %v2423 = vcombine.high %v2375, %v2383
      %v2425 = vunpack.c.l.s4 1983009808
      %v2426 = vunpack.c.0.s8 %v2425
      %v2427 = vlaneseq
      %v2428 = vshrl.u32 %v2427, 7
      %v2429 = vsub.s32 %v2426, %v2428
      %v2430 = vrot.slane %v2422, %v2429
      %v2432 = vunpack.c.l.s4 1983009808
      %v2433 = vunpack.c.0.s8 %v2432
      %v2434 = vlaneseq
      %v2435 = vshrl.u32 %v2434, 7
      %v2436 = vsub.s32 %v2433, %v2435
      %v2437 = vrot.slane %v2423, %v2436
      %v2438 = vcombine.low %v2379, %v2387
      %v2439 = vcombine.high %v2379, %v2387
      %v2441 = vunpack.c.l.s4 1983009808
      %v2442 = vunpack.c.0.s8 %v2441
      %v2443 = vlaneseq
      %v2444 = vshrl.u32 %v2443, 7
      %v2445 = vsub.s32 %v2442, %v2444
      %v2446 = vrot.slane %v2438, %v2445
      %v2448 = vunpack.c.l.s4 1983009808
      %v2449 = vunpack.c.0.s8 %v2448
      %v2450 = vlaneseq
      %v2451 = vshrl.u32 %v2450, 7
      %v2452 = vsub.s32 %v2449, %v2451
      %v2453 = vrot.slane %v2439, %v2452
      %v2454 = vcombine.low %v2391, %v2399
      %v2455 = vcombine.high %v2391, %v2399
      %v2457 = vunpack.c.l.s4 1983009808
      %v2458 = vunpack.c.0.s8 %v2457
      %v2459 = vlaneseq
      %v2460 = vshrl.u32 %v2459, 7
      %v2461 = vsub.s32 %v2458, %v2460
      %v2462 = vrot.slane %v2454, %v2461
      %v2464 = vunpack.c.l.s4 1983009808
      %v2465 = vunpack.c.0.s8 %v2464
      %v2466 = vlaneseq
      %v2467 = vshrl.u32 %v2466, 7
      %v2468 = vsub.s32 %v2465, %v2467
      %v2469 = vrot.slane %v2455, %v2468
      %v2470 = vcombine.low %v2395, %v2403
      %v2471 = vcombine.high %v2395, %v2403
      %v2473 = vunpack.c.l.s4 1983009808
      %v2474 = vunpack.c.0.s8 %v2473
      %v2475 = vlaneseq
      %v2476 = vshrl.u32 %v2475, 7
      %v2477 = vsub.s32 %v2474, %v2476
      %v2478 = vrot.slane %v2470, %v2477
      %v2480 = vunpack.c.l.s4 1983009808
      %v2481 = vunpack.c.0.s8 %v2480
      %v2482 = vlaneseq
      %v2483 = vshrl.u32 %v2482, 7
      %v2484 = vsub.s32 %v2481, %v2483
      %v2485 = vrot.slane %v2471, %v2484
      %v2486 = vcombine.low %v2430, %v2446
      %v2487 = vcombine.high %v2430, %v2446
      %v2489 = vunpack.c.l.s4 1934713408
      %v2490 = vunpack.c.0.s8 %v2489
      %v2491 = vlaneseq
      %v2492 = vshrl.u32 %v2491, 7
      %v2493 = vsub.s32 %v2490, %v2492
      %v2494 = vrot.slane %v2486, %v2493
      %v2496 = vunpack.c.l.s4 1934713408
      %v2497 = vunpack.c.0.s8 %v2496
      %v2498 = vlaneseq
      %v2499 = vshrl.u32 %v2498, 7
      %v2500 = vsub.s32 %v2497, %v2499
      %v2501 = vrot.slane %v2487, %v2500
      %v2502 = vcombine.low %v2437, %v2453
      %v2503 = vcombine.high %v2437, %v2453
      %v2505 = vunpack.c.l.s4 1934713408
      %v2506 = vunpack.c.0.s8 %v2505
      %v2507 = vlaneseq
      %v2508 = vshrl.u32 %v2507, 7
      %v2509 = vsub.s32 %v2506, %v2508
      %v2510 = vrot.slane %v2502, %v2509
      %v2512 = vunpack.c.l.s4 1934713408
      %v2513 = vunpack.c.0.s8 %v2512
      %v2514 = vlaneseq
      %v2515 = vshrl.u32 %v2514, 7
      %v2516 = vsub.s32 %v2513, %v2515
      %v2517 = vrot.slane %v2503, %v2516
      %v2518 = vcombine.low %v2462, %v2478
      %v2519 = vcombine.high %v2462, %v2478
      %v2521 = vunpack.c.l.s4 1934713408
      %v2522 = vunpack.c.0.s8 %v2521
      %v2523 = vlaneseq
      %v2524 = vshrl.u32 %v2523, 7
      %v2525 = vsub.s32 %v2522, %v2524
      %v2526 = vrot.slane %v2518, %v2525
      %v2528 = vunpack.c.l.s4 1934713408
      %v2529 = vunpack.c.0.s8 %v2528
      %v2530 = vlaneseq
      %v2531 = vshrl.u32 %v2530, 7
      %v2532 = vsub.s32 %v2529, %v2531
      %v2533 = vrot.slane %v2519, %v2532
      %v2534 = vcombine.low %v2469, %v2485
      %v2535 = vcombine.high %v2469, %v2485
      %v2537 = vunpack.c.l.s4 1934713408
      %v2538 = vunpack.c.0.s8 %v2537
      %v2539 = vlaneseq
      %v2540 = vshrl.u32 %v2539, 7
      %v2541 = vsub.s32 %v2538, %v2540
      %v2542 = vrot.slane %v2534, %v2541
      %v2544 = vunpack.c.l.s4 1934713408
      %v2545 = vunpack.c.0.s8 %v2544
      %v2546 = vlaneseq
      %v2547 = vshrl.u32 %v2546, 7
      %v2548 = vsub.s32 %v2545, %v2547
      %v2549 = vrot.slane %v2535, %v2548
      %v2550 = vcombine.low %v2494, %v2526
      %v2551 = vcombine.high %v2494, %v2526
      %v2552 = vcombine.low %v2501, %v2533
      %v2553 = vcombine.high %v2501, %v2533
      %v2554 = vcombine.low %v2510, %v2542
      %v2555 = vcombine.high %v2510, %v2542
      %v2556 = vcombine.low %v2517, %v2549
      %v2557 = vcombine.high %v2517, %v2549
      %v2558 = vcombine.low %v2377, %v2385
      %v2559 = vcombine.high %v2377, %v2385
      %v2561 = vunpack.c.l.s4 1983009808
      %v2562 = vunpack.c.0.s8 %v2561
      %v2563 = vlaneseq
      %v2564 = vshrl.u32 %v2563, 7
      %v2565 = vsub.s32 %v2562, %v2564
      %v2566 = vrot.slane %v2558, %v2565
      %v2568 = vunpack.c.l.s4 1983009808
      %v2569 = vunpack.c.0.s8 %v2568
      %v2570 = vlaneseq
      %v2571 = vshrl.u32 %v2570, 7
      %v2572 = vsub.s32 %v2569, %v2571
      %v2573 = vrot.slane %v2559, %v2572
      %v2574 = vcombine.low %v2381, %v2389
      %v2575 = vcombine.high %v2381, %v2389
      %v2577 = vunpack.c.l.s4 1983009808
      %v2578 = vunpack.c.0.s8 %v2577
      %v2579 = vlaneseq
      %v2580 = vshrl.u32 %v2579, 7
      %v2581 = vsub.s32 %v2578, %v2580
      %v2582 = vrot.slane %v2574, %v2581
      %v2584 = vunpack.c.l.s4 1983009808
      %v2585 = vunpack.c.0.s8 %v2584
      %v2586 = vlaneseq
      %v2587 = vshrl.u32 %v2586, 7
      %v2588 = vsub.s32 %v2585, %v2587
      %v2589 = vrot.slane %v2575, %v2588
      %v2590 = vcombine.low %v2393, %v2401
      %v2591 = vcombine.high %v2393, %v2401
      %v2593 = vunpack.c.l.s4 1983009808
      %v2594 = vunpack.c.0.s8 %v2593
      %v2595 = vlaneseq
      %v2596 = vshrl.u32 %v2595, 7
      %v2597 = vsub.s32 %v2594, %v2596
      %v2598 = vrot.slane %v2590, %v2597
      %v2600 = vunpack.c.l.s4 1983009808
      %v2601 = vunpack.c.0.s8 %v2600
      %v2602 = vlaneseq
      %v2603 = vshrl.u32 %v2602, 7
      %v2604 = vsub.s32 %v2601, %v2603
      %v2605 = vrot.slane %v2591, %v2604
      %v2606 = vcombine.low %v2397, %v2405
      %v2607 = vcombine.high %v2397, %v2405
      %v2609 = vunpack.c.l.s4 1983009808
      %v2610 = vunpack.c.0.s8 %v2609
      %v2611 = vlaneseq
      %v2612 = vshrl.u32 %v2611, 7
      %v2613 = vsub.s32 %v2610, %v2612
      %v2614 = vrot.slane %v2606, %v2613
      %v2616 = vunpack.c.l.s4 1983009808
      %v2617 = vunpack.c.0.s8 %v2616
      %v2618 = vlaneseq
      %v2619 = vshrl.u32 %v2618, 7
      %v2620 = vsub.s32 %v2617, %v2619
      %v2621 = vrot.slane %v2607, %v2620
      %v2622 = vcombine.low %v2566, %v2582
      %v2623 = vcombine.high %v2566, %v2582
      %v2625 = vunpack.c.l.s4 1934713408
      %v2626 = vunpack.c.0.s8 %v2625
      %v2627 = vlaneseq
      %v2628 = vshrl.u32 %v2627, 7
      %v2629 = vsub.s32 %v2626, %v2628
      %v2630 = vrot.slane %v2622, %v2629
      %v2632 = vunpack.c.l.s4 1934713408
      %v2633 = vunpack.c.0.s8 %v2632
      %v2634 = vlaneseq
      %v2635 = vshrl.u32 %v2634, 7
      %v2636 = vsub.s32 %v2633, %v2635
      %v2637 = vrot.slane %v2623, %v2636
      %v2638 = vcombine.low %v2573, %v2589
      %v2639 = vcombine.high %v2573, %v2589
      %v2641 = vunpack.c.l.s4 1934713408
      %v2642 = vunpack.c.0.s8 %v2641
      %v2643 = vlaneseq
      %v2644 = vshrl.u32 %v2643, 7
      %v2645 = vsub.s32 %v2642, %v2644
      %v2646 = vrot.slane %v2638, %v2645
      %v2648 = vunpack.c.l.s4 1934713408
      %v2649 = vunpack.c.0.s8 %v2648
      %v2650 = vlaneseq
      %v2651 = vshrl.u32 %v2650, 7
      %v2652 = vsub.s32 %v2649, %v2651
      %v2653 = vrot.slane %v2639, %v2652
      %v2654 = vcombine.low %v2598, %v2614
      %v2655 = vcombine.high %v2598, %v2614
      %v2657 = vunpack.c.l.s4 1934713408
      %v2658 = vunpack.c.0.s8 %v2657
      %v2659 = vlaneseq
      %v2660 = vshrl.u32 %v2659, 7
      %v2661 = vsub.s32 %v2658, %v2660
      %v2662 = vrot.slane %v2654, %v2661
      %v2664 = vunpack.c.l.s4 1934713408
      %v2665 = vunpack.c.0.s8 %v2664
      %v2666 = vlaneseq
      %v2667 = vshrl.u32 %v2666, 7
      %v2668 = vsub.s32 %v2665, %v2667
      %v2669 = vrot.slane %v2655, %v2668
      %v2670 = vcombine.low %v2605, %v2621
      %v2671 = vcombine.high %v2605, %v2621
      %v2673 = vunpack.c.l.s4 1934713408
      %v2674 = vunpack.c.0.s8 %v2673
      %v2675 = vlaneseq
      %v2676 = vshrl.u32 %v2675, 7
      %v2677 = vsub.s32 %v2674, %v2676
      %v2678 = vrot.slane %v2670, %v2677
      %v2680 = vunpack.c.l.s4 1934713408
      %v2681 = vunpack.c.0.s8 %v2680
      %v2682 = vlaneseq
      %v2683 = vshrl.u32 %v2682, 7
      %v2684 = vsub.s32 %v2681, %v2683
      %v2685 = vrot.slane %v2671, %v2684
      %v2686 = vcombine.low %v2630, %v2662
      %v2687 = vcombine.high %v2630, %v2662
      %v2688 = vcombine.low %v2637, %v2669
      %v2689 = vcombine.high %v2637, %v2669
      %v2690 = vcombine.low %v2646, %v2678
      %v2691 = vcombine.high %v2646, %v2678
      %v2692 = vcombine.low %v2653, %v2685
      %v2693 = vcombine.high %v2653, %v2685
      %2695 = vrot.lane.b32.xlu0 %v2551, 16
      %v2696 = vpop.permute.xlu0 %2695
      %2699 = vrot.lane.b32.xlu0 %v2552, 32
      %v2700 = vpop.permute.xlu0 %2699
      %2703 = vrot.lane.b32.xlu0 %v2553, 48
      %v2704 = vpop.permute.xlu0 %2703
      %2707 = vrot.lane.b32.xlu0 %v2554, 64
      %v2708 = vpop.permute.xlu0 %2707
      %2711 = vrot.lane.b32.xlu0 %v2555, 80
      %v2712 = vpop.permute.xlu0 %2711
      %2715 = vrot.lane.b32.xlu0 %v2556, 96
      %v2716 = vpop.permute.xlu0 %2715
      %2719 = vrot.lane.b32.xlu0 %v2557, 112
      %v2720 = vpop.permute.xlu0 %2719
      %2723 = vrot.lane.b32.xlu0 %v2687, 16
      %v2724 = vpop.permute.xlu0 %2723
      %2727 = vrot.lane.b32.xlu0 %v2688, 32
      %v2728 = vpop.permute.xlu0 %2727
      %2731 = vrot.lane.b32.xlu0 %v2689, 48
      %v2732 = vpop.permute.xlu0 %2731
      %2735 = vrot.lane.b32.xlu0 %v2690, 64
      %v2736 = vpop.permute.xlu0 %2735
      %2739 = vrot.lane.b32.xlu0 %v2691, 80
      %v2740 = vpop.permute.xlu0 %2739
      %2743 = vrot.lane.b32.xlu0 %v2692, 96
      %v2744 = vpop.permute.xlu0 %2743
      %2747 = vrot.lane.b32.xlu0 %v2693, 112
      %v2748 = vpop.permute.xlu0 %2747
      %v2750 = vsel %vm1150, %v2550, %v2696
      %v2751 = vsel %vm1152, %v2750, %v2700
      %v2752 = vsel %vm1154, %v2751, %v2704
      %v2753 = vsel %vm1156, %v2752, %v2708
      %v2754 = vsel %vm1158, %v2753, %v2712
      %v2755 = vsel %vm1160, %v2754, %v2716
      %v2756 = vsel %vm1162, %v2755, %v2720
      %v2757 = vsel %vm1150, %v2686, %v2724
      %v2758 = vsel %vm1152, %v2757, %v2728
      %v2759 = vsel %vm1154, %v2758, %v2732
      %v2760 = vsel %vm1156, %v2759, %v2736
      %v2761 = vsel %vm1158, %v2760, %v2740
      %v2762 = vsel %vm1160, %v2761, %v2744
      %v2763 = vsel %vm1162, %v2762, %v2748
      %2764 = vrot.lane.b32.xlu0 %v1978, 126
      %v2765 = vpop.permute.xlu0 %2764
      %2766 = vrot.lane.b32.xlu0 %v1980, 126
      %v2767 = vpop.permute.xlu0 %2766
      %2768 = vrot.lane.b32.xlu0 %v1983, 126
      %v2769 = vpop.permute.xlu0 %2768
      %2770 = vrot.lane.b32.xlu0 %v1985, 126
      %v2771 = vpop.permute.xlu0 %2770
      %2772 = vrot.lane.b32.xlu0 %v1988, 126
      %v2773 = vpop.permute.xlu0 %2772
      %2774 = vrot.lane.b32.xlu0 %v1990, 126
      %v2775 = vpop.permute.xlu0 %2774
      %2776 = vrot.lane.b32.xlu0 %v1993, 126
      %v2777 = vpop.permute.xlu0 %2776
      %2778 = vrot.lane.b32.xlu0 %v1995, 126
      %v2779 = vpop.permute.xlu0 %2778
      %2780 = vrot.lane.b32.xlu0 %v1998, 126
      %v2781 = vpop.permute.xlu0 %2780
      %2782 = vrot.lane.b32.xlu0 %v2000, 126
      %v2783 = vpop.permute.xlu0 %2782
      %2784 = vrot.lane.b32.xlu0 %v2003, 126
      %v2785 = vpop.permute.xlu0 %2784
      %2786 = vrot.lane.b32.xlu0 %v2005, 126
      %v2787 = vpop.permute.xlu0 %2786
      %2788 = vrot.lane.b32.xlu0 %v2008, 126
      %v2789 = vpop.permute.xlu0 %2788
      %2790 = vrot.lane.b32.xlu0 %v2010, 126
      %v2791 = vpop.permute.xlu0 %2790
      %2792 = vrot.lane.b32.xlu0 %v2013, 126
      %v2793 = vpop.permute.xlu0 %2792
      %2794 = vrot.lane.b32.xlu0 %v2015, 126
      %v2795 = vpop.permute.xlu0 %2794
      %v2812 = vcombine.low %v2765, %v2773
      %v2813 = vcombine.high %v2765, %v2773
      %v2815 = vunpack.c.l.s4 1983009808
      %v2816 = vunpack.c.0.s8 %v2815
      %v2817 = vlaneseq
      %v2818 = vshrl.u32 %v2817, 7
      %v2819 = vsub.s32 %v2816, %v2818
      %v2820 = vrot.slane %v2812, %v2819
      %v2822 = vunpack.c.l.s4 1983009808
      %v2823 = vunpack.c.0.s8 %v2822
      %v2824 = vlaneseq
      %v2825 = vshrl.u32 %v2824, 7
      %v2826 = vsub.s32 %v2823, %v2825
      %v2827 = vrot.slane %v2813, %v2826
      %v2828 = vcombine.low %v2769, %v2777
      %v2829 = vcombine.high %v2769, %v2777
      %v2831 = vunpack.c.l.s4 1983009808
      %v2832 = vunpack.c.0.s8 %v2831
      %v2833 = vlaneseq
      %v2834 = vshrl.u32 %v2833, 7
      %v2835 = vsub.s32 %v2832, %v2834
      %v2836 = vrot.slane %v2828, %v2835
      %v2838 = vunpack.c.l.s4 1983009808
      %v2839 = vunpack.c.0.s8 %v2838
      %v2840 = vlaneseq
      %v2841 = vshrl.u32 %v2840, 7
      %v2842 = vsub.s32 %v2839, %v2841
      %v2843 = vrot.slane %v2829, %v2842
      %v2844 = vcombine.low %v2781, %v2789
      %v2845 = vcombine.high %v2781, %v2789
      %v2847 = vunpack.c.l.s4 1983009808
      %v2848 = vunpack.c.0.s8 %v2847
      %v2849 = vlaneseq
      %v2850 = vshrl.u32 %v2849, 7
      %v2851 = vsub.s32 %v2848, %v2850
      %v2852 = vrot.slane %v2844, %v2851
      %v2854 = vunpack.c.l.s4 1983009808
      %v2855 = vunpack.c.0.s8 %v2854
      %v2856 = vlaneseq
      %v2857 = vshrl.u32 %v2856, 7
      %v2858 = vsub.s32 %v2855, %v2857
      %v2859 = vrot.slane %v2845, %v2858
      %v2860 = vcombine.low %v2785, %v2793
      %v2861 = vcombine.high %v2785, %v2793
      %v2863 = vunpack.c.l.s4 1983009808
      %v2864 = vunpack.c.0.s8 %v2863
      %v2865 = vlaneseq
      %v2866 = vshrl.u32 %v2865, 7
      %v2867 = vsub.s32 %v2864, %v2866
      %v2868 = vrot.slane %v2860, %v2867
      %v2870 = vunpack.c.l.s4 1983009808
      %v2871 = vunpack.c.0.s8 %v2870
      %v2872 = vlaneseq
      %v2873 = vshrl.u32 %v2872, 7
      %v2874 = vsub.s32 %v2871, %v2873
      %v2875 = vrot.slane %v2861, %v2874
      %v2876 = vcombine.low %v2820, %v2836
      %v2877 = vcombine.high %v2820, %v2836
      %v2879 = vunpack.c.l.s4 1934713408
      %v2880 = vunpack.c.0.s8 %v2879
      %v2881 = vlaneseq
      %v2882 = vshrl.u32 %v2881, 7
      %v2883 = vsub.s32 %v2880, %v2882
      %v2884 = vrot.slane %v2876, %v2883
      %v2886 = vunpack.c.l.s4 1934713408
      %v2887 = vunpack.c.0.s8 %v2886
      %v2888 = vlaneseq
      %v2889 = vshrl.u32 %v2888, 7
      %v2890 = vsub.s32 %v2887, %v2889
      %v2891 = vrot.slane %v2877, %v2890
      %v2892 = vcombine.low %v2827, %v2843
      %v2893 = vcombine.high %v2827, %v2843
      %v2895 = vunpack.c.l.s4 1934713408
      %v2896 = vunpack.c.0.s8 %v2895
      %v2897 = vlaneseq
      %v2898 = vshrl.u32 %v2897, 7
      %v2899 = vsub.s32 %v2896, %v2898
      %v2900 = vrot.slane %v2892, %v2899
      %v2902 = vunpack.c.l.s4 1934713408
      %v2903 = vunpack.c.0.s8 %v2902
      %v2904 = vlaneseq
      %v2905 = vshrl.u32 %v2904, 7
      %v2906 = vsub.s32 %v2903, %v2905
      %v2907 = vrot.slane %v2893, %v2906
      %v2908 = vcombine.low %v2852, %v2868
      %v2909 = vcombine.high %v2852, %v2868
      %v2911 = vunpack.c.l.s4 1934713408
      %v2912 = vunpack.c.0.s8 %v2911
      %v2913 = vlaneseq
      %v2914 = vshrl.u32 %v2913, 7
      %v2915 = vsub.s32 %v2912, %v2914
      %v2916 = vrot.slane %v2908, %v2915
      %v2918 = vunpack.c.l.s4 1934713408
      %v2919 = vunpack.c.0.s8 %v2918
      %v2920 = vlaneseq
      %v2921 = vshrl.u32 %v2920, 7
      %v2922 = vsub.s32 %v2919, %v2921
      %v2923 = vrot.slane %v2909, %v2922
      %v2924 = vcombine.low %v2859, %v2875
      %v2925 = vcombine.high %v2859, %v2875
      %v2927 = vunpack.c.l.s4 1934713408
      %v2928 = vunpack.c.0.s8 %v2927
      %v2929 = vlaneseq
      %v2930 = vshrl.u32 %v2929, 7
      %v2931 = vsub.s32 %v2928, %v2930
      %v2932 = vrot.slane %v2924, %v2931
      %v2934 = vunpack.c.l.s4 1934713408
      %v2935 = vunpack.c.0.s8 %v2934
      %v2936 = vlaneseq
      %v2937 = vshrl.u32 %v2936, 7
      %v2938 = vsub.s32 %v2935, %v2937
      %v2939 = vrot.slane %v2925, %v2938
      %v2940 = vcombine.low %v2884, %v2916
      %v2941 = vcombine.high %v2884, %v2916
      %v2942 = vcombine.low %v2891, %v2923
      %v2943 = vcombine.high %v2891, %v2923
      %v2944 = vcombine.low %v2900, %v2932
      %v2945 = vcombine.high %v2900, %v2932
      %v2946 = vcombine.low %v2907, %v2939
      %v2947 = vcombine.high %v2907, %v2939
      %v2948 = vcombine.low %v2767, %v2775
      %v2949 = vcombine.high %v2767, %v2775
      %v2951 = vunpack.c.l.s4 1983009808
      %v2952 = vunpack.c.0.s8 %v2951
      %v2953 = vlaneseq
      %v2954 = vshrl.u32 %v2953, 7
      %v2955 = vsub.s32 %v2952, %v2954
      %v2956 = vrot.slane %v2948, %v2955
      %v2958 = vunpack.c.l.s4 1983009808
      %v2959 = vunpack.c.0.s8 %v2958
      %v2960 = vlaneseq
      %v2961 = vshrl.u32 %v2960, 7
      %v2962 = vsub.s32 %v2959, %v2961
      %v2963 = vrot.slane %v2949, %v2962
      %v2964 = vcombine.low %v2771, %v2779
      %v2965 = vcombine.high %v2771, %v2779
      %v2967 = vunpack.c.l.s4 1983009808
      %v2968 = vunpack.c.0.s8 %v2967
      %v2969 = vlaneseq
      %v2970 = vshrl.u32 %v2969, 7
      %v2971 = vsub.s32 %v2968, %v2970
      %v2972 = vrot.slane %v2964, %v2971
      %v2974 = vunpack.c.l.s4 1983009808
      %v2975 = vunpack.c.0.s8 %v2974
      %v2976 = vlaneseq
      %v2977 = vshrl.u32 %v2976, 7
      %v2978 = vsub.s32 %v2975, %v2977
      %v2979 = vrot.slane %v2965, %v2978
      %v2980 = vcombine.low %v2783, %v2791
      %v2981 = vcombine.high %v2783, %v2791
      %v2983 = vunpack.c.l.s4 1983009808
      %v2984 = vunpack.c.0.s8 %v2983
      %v2985 = vlaneseq
      %v2986 = vshrl.u32 %v2985, 7
      %v2987 = vsub.s32 %v2984, %v2986
      %v2988 = vrot.slane %v2980, %v2987
      %v2990 = vunpack.c.l.s4 1983009808
      %v2991 = vunpack.c.0.s8 %v2990
      %v2992 = vlaneseq
      %v2993 = vshrl.u32 %v2992, 7
      %v2994 = vsub.s32 %v2991, %v2993
      %v2995 = vrot.slane %v2981, %v2994
      %v2996 = vcombine.low %v2787, %v2795
      %v2997 = vcombine.high %v2787, %v2795
      %v2999 = vunpack.c.l.s4 1983009808
      %v3000 = vunpack.c.0.s8 %v2999
      %v3001 = vlaneseq
      %v3002 = vshrl.u32 %v3001, 7
      %v3003 = vsub.s32 %v3000, %v3002
      %v3004 = vrot.slane %v2996, %v3003
      %v3006 = vunpack.c.l.s4 1983009808
      %v3007 = vunpack.c.0.s8 %v3006
      %v3008 = vlaneseq
      %v3009 = vshrl.u32 %v3008, 7
      %v3010 = vsub.s32 %v3007, %v3009
      %v3011 = vrot.slane %v2997, %v3010
      %v3012 = vcombine.low %v2956, %v2972
      %v3013 = vcombine.high %v2956, %v2972
      %v3015 = vunpack.c.l.s4 1934713408
      %v3016 = vunpack.c.0.s8 %v3015
      %v3017 = vlaneseq
      %v3018 = vshrl.u32 %v3017, 7
      %v3019 = vsub.s32 %v3016, %v3018
      %v3020 = vrot.slane %v3012, %v3019
      %v3022 = vunpack.c.l.s4 1934713408
      %v3023 = vunpack.c.0.s8 %v3022
      %v3024 = vlaneseq
      %v3025 = vshrl.u32 %v3024, 7
      %v3026 = vsub.s32 %v3023, %v3025
      %v3027 = vrot.slane %v3013, %v3026
      %v3028 = vcombine.low %v2963, %v2979
      %v3029 = vcombine.high %v2963, %v2979
      %v3031 = vunpack.c.l.s4 1934713408
      %v3032 = vunpack.c.0.s8 %v3031
      %v3033 = vlaneseq
      %v3034 = vshrl.u32 %v3033, 7
      %v3035 = vsub.s32 %v3032, %v3034
      %v3036 = vrot.slane %v3028, %v3035
      %v3038 = vunpack.c.l.s4 1934713408
      %v3039 = vunpack.c.0.s8 %v3038
      %v3040 = vlaneseq
      %v3041 = vshrl.u32 %v3040, 7
      %v3042 = vsub.s32 %v3039, %v3041
      %v3043 = vrot.slane %v3029, %v3042
      %v3044 = vcombine.low %v2988, %v3004
      %v3045 = vcombine.high %v2988, %v3004
      %v3047 = vunpack.c.l.s4 1934713408
      %v3048 = vunpack.c.0.s8 %v3047
      %v3049 = vlaneseq
      %v3050 = vshrl.u32 %v3049, 7
      %v3051 = vsub.s32 %v3048, %v3050
      %v3052 = vrot.slane %v3044, %v3051
      %v3054 = vunpack.c.l.s4 1934713408
      %v3055 = vunpack.c.0.s8 %v3054
      %v3056 = vlaneseq
      %v3057 = vshrl.u32 %v3056, 7
      %v3058 = vsub.s32 %v3055, %v3057
      %v3059 = vrot.slane %v3045, %v3058
      %v3060 = vcombine.low %v2995, %v3011
      %v3061 = vcombine.high %v2995, %v3011
      %v3063 = vunpack.c.l.s4 1934713408
      %v3064 = vunpack.c.0.s8 %v3063
      %v3065 = vlaneseq
      %v3066 = vshrl.u32 %v3065, 7
      %v3067 = vsub.s32 %v3064, %v3066
      %v3068 = vrot.slane %v3060, %v3067
      %v3070 = vunpack.c.l.s4 1934713408
      %v3071 = vunpack.c.0.s8 %v3070
      %v3072 = vlaneseq
      %v3073 = vshrl.u32 %v3072, 7
      %v3074 = vsub.s32 %v3071, %v3073
      %v3075 = vrot.slane %v3061, %v3074
      %v3076 = vcombine.low %v3020, %v3052
      %v3077 = vcombine.high %v3020, %v3052
      %v3078 = vcombine.low %v3027, %v3059
      %v3079 = vcombine.high %v3027, %v3059
      %v3080 = vcombine.low %v3036, %v3068
      %v3081 = vcombine.high %v3036, %v3068
      %v3082 = vcombine.low %v3043, %v3075
      %v3083 = vcombine.high %v3043, %v3075
      %3085 = vrot.lane.b32.xlu0 %v2941, 16
      %v3086 = vpop.permute.xlu0 %3085
      %3089 = vrot.lane.b32.xlu0 %v2942, 32
      %v3090 = vpop.permute.xlu0 %3089
      %3093 = vrot.lane.b32.xlu0 %v2943, 48
      %v3094 = vpop.permute.xlu0 %3093
      %3097 = vrot.lane.b32.xlu0 %v2944, 64
      %v3098 = vpop.permute.xlu0 %3097
      %3101 = vrot.lane.b32.xlu0 %v2945, 80
      %v3102 = vpop.permute.xlu0 %3101
      %3105 = vrot.lane.b32.xlu0 %v2946, 96
      %v3106 = vpop.permute.xlu0 %3105
      %3109 = vrot.lane.b32.xlu0 %v2947, 112
      %v3110 = vpop.permute.xlu0 %3109
      %3113 = vrot.lane.b32.xlu0 %v3077, 16
      %v3114 = vpop.permute.xlu0 %3113
      %3117 = vrot.lane.b32.xlu0 %v3078, 32
      %v3118 = vpop.permute.xlu0 %3117
      %3121 = vrot.lane.b32.xlu0 %v3079, 48
      %v3122 = vpop.permute.xlu0 %3121
      %3125 = vrot.lane.b32.xlu0 %v3080, 64
      %v3126 = vpop.permute.xlu0 %3125
      %3129 = vrot.lane.b32.xlu0 %v3081, 80
      %v3130 = vpop.permute.xlu0 %3129
      %3133 = vrot.lane.b32.xlu0 %v3082, 96
      %v3134 = vpop.permute.xlu0 %3133
      %3137 = vrot.lane.b32.xlu0 %v3083, 112
      %v3138 = vpop.permute.xlu0 %3137
      %v3140 = vsel %vm1150, %v2940, %v3086
      %v3141 = vsel %vm1152, %v3140, %v3090
      %v3142 = vsel %vm1154, %v3141, %v3094
      %v3143 = vsel %vm1156, %v3142, %v3098
      %v3144 = vsel %vm1158, %v3143, %v3102
      %v3145 = vsel %vm1160, %v3144, %v3106
      %v3146 = vsel %vm1162, %v3145, %v3110
      %v3147 = vsel %vm1150, %v3076, %v3114
      %v3148 = vsel %vm1152, %v3147, %v3118
      %v3149 = vsel %vm1154, %v3148, %v3122
      %v3150 = vsel %vm1156, %v3149, %v3126
      %v3151 = vsel %vm1158, %v3150, %v3130
      %v3152 = vsel %vm1160, %v3151, %v3134
      %v3153 = vsel %vm1162, %v3152, %v3138
      %vm3154 = vcmask 1045504
      %v3155 = vrot.slane %v798, 2
      %v3156 = vrot.slane %v799, 2
      %v3157 = vsel %vm3154, %v3155, %v3156
      %v3158 = vrot.slane %v800, 2
      %v3159 = vsel %vm3154, %v3156, %v3158
      %v3160 = vrot.slane %v801, 2
      %v3161 = vrot.slane %v802, 2
      %v3162 = vsel %vm3154, %v3160, %v3161
      %v3163 = vrot.slane %v803, 2
      %v3164 = vsel %vm3154, %v3161, %v3163
      %v3165 = vrot.slane %v804, 2
      %v3166 = vrot.slane %v805, 2
      %v3167 = vsel %vm3154, %v3165, %v3166
      %v3168 = vrot.slane %v806, 2
      %v3169 = vsel %vm3154, %v3166, %v3168
      %v3170 = vrot.slane %v807, 2
      %v3171 = vrot.slane %v808, 2
      %v3172 = vsel %vm3154, %v3170, %v3171
      %v3173 = vrot.slane %v809, 2
      %v3174 = vsel %vm3154, %v3171, %v3173
      %v3175 = vrot.slane %v810, 2
      %v3176 = vrot.slane %v811, 2
      %v3177 = vsel %vm3154, %v3175, %v3176
      %v3178 = vrot.slane %v812, 2
      %v3179 = vsel %vm3154, %v3176, %v3178
      %v3180 = vrot.slane %v813, 2
      %v3181 = vrot.slane %v814, 2
      %v3182 = vsel %vm3154, %v3180, %v3181
      %v3183 = vrot.slane %v815, 2
      %v3184 = vsel %vm3154, %v3181, %v3183
      %v3185 = vrot.slane %v816, 2
      %v3186 = vrot.slane %v817, 2
      %v3187 = vsel %vm3154, %v3185, %v3186
      %v3188 = vrot.slane %v818, 2
      %v3189 = vsel %vm3154, %v3186, %v3188
      %v3190 = vrot.slane %v819, 2
      %v3191 = vrot.slane %v820, 2
      %v3192 = vsel %vm3154, %v3190, %v3191
      %v3193 = vrot.slane %v821, 2
      %v3194 = vsel %vm3154, %v3191, %v3193
      %v3211 = vcombine.low %v3157, %v3167
      %v3212 = vcombine.high %v3157, %v3167
      %v3214 = vunpack.c.l.s4 1983009808
      %v3215 = vunpack.c.0.s8 %v3214
      %v3216 = vlaneseq
      %v3217 = vshrl.u32 %v3216, 7
      %v3218 = vsub.s32 %v3215, %v3217
      %v3219 = vrot.slane %v3211, %v3218
      %v3221 = vunpack.c.l.s4 1983009808
      %v3222 = vunpack.c.0.s8 %v3221
      %v3223 = vlaneseq
      %v3224 = vshrl.u32 %v3223, 7
      %v3225 = vsub.s32 %v3222, %v3224
      %v3226 = vrot.slane %v3212, %v3225
      %v3227 = vcombine.low %v3162, %v3172
      %v3228 = vcombine.high %v3162, %v3172
      %v3230 = vunpack.c.l.s4 1983009808
      %v3231 = vunpack.c.0.s8 %v3230
      %v3232 = vlaneseq
      %v3233 = vshrl.u32 %v3232, 7
      %v3234 = vsub.s32 %v3231, %v3233
      %v3235 = vrot.slane %v3227, %v3234
      %v3237 = vunpack.c.l.s4 1983009808
      %v3238 = vunpack.c.0.s8 %v3237
      %v3239 = vlaneseq
      %v3240 = vshrl.u32 %v3239, 7
      %v3241 = vsub.s32 %v3238, %v3240
      %v3242 = vrot.slane %v3228, %v3241
      %v3243 = vcombine.low %v3177, %v3187
      %v3244 = vcombine.high %v3177, %v3187
      %v3246 = vunpack.c.l.s4 1983009808
      %v3247 = vunpack.c.0.s8 %v3246
      %v3248 = vlaneseq
      %v3249 = vshrl.u32 %v3248, 7
      %v3250 = vsub.s32 %v3247, %v3249
      %v3251 = vrot.slane %v3243, %v3250
      %v3253 = vunpack.c.l.s4 1983009808
      %v3254 = vunpack.c.0.s8 %v3253
      %v3255 = vlaneseq
      %v3256 = vshrl.u32 %v3255, 7
      %v3257 = vsub.s32 %v3254, %v3256
      %v3258 = vrot.slane %v3244, %v3257
      %v3259 = vcombine.low %v3182, %v3192
      %v3260 = vcombine.high %v3182, %v3192
      %v3262 = vunpack.c.l.s4 1983009808
      %v3263 = vunpack.c.0.s8 %v3262
      %v3264 = vlaneseq
      %v3265 = vshrl.u32 %v3264, 7
      %v3266 = vsub.s32 %v3263, %v3265
      %v3267 = vrot.slane %v3259, %v3266
      %v3269 = vunpack.c.l.s4 1983009808
      %v3270 = vunpack.c.0.s8 %v3269
      %v3271 = vlaneseq
      %v3272 = vshrl.u32 %v3271, 7
      %v3273 = vsub.s32 %v3270, %v3272
      %v3274 = vrot.slane %v3260, %v3273
      %v3275 = vcombine.low %v3219, %v3235
      %v3276 = vcombine.high %v3219, %v3235
      %v3278 = vunpack.c.l.s4 1934713408
      %v3279 = vunpack.c.0.s8 %v3278
      %v3280 = vlaneseq
      %v3281 = vshrl.u32 %v3280, 7
      %v3282 = vsub.s32 %v3279, %v3281
      %v3283 = vrot.slane %v3275, %v3282
      %v3285 = vunpack.c.l.s4 1934713408
      %v3286 = vunpack.c.0.s8 %v3285
      %v3287 = vlaneseq
      %v3288 = vshrl.u32 %v3287, 7
      %v3289 = vsub.s32 %v3286, %v3288
      %v3290 = vrot.slane %v3276, %v3289
      %v3291 = vcombine.low %v3226, %v3242
      %v3292 = vcombine.high %v3226, %v3242
      %v3294 = vunpack.c.l.s4 1934713408
      %v3295 = vunpack.c.0.s8 %v3294
      %v3296 = vlaneseq
      %v3297 = vshrl.u32 %v3296, 7
      %v3298 = vsub.s32 %v3295, %v3297
      %v3299 = vrot.slane %v3291, %v3298
      %v3301 = vunpack.c.l.s4 1934713408
      %v3302 = vunpack.c.0.s8 %v3301
      %v3303 = vlaneseq
      %v3304 = vshrl.u32 %v3303, 7
      %v3305 = vsub.s32 %v3302, %v3304
      %v3306 = vrot.slane %v3292, %v3305
      %v3307 = vcombine.low %v3251, %v3267
      %v3308 = vcombine.high %v3251, %v3267
      %v3310 = vunpack.c.l.s4 1934713408
      %v3311 = vunpack.c.0.s8 %v3310
      %v3312 = vlaneseq
      %v3313 = vshrl.u32 %v3312, 7
      %v3314 = vsub.s32 %v3311, %v3313
      %v3315 = vrot.slane %v3307, %v3314
      %v3317 = vunpack.c.l.s4 1934713408
      %v3318 = vunpack.c.0.s8 %v3317
      %v3319 = vlaneseq
      %v3320 = vshrl.u32 %v3319, 7
      %v3321 = vsub.s32 %v3318, %v3320
      %v3322 = vrot.slane %v3308, %v3321
      %v3323 = vcombine.low %v3258, %v3274
      %v3324 = vcombine.high %v3258, %v3274
      %v3326 = vunpack.c.l.s4 1934713408
      %v3327 = vunpack.c.0.s8 %v3326
      %v3328 = vlaneseq
      %v3329 = vshrl.u32 %v3328, 7
      %v3330 = vsub.s32 %v3327, %v3329
      %v3331 = vrot.slane %v3323, %v3330
      %v3333 = vunpack.c.l.s4 1934713408
      %v3334 = vunpack.c.0.s8 %v3333
      %v3335 = vlaneseq
      %v3336 = vshrl.u32 %v3335, 7
      %v3337 = vsub.s32 %v3334, %v3336
      %v3338 = vrot.slane %v3324, %v3337
      %v3339 = vcombine.low %v3283, %v3315
      %v3340 = vcombine.high %v3283, %v3315
      %v3341 = vcombine.low %v3290, %v3322
      %v3342 = vcombine.high %v3290, %v3322
      %v3343 = vcombine.low %v3299, %v3331
      %v3344 = vcombine.high %v3299, %v3331
      %v3345 = vcombine.low %v3306, %v3338
      %v3346 = vcombine.high %v3306, %v3338
      %v3347 = vcombine.low %v3159, %v3169
      %v3348 = vcombine.high %v3159, %v3169
      %v3350 = vunpack.c.l.s4 1983009808
      %v3351 = vunpack.c.0.s8 %v3350
      %v3352 = vlaneseq
      %v3353 = vshrl.u32 %v3352, 7
      %v3354 = vsub.s32 %v3351, %v3353
      %v3355 = vrot.slane %v3347, %v3354
      %v3357 = vunpack.c.l.s4 1983009808
      %v3358 = vunpack.c.0.s8 %v3357
      %v3359 = vlaneseq
      %v3360 = vshrl.u32 %v3359, 7
      %v3361 = vsub.s32 %v3358, %v3360
      %v3362 = vrot.slane %v3348, %v3361
      %v3363 = vcombine.low %v3164, %v3174
      %v3364 = vcombine.high %v3164, %v3174
      %v3366 = vunpack.c.l.s4 1983009808
      %v3367 = vunpack.c.0.s8 %v3366
      %v3368 = vlaneseq
      %v3369 = vshrl.u32 %v3368, 7
      %v3370 = vsub.s32 %v3367, %v3369
      %v3371 = vrot.slane %v3363, %v3370
      %v3373 = vunpack.c.l.s4 1983009808
      %v3374 = vunpack.c.0.s8 %v3373
      %v3375 = vlaneseq
      %v3376 = vshrl.u32 %v3375, 7
      %v3377 = vsub.s32 %v3374, %v3376
      %v3378 = vrot.slane %v3364, %v3377
      %v3379 = vcombine.low %v3179, %v3189
      %v3380 = vcombine.high %v3179, %v3189
      %v3382 = vunpack.c.l.s4 1983009808
      %v3383 = vunpack.c.0.s8 %v3382
      %v3384 = vlaneseq
      %v3385 = vshrl.u32 %v3384, 7
      %v3386 = vsub.s32 %v3383, %v3385
      %v3387 = vrot.slane %v3379, %v3386
      %v3389 = vunpack.c.l.s4 1983009808
      %v3390 = vunpack.c.0.s8 %v3389
      %v3391 = vlaneseq
      %v3392 = vshrl.u32 %v3391, 7
      %v3393 = vsub.s32 %v3390, %v3392
      %v3394 = vrot.slane %v3380, %v3393
      %v3395 = vcombine.low %v3184, %v3194
      %v3396 = vcombine.high %v3184, %v3194
      %v3398 = vunpack.c.l.s4 1983009808
      %v3399 = vunpack.c.0.s8 %v3398
      %v3400 = vlaneseq
      %v3401 = vshrl.u32 %v3400, 7
      %v3402 = vsub.s32 %v3399, %v3401
      %v3403 = vrot.slane %v3395, %v3402
      %v3405 = vunpack.c.l.s4 1983009808
      %v3406 = vunpack.c.0.s8 %v3405
      %v3407 = vlaneseq
      %v3408 = vshrl.u32 %v3407, 7
      %v3409 = vsub.s32 %v3406, %v3408
      %v3410 = vrot.slane %v3396, %v3409
      %v3411 = vcombine.low %v3355, %v3371
      %v3412 = vcombine.high %v3355, %v3371
      %v3414 = vunpack.c.l.s4 1934713408
      %v3415 = vunpack.c.0.s8 %v3414
      %v3416 = vlaneseq
      %v3417 = vshrl.u32 %v3416, 7
      %v3418 = vsub.s32 %v3415, %v3417
      %v3419 = vrot.slane %v3411, %v3418
      %v3421 = vunpack.c.l.s4 1934713408
      %v3422 = vunpack.c.0.s8 %v3421
      %v3423 = vlaneseq
      %v3424 = vshrl.u32 %v3423, 7
      %v3425 = vsub.s32 %v3422, %v3424
      %v3426 = vrot.slane %v3412, %v3425
      %v3427 = vcombine.low %v3362, %v3378
      %v3428 = vcombine.high %v3362, %v3378
      %v3430 = vunpack.c.l.s4 1934713408
      %v3431 = vunpack.c.0.s8 %v3430
      %v3432 = vlaneseq
      %v3433 = vshrl.u32 %v3432, 7
      %v3434 = vsub.s32 %v3431, %v3433
      %v3435 = vrot.slane %v3427, %v3434
      %v3437 = vunpack.c.l.s4 1934713408
      %v3438 = vunpack.c.0.s8 %v3437
      %v3439 = vlaneseq
      %v3440 = vshrl.u32 %v3439, 7
      %v3441 = vsub.s32 %v3438, %v3440
      %v3442 = vrot.slane %v3428, %v3441
      %v3443 = vcombine.low %v3387, %v3403
      %v3444 = vcombine.high %v3387, %v3403
      %v3446 = vunpack.c.l.s4 1934713408
      %v3447 = vunpack.c.0.s8 %v3446
      %v3448 = vlaneseq
      %v3449 = vshrl.u32 %v3448, 7
      %v3450 = vsub.s32 %v3447, %v3449
      %v3451 = vrot.slane %v3443, %v3450
      %v3453 = vunpack.c.l.s4 1934713408
      %v3454 = vunpack.c.0.s8 %v3453
      %v3455 = vlaneseq
      %v3456 = vshrl.u32 %v3455, 7
      %v3457 = vsub.s32 %v3454, %v3456
      %v3458 = vrot.slane %v3444, %v3457
      %v3459 = vcombine.low %v3394, %v3410
      %v3460 = vcombine.high %v3394, %v3410
      %v3462 = vunpack.c.l.s4 1934713408
      %v3463 = vunpack.c.0.s8 %v3462
      %v3464 = vlaneseq
      %v3465 = vshrl.u32 %v3464, 7
      %v3466 = vsub.s32 %v3463, %v3465
      %v3467 = vrot.slane %v3459, %v3466
      %v3469 = vunpack.c.l.s4 1934713408
      %v3470 = vunpack.c.0.s8 %v3469
      %v3471 = vlaneseq
      %v3472 = vshrl.u32 %v3471, 7
      %v3473 = vsub.s32 %v3470, %v3472
      %v3474 = vrot.slane %v3460, %v3473
      %v3475 = vcombine.low %v3419, %v3451
      %v3476 = vcombine.high %v3419, %v3451
      %v3477 = vcombine.low %v3426, %v3458
      %v3478 = vcombine.high %v3426, %v3458
      %v3479 = vcombine.low %v3435, %v3467
      %v3480 = vcombine.high %v3435, %v3467
      %v3481 = vcombine.low %v3442, %v3474
      %v3482 = vcombine.high %v3442, %v3474
      %3484 = vrot.lane.b32.xlu0 %v3340, 16
      %v3485 = vpop.permute.xlu0 %3484
      %3488 = vrot.lane.b32.xlu0 %v3341, 32
      %v3489 = vpop.permute.xlu0 %3488
      %3492 = vrot.lane.b32.xlu0 %v3342, 48
      %v3493 = vpop.permute.xlu0 %3492
      %3496 = vrot.lane.b32.xlu0 %v3343, 64
      %v3497 = vpop.permute.xlu0 %3496
      %3500 = vrot.lane.b32.xlu0 %v3344, 80
      %v3501 = vpop.permute.xlu0 %3500
      %3504 = vrot.lane.b32.xlu0 %v3345, 96
      %v3505 = vpop.permute.xlu0 %3504
      %3508 = vrot.lane.b32.xlu0 %v3346, 112
      %v3509 = vpop.permute.xlu0 %3508
      %3512 = vrot.lane.b32.xlu0 %v3476, 16
      %v3513 = vpop.permute.xlu0 %3512
      %3516 = vrot.lane.b32.xlu0 %v3477, 32
      %v3517 = vpop.permute.xlu0 %3516
      %3520 = vrot.lane.b32.xlu0 %v3478, 48
      %v3521 = vpop.permute.xlu0 %3520
      %3524 = vrot.lane.b32.xlu0 %v3479, 64
      %v3525 = vpop.permute.xlu0 %3524
      %3528 = vrot.lane.b32.xlu0 %v3480, 80
      %v3529 = vpop.permute.xlu0 %3528
      %3532 = vrot.lane.b32.xlu0 %v3481, 96
      %v3533 = vpop.permute.xlu0 %3532
      %3536 = vrot.lane.b32.xlu0 %v3482, 112
      %v3537 = vpop.permute.xlu0 %3536
      %v3539 = vsel %vm1150, %v3339, %v3485
      %v3540 = vsel %vm1152, %v3539, %v3489
      %v3541 = vsel %vm1154, %v3540, %v3493
      %v3542 = vsel %vm1156, %v3541, %v3497
      %v3543 = vsel %vm1158, %v3542, %v3501
      %v3544 = vsel %vm1160, %v3543, %v3505
      %v3545 = vsel %vm1162, %v3544, %v3509
      %v3546 = vsel %vm1150, %v3475, %v3513
      %v3547 = vsel %vm1152, %v3546, %v3517
      %v3548 = vsel %vm1154, %v3547, %v3521
      %v3549 = vsel %vm1156, %v3548, %v3525
      %v3550 = vsel %vm1158, %v3549, %v3529
      %v3551 = vsel %vm1160, %v3550, %v3533
      %v3552 = vsel %vm1162, %v3551, %v3537
      %3553 = vrot.lane.b32.xlu0 %v3157, 127
      %v3554 = vpop.permute.xlu0 %3553
      %3555 = vrot.lane.b32.xlu0 %v3159, 127
      %v3556 = vpop.permute.xlu0 %3555
      %3557 = vrot.lane.b32.xlu0 %v3162, 127
      %v3558 = vpop.permute.xlu0 %3557
      %3559 = vrot.lane.b32.xlu0 %v3164, 127
      %v3560 = vpop.permute.xlu0 %3559
      %3561 = vrot.lane.b32.xlu0 %v3167, 127
      %v3562 = vpop.permute.xlu0 %3561
      %3563 = vrot.lane.b32.xlu0 %v3169, 127
      %v3564 = vpop.permute.xlu0 %3563
      %3565 = vrot.lane.b32.xlu0 %v3172, 127
      %v3566 = vpop.permute.xlu0 %3565
      %3567 = vrot.lane.b32.xlu0 %v3174, 127
      %v3568 = vpop.permute.xlu0 %3567
      %3569 = vrot.lane.b32.xlu0 %v3177, 127
      %v3570 = vpop.permute.xlu0 %3569
      %3571 = vrot.lane.b32.xlu0 %v3179, 127
      %v3572 = vpop.permute.xlu0 %3571
      %3573 = vrot.lane.b32.xlu0 %v3182, 127
      %v3574 = vpop.permute.xlu0 %3573
      %3575 = vrot.lane.b32.xlu0 %v3184, 127
      %v3576 = vpop.permute.xlu0 %3575
      %3577 = vrot.lane.b32.xlu0 %v3187, 127
      %v3578 = vpop.permute.xlu0 %3577
      %3579 = vrot.lane.b32.xlu0 %v3189, 127
      %v3580 = vpop.permute.xlu0 %3579
      %3581 = vrot.lane.b32.xlu0 %v3192, 127
      %v3582 = vpop.permute.xlu0 %3581
      %3583 = vrot.lane.b32.xlu0 %v3194, 127
      %v3584 = vpop.permute.xlu0 %3583
      %v3601 = vcombine.low %v3554, %v3562
      %v3602 = vcombine.high %v3554, %v3562
      %v3604 = vunpack.c.l.s4 1983009808
      %v3605 = vunpack.c.0.s8 %v3604
      %v3606 = vlaneseq
      %v3607 = vshrl.u32 %v3606, 7
      %v3608 = vsub.s32 %v3605, %v3607
      %v3609 = vrot.slane %v3601, %v3608
      %v3611 = vunpack.c.l.s4 1983009808
      %v3612 = vunpack.c.0.s8 %v3611
      %v3613 = vlaneseq
      %v3614 = vshrl.u32 %v3613, 7
      %v3615 = vsub.s32 %v3612, %v3614
      %v3616 = vrot.slane %v3602, %v3615
      %v3617 = vcombine.low %v3558, %v3566
      %v3618 = vcombine.high %v3558, %v3566
      %v3620 = vunpack.c.l.s4 1983009808
      %v3621 = vunpack.c.0.s8 %v3620
      %v3622 = vlaneseq
      %v3623 = vshrl.u32 %v3622, 7
      %v3624 = vsub.s32 %v3621, %v3623
      %v3625 = vrot.slane %v3617, %v3624
      %v3627 = vunpack.c.l.s4 1983009808
      %v3628 = vunpack.c.0.s8 %v3627
      %v3629 = vlaneseq
      %v3630 = vshrl.u32 %v3629, 7
      %v3631 = vsub.s32 %v3628, %v3630
      %v3632 = vrot.slane %v3618, %v3631
      %v3633 = vcombine.low %v3570, %v3578
      %v3634 = vcombine.high %v3570, %v3578
      %v3636 = vunpack.c.l.s4 1983009808
      %v3637 = vunpack.c.0.s8 %v3636
      %v3638 = vlaneseq
      %v3639 = vshrl.u32 %v3638, 7
      %v3640 = vsub.s32 %v3637, %v3639
      %v3641 = vrot.slane %v3633, %v3640
      %v3643 = vunpack.c.l.s4 1983009808
      %v3644 = vunpack.c.0.s8 %v3643
      %v3645 = vlaneseq
      %v3646 = vshrl.u32 %v3645, 7
      %v3647 = vsub.s32 %v3644, %v3646
      %v3648 = vrot.slane %v3634, %v3647
      %v3649 = vcombine.low %v3574, %v3582
      %v3650 = vcombine.high %v3574, %v3582
      %v3652 = vunpack.c.l.s4 1983009808
      %v3653 = vunpack.c.0.s8 %v3652
      %v3654 = vlaneseq
      %v3655 = vshrl.u32 %v3654, 7
      %v3656 = vsub.s32 %v3653, %v3655
      %v3657 = vrot.slane %v3649, %v3656
      %v3659 = vunpack.c.l.s4 1983009808
      %v3660 = vunpack.c.0.s8 %v3659
      %v3661 = vlaneseq
      %v3662 = vshrl.u32 %v3661, 7
      %v3663 = vsub.s32 %v3660, %v3662
      %v3664 = vrot.slane %v3650, %v3663
      %v3665 = vcombine.low %v3609, %v3625
      %v3666 = vcombine.high %v3609, %v3625
      %v3668 = vunpack.c.l.s4 1934713408
      %v3669 = vunpack.c.0.s8 %v3668
      %v3670 = vlaneseq
      %v3671 = vshrl.u32 %v3670, 7
      %v3672 = vsub.s32 %v3669, %v3671
      %v3673 = vrot.slane %v3665, %v3672
      %v3675 = vunpack.c.l.s4 1934713408
      %v3676 = vunpack.c.0.s8 %v3675
      %v3677 = vlaneseq
      %v3678 = vshrl.u32 %v3677, 7
      %v3679 = vsub.s32 %v3676, %v3678
      %v3680 = vrot.slane %v3666, %v3679
      %v3681 = vcombine.low %v3616, %v3632
      %v3682 = vcombine.high %v3616, %v3632
      %v3684 = vunpack.c.l.s4 1934713408
      %v3685 = vunpack.c.0.s8 %v3684
      %v3686 = vlaneseq
      %v3687 = vshrl.u32 %v3686, 7
      %v3688 = vsub.s32 %v3685, %v3687
      %v3689 = vrot.slane %v3681, %v3688
      %v3691 = vunpack.c.l.s4 1934713408
      %v3692 = vunpack.c.0.s8 %v3691
      %v3693 = vlaneseq
      %v3694 = vshrl.u32 %v3693, 7
      %v3695 = vsub.s32 %v3692, %v3694
      %v3696 = vrot.slane %v3682, %v3695
      %v3697 = vcombine.low %v3641, %v3657
      %v3698 = vcombine.high %v3641, %v3657
      %v3700 = vunpack.c.l.s4 1934713408
      %v3701 = vunpack.c.0.s8 %v3700
      %v3702 = vlaneseq
      %v3703 = vshrl.u32 %v3702, 7
      %v3704 = vsub.s32 %v3701, %v3703
      %v3705 = vrot.slane %v3697, %v3704
      %v3707 = vunpack.c.l.s4 1934713408
      %v3708 = vunpack.c.0.s8 %v3707
      %v3709 = vlaneseq
      %v3710 = vshrl.u32 %v3709, 7
      %v3711 = vsub.s32 %v3708, %v3710
      %v3712 = vrot.slane %v3698, %v3711
      %v3713 = vcombine.low %v3648, %v3664
      %v3714 = vcombine.high %v3648, %v3664
      %v3716 = vunpack.c.l.s4 1934713408
      %v3717 = vunpack.c.0.s8 %v3716
      %v3718 = vlaneseq
      %v3719 = vshrl.u32 %v3718, 7
      %v3720 = vsub.s32 %v3717, %v3719
      %v3721 = vrot.slane %v3713, %v3720
      %v3723 = vunpack.c.l.s4 1934713408
      %v3724 = vunpack.c.0.s8 %v3723
      %v3725 = vlaneseq
      %v3726 = vshrl.u32 %v3725, 7
      %v3727 = vsub.s32 %v3724, %v3726
      %v3728 = vrot.slane %v3714, %v3727
      %v3729 = vcombine.low %v3673, %v3705
      %v3730 = vcombine.high %v3673, %v3705
      %v3731 = vcombine.low %v3680, %v3712
      %v3732 = vcombine.high %v3680, %v3712
      %v3733 = vcombine.low %v3689, %v3721
      %v3734 = vcombine.high %v3689, %v3721
      %v3735 = vcombine.low %v3696, %v3728
      %v3736 = vcombine.high %v3696, %v3728
      %v3737 = vcombine.low %v3556, %v3564
      %v3738 = vcombine.high %v3556, %v3564
      %v3740 = vunpack.c.l.s4 1983009808
      %v3741 = vunpack.c.0.s8 %v3740
      %v3742 = vlaneseq
      %v3743 = vshrl.u32 %v3742, 7
      %v3744 = vsub.s32 %v3741, %v3743
      %v3745 = vrot.slane %v3737, %v3744
      %v3747 = vunpack.c.l.s4 1983009808
      %v3748 = vunpack.c.0.s8 %v3747
      %v3749 = vlaneseq
      %v3750 = vshrl.u32 %v3749, 7
      %v3751 = vsub.s32 %v3748, %v3750
      %v3752 = vrot.slane %v3738, %v3751
      %v3753 = vcombine.low %v3560, %v3568
      %v3754 = vcombine.high %v3560, %v3568
      %v3756 = vunpack.c.l.s4 1983009808
      %v3757 = vunpack.c.0.s8 %v3756
      %v3758 = vlaneseq
      %v3759 = vshrl.u32 %v3758, 7
      %v3760 = vsub.s32 %v3757, %v3759
      %v3761 = vrot.slane %v3753, %v3760
      %v3763 = vunpack.c.l.s4 1983009808
      %v3764 = vunpack.c.0.s8 %v3763
      %v3765 = vlaneseq
      %v3766 = vshrl.u32 %v3765, 7
      %v3767 = vsub.s32 %v3764, %v3766
      %v3768 = vrot.slane %v3754, %v3767
      %v3769 = vcombine.low %v3572, %v3580
      %v3770 = vcombine.high %v3572, %v3580
      %v3772 = vunpack.c.l.s4 1983009808
      %v3773 = vunpack.c.0.s8 %v3772
      %v3774 = vlaneseq
      %v3775 = vshrl.u32 %v3774, 7
      %v3776 = vsub.s32 %v3773, %v3775
      %v3777 = vrot.slane %v3769, %v3776
      %v3779 = vunpack.c.l.s4 1983009808
      %v3780 = vunpack.c.0.s8 %v3779
      %v3781 = vlaneseq
      %v3782 = vshrl.u32 %v3781, 7
      %v3783 = vsub.s32 %v3780, %v3782
      %v3784 = vrot.slane %v3770, %v3783
      %v3785 = vcombine.low %v3576, %v3584
      %v3786 = vcombine.high %v3576, %v3584
      %v3788 = vunpack.c.l.s4 1983009808
      %v3789 = vunpack.c.0.s8 %v3788
      %v3790 = vlaneseq
      %v3791 = vshrl.u32 %v3790, 7
      %v3792 = vsub.s32 %v3789, %v3791
      %v3793 = vrot.slane %v3785, %v3792
      %v3795 = vunpack.c.l.s4 1983009808
      %v3796 = vunpack.c.0.s8 %v3795
      %v3797 = vlaneseq
      %v3798 = vshrl.u32 %v3797, 7
      %v3799 = vsub.s32 %v3796, %v3798
      %v3800 = vrot.slane %v3786, %v3799
      %v3801 = vcombine.low %v3745, %v3761
      %v3802 = vcombine.high %v3745, %v3761
      %v3804 = vunpack.c.l.s4 1934713408
      %v3805 = vunpack.c.0.s8 %v3804
      %v3806 = vlaneseq
      %v3807 = vshrl.u32 %v3806, 7
      %v3808 = vsub.s32 %v3805, %v3807
      %v3809 = vrot.slane %v3801, %v3808
      %v3811 = vunpack.c.l.s4 1934713408
      %v3812 = vunpack.c.0.s8 %v3811
      %v3813 = vlaneseq
      %v3814 = vshrl.u32 %v3813, 7
      %v3815 = vsub.s32 %v3812, %v3814
      %v3816 = vrot.slane %v3802, %v3815
      %v3817 = vcombine.low %v3752, %v3768
      %v3818 = vcombine.high %v3752, %v3768
      %v3820 = vunpack.c.l.s4 1934713408
      %v3821 = vunpack.c.0.s8 %v3820
      %v3822 = vlaneseq
      %v3823 = vshrl.u32 %v3822, 7
      %v3824 = vsub.s32 %v3821, %v3823
      %v3825 = vrot.slane %v3817, %v3824
      %v3827 = vunpack.c.l.s4 1934713408
      %v3828 = vunpack.c.0.s8 %v3827
      %v3829 = vlaneseq
      %v3830 = vshrl.u32 %v3829, 7
      %v3831 = vsub.s32 %v3828, %v3830
      %v3832 = vrot.slane %v3818, %v3831
      %v3833 = vcombine.low %v3777, %v3793
      %v3834 = vcombine.high %v3777, %v3793
      %v3836 = vunpack.c.l.s4 1934713408
      %v3837 = vunpack.c.0.s8 %v3836
      %v3838 = vlaneseq
      %v3839 = vshrl.u32 %v3838, 7
      %v3840 = vsub.s32 %v3837, %v3839
      %v3841 = vrot.slane %v3833, %v3840
      %v3843 = vunpack.c.l.s4 1934713408
      %v3844 = vunpack.c.0.s8 %v3843
      %v3845 = vlaneseq
      %v3846 = vshrl.u32 %v3845, 7
      %v3847 = vsub.s32 %v3844, %v3846
      %v3848 = vrot.slane %v3834, %v3847
      %v3849 = vcombine.low %v3784, %v3800
      %v3850 = vcombine.high %v3784, %v3800
      %v3852 = vunpack.c.l.s4 1934713408
      %v3853 = vunpack.c.0.s8 %v3852
      %v3854 = vlaneseq
      %v3855 = vshrl.u32 %v3854, 7
      %v3856 = vsub.s32 %v3853, %v3855
      %v3857 = vrot.slane %v3849, %v3856
      %v3859 = vunpack.c.l.s4 1934713408
      %v3860 = vunpack.c.0.s8 %v3859
      %v3861 = vlaneseq
      %v3862 = vshrl.u32 %v3861, 7
      %v3863 = vsub.s32 %v3860, %v3862
      %v3864 = vrot.slane %v3850, %v3863
      %v3865 = vcombine.low %v3809, %v3841
      %v3866 = vcombine.high %v3809, %v3841
      %v3867 = vcombine.low %v3816, %v3848
      %v3868 = vcombine.high %v3816, %v3848
      %v3869 = vcombine.low %v3825, %v3857
      %v3870 = vcombine.high %v3825, %v3857
      %v3871 = vcombine.low %v3832, %v3864
      %v3872 = vcombine.high %v3832, %v3864
      %3874 = vrot.lane.b32.xlu0 %v3730, 16
      %v3875 = vpop.permute.xlu0 %3874
      %3878 = vrot.lane.b32.xlu0 %v3731, 32
      %v3879 = vpop.permute.xlu0 %3878
      %3882 = vrot.lane.b32.xlu0 %v3732, 48
      %v3883 = vpop.permute.xlu0 %3882
      %3886 = vrot.lane.b32.xlu0 %v3733, 64
      %v3887 = vpop.permute.xlu0 %3886
      %3890 = vrot.lane.b32.xlu0 %v3734, 80
      %v3891 = vpop.permute.xlu0 %3890
      %3894 = vrot.lane.b32.xlu0 %v3735, 96
      %v3895 = vpop.permute.xlu0 %3894
      %3898 = vrot.lane.b32.xlu0 %v3736, 112
      %v3899 = vpop.permute.xlu0 %3898
      %3902 = vrot.lane.b32.xlu0 %v3866, 16
      %v3903 = vpop.permute.xlu0 %3902
      %3906 = vrot.lane.b32.xlu0 %v3867, 32
      %v3907 = vpop.permute.xlu0 %3906
      %3910 = vrot.lane.b32.xlu0 %v3868, 48
      %v3911 = vpop.permute.xlu0 %3910
      %3914 = vrot.lane.b32.xlu0 %v3869, 64
      %v3915 = vpop.permute.xlu0 %3914
      %3918 = vrot.lane.b32.xlu0 %v3870, 80
      %v3919 = vpop.permute.xlu0 %3918
      %3922 = vrot.lane.b32.xlu0 %v3871, 96
      %v3923 = vpop.permute.xlu0 %3922
      %3926 = vrot.lane.b32.xlu0 %v3872, 112
      %v3927 = vpop.permute.xlu0 %3926
      %v3929 = vsel %vm1150, %v3729, %v3875
      %v3930 = vsel %vm1152, %v3929, %v3879
      %v3931 = vsel %vm1154, %v3930, %v3883
      %v3932 = vsel %vm1156, %v3931, %v3887
      %v3933 = vsel %vm1158, %v3932, %v3891
      %v3934 = vsel %vm1160, %v3933, %v3895
      %v3935 = vsel %vm1162, %v3934, %v3899
      %v3936 = vsel %vm1150, %v3865, %v3903
      %v3937 = vsel %vm1152, %v3936, %v3907
      %v3938 = vsel %vm1154, %v3937, %v3911
      %v3939 = vsel %vm1156, %v3938, %v3915
      %v3940 = vsel %vm1158, %v3939, %v3919
      %v3941 = vsel %vm1160, %v3940, %v3923
      %v3942 = vsel %vm1162, %v3941, %v3927
      %3943 = vrot.lane.b32.xlu0 %v3157, 126
      %v3944 = vpop.permute.xlu0 %3943
      %3945 = vrot.lane.b32.xlu0 %v3159, 126
      %v3946 = vpop.permute.xlu0 %3945
      %3947 = vrot.lane.b32.xlu0 %v3162, 126
      %v3948 = vpop.permute.xlu0 %3947
      %3949 = vrot.lane.b32.xlu0 %v3164, 126
      %v3950 = vpop.permute.xlu0 %3949
      %3951 = vrot.lane.b32.xlu0 %v3167, 126
      %v3952 = vpop.permute.xlu0 %3951
      %3953 = vrot.lane.b32.xlu0 %v3169, 126
      %v3954 = vpop.permute.xlu0 %3953
      %3955 = vrot.lane.b32.xlu0 %v3172, 126
      %v3956 = vpop.permute.xlu0 %3955
      %3957 = vrot.lane.b32.xlu0 %v3174, 126
      %v3958 = vpop.permute.xlu0 %3957
      %3959 = vrot.lane.b32.xlu0 %v3177, 126
      %v3960 = vpop.permute.xlu0 %3959
      %3961 = vrot.lane.b32.xlu0 %v3179, 126
      %v3962 = vpop.permute.xlu0 %3961
      %3963 = vrot.lane.b32.xlu0 %v3182, 126
      %v3964 = vpop.permute.xlu0 %3963
      %3965 = vrot.lane.b32.xlu0 %v3184, 126
      %v3966 = vpop.permute.xlu0 %3965
      %3967 = vrot.lane.b32.xlu0 %v3187, 126
      %v3968 = vpop.permute.xlu0 %3967
      %3969 = vrot.lane.b32.xlu0 %v3189, 126
      %v3970 = vpop.permute.xlu0 %3969
      %3971 = vrot.lane.b32.xlu0 %v3192, 126
      %v3972 = vpop.permute.xlu0 %3971
      %3973 = vrot.lane.b32.xlu0 %v3194, 126
      %v3974 = vpop.permute.xlu0 %3973
      %v3991 = vcombine.low %v3944, %v3952
      %v3992 = vcombine.high %v3944, %v3952
      %v3994 = vunpack.c.l.s4 1983009808
      %v3995 = vunpack.c.0.s8 %v3994
      %v3996 = vlaneseq
      %v3997 = vshrl.u32 %v3996, 7
      %v3998 = vsub.s32 %v3995, %v3997
      %v3999 = vrot.slane %v3991, %v3998
      %v4001 = vunpack.c.l.s4 1983009808
      %v4002 = vunpack.c.0.s8 %v4001
      %v4003 = vlaneseq
      %v4004 = vshrl.u32 %v4003, 7
      %v4005 = vsub.s32 %v4002, %v4004
      %v4006 = vrot.slane %v3992, %v4005
      %v4007 = vcombine.low %v3948, %v3956
      %v4008 = vcombine.high %v3948, %v3956
      %v4010 = vunpack.c.l.s4 1983009808
      %v4011 = vunpack.c.0.s8 %v4010
      %v4012 = vlaneseq
      %v4013 = vshrl.u32 %v4012, 7
      %v4014 = vsub.s32 %v4011, %v4013
      %v4015 = vrot.slane %v4007, %v4014
      %v4017 = vunpack.c.l.s4 1983009808
      %v4018 = vunpack.c.0.s8 %v4017
      %v4019 = vlaneseq
      %v4020 = vshrl.u32 %v4019, 7
      %v4021 = vsub.s32 %v4018, %v4020
      %v4022 = vrot.slane %v4008, %v4021
      %v4023 = vcombine.low %v3960, %v3968
      %v4024 = vcombine.high %v3960, %v3968
      %v4026 = vunpack.c.l.s4 1983009808
      %v4027 = vunpack.c.0.s8 %v4026
      %v4028 = vlaneseq
      %v4029 = vshrl.u32 %v4028, 7
      %v4030 = vsub.s32 %v4027, %v4029
      %v4031 = vrot.slane %v4023, %v4030
      %v4033 = vunpack.c.l.s4 1983009808
      %v4034 = vunpack.c.0.s8 %v4033
      %v4035 = vlaneseq
      %v4036 = vshrl.u32 %v4035, 7
      %v4037 = vsub.s32 %v4034, %v4036
      %v4038 = vrot.slane %v4024, %v4037
      %v4039 = vcombine.low %v3964, %v3972
      %v4040 = vcombine.high %v3964, %v3972
      %v4042 = vunpack.c.l.s4 1983009808
      %v4043 = vunpack.c.0.s8 %v4042
      %v4044 = vlaneseq
      %v4045 = vshrl.u32 %v4044, 7
      %v4046 = vsub.s32 %v4043, %v4045
      %v4047 = vrot.slane %v4039, %v4046
      %v4049 = vunpack.c.l.s4 1983009808
      %v4050 = vunpack.c.0.s8 %v4049
      %v4051 = vlaneseq
      %v4052 = vshrl.u32 %v4051, 7
      %v4053 = vsub.s32 %v4050, %v4052
      %v4054 = vrot.slane %v4040, %v4053
      %v4055 = vcombine.low %v3999, %v4015
      %v4056 = vcombine.high %v3999, %v4015
      %v4058 = vunpack.c.l.s4 1934713408
      %v4059 = vunpack.c.0.s8 %v4058
      %v4060 = vlaneseq
      %v4061 = vshrl.u32 %v4060, 7
      %v4062 = vsub.s32 %v4059, %v4061
      %v4063 = vrot.slane %v4055, %v4062
      %v4065 = vunpack.c.l.s4 1934713408
      %v4066 = vunpack.c.0.s8 %v4065
      %v4067 = vlaneseq
      %v4068 = vshrl.u32 %v4067, 7
      %v4069 = vsub.s32 %v4066, %v4068
      %v4070 = vrot.slane %v4056, %v4069
      %v4071 = vcombine.low %v4006, %v4022
      %v4072 = vcombine.high %v4006, %v4022
      %v4074 = vunpack.c.l.s4 1934713408
      %v4075 = vunpack.c.0.s8 %v4074
      %v4076 = vlaneseq
      %v4077 = vshrl.u32 %v4076, 7
      %v4078 = vsub.s32 %v4075, %v4077
      %v4079 = vrot.slane %v4071, %v4078
      %v4081 = vunpack.c.l.s4 1934713408
      %v4082 = vunpack.c.0.s8 %v4081
      %v4083 = vlaneseq
      %v4084 = vshrl.u32 %v4083, 7
      %v4085 = vsub.s32 %v4082, %v4084
      %v4086 = vrot.slane %v4072, %v4085
      %v4087 = vcombine.low %v4031, %v4047
      %v4088 = vcombine.high %v4031, %v4047
      %v4090 = vunpack.c.l.s4 1934713408
      %v4091 = vunpack.c.0.s8 %v4090
      %v4092 = vlaneseq
      %v4093 = vshrl.u32 %v4092, 7
      %v4094 = vsub.s32 %v4091, %v4093
      %v4095 = vrot.slane %v4087, %v4094
      %v4097 = vunpack.c.l.s4 1934713408
      %v4098 = vunpack.c.0.s8 %v4097
      %v4099 = vlaneseq
      %v4100 = vshrl.u32 %v4099, 7
      %v4101 = vsub.s32 %v4098, %v4100
      %v4102 = vrot.slane %v4088, %v4101
      %v4103 = vcombine.low %v4038, %v4054
      %v4104 = vcombine.high %v4038, %v4054
      %v4106 = vunpack.c.l.s4 1934713408
      %v4107 = vunpack.c.0.s8 %v4106
      %v4108 = vlaneseq
      %v4109 = vshrl.u32 %v4108, 7
      %v4110 = vsub.s32 %v4107, %v4109
      %v4111 = vrot.slane %v4103, %v4110
      %v4113 = vunpack.c.l.s4 1934713408
      %v4114 = vunpack.c.0.s8 %v4113
      %v4115 = vlaneseq
      %v4116 = vshrl.u32 %v4115, 7
      %v4117 = vsub.s32 %v4114, %v4116
      %v4118 = vrot.slane %v4104, %v4117
      %v4119 = vcombine.low %v4063, %v4095
      %v4120 = vcombine.high %v4063, %v4095
      %v4121 = vcombine.low %v4070, %v4102
      %v4122 = vcombine.high %v4070, %v4102
      %v4123 = vcombine.low %v4079, %v4111
      %v4124 = vcombine.high %v4079, %v4111
      %v4125 = vcombine.low %v4086, %v4118
      %v4126 = vcombine.high %v4086, %v4118
      %v4127 = vcombine.low %v3946, %v3954
      %v4128 = vcombine.high %v3946, %v3954
      %v4130 = vunpack.c.l.s4 1983009808
      %v4131 = vunpack.c.0.s8 %v4130
      %v4132 = vlaneseq
      %v4133 = vshrl.u32 %v4132, 7
      %v4134 = vsub.s32 %v4131, %v4133
      %v4135 = vrot.slane %v4127, %v4134
      %v4137 = vunpack.c.l.s4 1983009808
      %v4138 = vunpack.c.0.s8 %v4137
      %v4139 = vlaneseq
      %v4140 = vshrl.u32 %v4139, 7
      %v4141 = vsub.s32 %v4138, %v4140
      %v4142 = vrot.slane %v4128, %v4141
      %v4143 = vcombine.low %v3950, %v3958
      %v4144 = vcombine.high %v3950, %v3958
      %v4146 = vunpack.c.l.s4 1983009808
      %v4147 = vunpack.c.0.s8 %v4146
      %v4148 = vlaneseq
      %v4149 = vshrl.u32 %v4148, 7
      %v4150 = vsub.s32 %v4147, %v4149
      %v4151 = vrot.slane %v4143, %v4150
      %v4153 = vunpack.c.l.s4 1983009808
      %v4154 = vunpack.c.0.s8 %v4153
      %v4155 = vlaneseq
      %v4156 = vshrl.u32 %v4155, 7
      %v4157 = vsub.s32 %v4154, %v4156
      %v4158 = vrot.slane %v4144, %v4157
      %v4159 = vcombine.low %v3962, %v3970
      %v4160 = vcombine.high %v3962, %v3970
      %v4162 = vunpack.c.l.s4 1983009808
      %v4163 = vunpack.c.0.s8 %v4162
      %v4164 = vlaneseq
      %v4165 = vshrl.u32 %v4164, 7
      %v4166 = vsub.s32 %v4163, %v4165
      %v4167 = vrot.slane %v4159, %v4166
      %v4169 = vunpack.c.l.s4 1983009808
      %v4170 = vunpack.c.0.s8 %v4169
      %v4171 = vlaneseq
      %v4172 = vshrl.u32 %v4171, 7
      %v4173 = vsub.s32 %v4170, %v4172
      %v4174 = vrot.slane %v4160, %v4173
      %v4175 = vcombine.low %v3966, %v3974
      %v4176 = vcombine.high %v3966, %v3974
      %v4178 = vunpack.c.l.s4 1983009808
      %v4179 = vunpack.c.0.s8 %v4178
      %v4180 = vlaneseq
      %v4181 = vshrl.u32 %v4180, 7
      %v4182 = vsub.s32 %v4179, %v4181
      %v4183 = vrot.slane %v4175, %v4182
      %v4185 = vunpack.c.l.s4 1983009808
      %v4186 = vunpack.c.0.s8 %v4185
      %v4187 = vlaneseq
      %v4188 = vshrl.u32 %v4187, 7
      %v4189 = vsub.s32 %v4186, %v4188
      %v4190 = vrot.slane %v4176, %v4189
      %v4191 = vcombine.low %v4135, %v4151
      %v4192 = vcombine.high %v4135, %v4151
      %v4194 = vunpack.c.l.s4 1934713408
      %v4195 = vunpack.c.0.s8 %v4194
      %v4196 = vlaneseq
      %v4197 = vshrl.u32 %v4196, 7
      %v4198 = vsub.s32 %v4195, %v4197
      %v4199 = vrot.slane %v4191, %v4198
      %v4201 = vunpack.c.l.s4 1934713408
      %v4202 = vunpack.c.0.s8 %v4201
      %v4203 = vlaneseq
      %v4204 = vshrl.u32 %v4203, 7
      %v4205 = vsub.s32 %v4202, %v4204
      %v4206 = vrot.slane %v4192, %v4205
      %v4207 = vcombine.low %v4142, %v4158
      %v4208 = vcombine.high %v4142, %v4158
      %v4210 = vunpack.c.l.s4 1934713408
      %v4211 = vunpack.c.0.s8 %v4210
      %v4212 = vlaneseq
      %v4213 = vshrl.u32 %v4212, 7
      %v4214 = vsub.s32 %v4211, %v4213
      %v4215 = vrot.slane %v4207, %v4214
      %v4217 = vunpack.c.l.s4 1934713408
      %v4218 = vunpack.c.0.s8 %v4217
      %v4219 = vlaneseq
      %v4220 = vshrl.u32 %v4219, 7
      %v4221 = vsub.s32 %v4218, %v4220
      %v4222 = vrot.slane %v4208, %v4221
      %v4223 = vcombine.low %v4167, %v4183
      %v4224 = vcombine.high %v4167, %v4183
      %v4226 = vunpack.c.l.s4 1934713408
      %v4227 = vunpack.c.0.s8 %v4226
      %v4228 = vlaneseq
      %v4229 = vshrl.u32 %v4228, 7
      %v4230 = vsub.s32 %v4227, %v4229
      %v4231 = vrot.slane %v4223, %v4230
      %v4233 = vunpack.c.l.s4 1934713408
      %v4234 = vunpack.c.0.s8 %v4233
      %v4235 = vlaneseq
      %v4236 = vshrl.u32 %v4235, 7
      %v4237 = vsub.s32 %v4234, %v4236
      %v4238 = vrot.slane %v4224, %v4237
      %v4239 = vcombine.low %v4174, %v4190
      %v4240 = vcombine.high %v4174, %v4190
      %v4242 = vunpack.c.l.s4 1934713408
      %v4243 = vunpack.c.0.s8 %v4242
      %v4244 = vlaneseq
      %v4245 = vshrl.u32 %v4244, 7
      %v4246 = vsub.s32 %v4243, %v4245
      %v4247 = vrot.slane %v4239, %v4246
      %v4249 = vunpack.c.l.s4 1934713408
      %v4250 = vunpack.c.0.s8 %v4249
      %v4251 = vlaneseq
      %v4252 = vshrl.u32 %v4251, 7
      %v4253 = vsub.s32 %v4250, %v4252
      %v4254 = vrot.slane %v4240, %v4253
      %v4255 = vcombine.low %v4199, %v4231
      %v4256 = vcombine.high %v4199, %v4231
      %v4257 = vcombine.low %v4206, %v4238
      %v4258 = vcombine.high %v4206, %v4238
      %v4259 = vcombine.low %v4215, %v4247
      %v4260 = vcombine.high %v4215, %v4247
      %v4261 = vcombine.low %v4222, %v4254
      %v4262 = vcombine.high %v4222, %v4254
      %4264 = vrot.lane.b32.xlu0 %v4120, 16
      %v4265 = vpop.permute.xlu0 %4264
      %4268 = vrot.lane.b32.xlu0 %v4121, 32
      %v4269 = vpop.permute.xlu0 %4268
      %4272 = vrot.lane.b32.xlu0 %v4122, 48
      %v4273 = vpop.permute.xlu0 %4272
      %4276 = vrot.lane.b32.xlu0 %v4123, 64
      %v4277 = vpop.permute.xlu0 %4276
      %4280 = vrot.lane.b32.xlu0 %v4124, 80
      %v4281 = vpop.permute.xlu0 %4280
      %4284 = vrot.lane.b32.xlu0 %v4125, 96
      %v4285 = vpop.permute.xlu0 %4284
      %4288 = vrot.lane.b32.xlu0 %v4126, 112
      %v4289 = vpop.permute.xlu0 %4288
      %4292 = vrot.lane.b32.xlu0 %v4256, 16
      %v4293 = vpop.permute.xlu0 %4292
      %4296 = vrot.lane.b32.xlu0 %v4257, 32
      %v4297 = vpop.permute.xlu0 %4296
      %4300 = vrot.lane.b32.xlu0 %v4258, 48
      %v4301 = vpop.permute.xlu0 %4300
      %4304 = vrot.lane.b32.xlu0 %v4259, 64
      %v4305 = vpop.permute.xlu0 %4304
      %4308 = vrot.lane.b32.xlu0 %v4260, 80
      %v4309 = vpop.permute.xlu0 %4308
      %4312 = vrot.lane.b32.xlu0 %v4261, 96
      %v4313 = vpop.permute.xlu0 %4312
      %4316 = vrot.lane.b32.xlu0 %v4262, 112
      %v4317 = vpop.permute.xlu0 %4316
      %v4319 = vsel %vm1150, %v4119, %v4265
      %v4320 = vsel %vm1152, %v4319, %v4269
      %v4321 = vsel %vm1154, %v4320, %v4273
      %v4322 = vsel %vm1156, %v4321, %v4277
      %v4323 = vsel %vm1158, %v4322, %v4281
      %v4324 = vsel %vm1160, %v4323, %v4285
      %v4325 = vsel %vm1162, %v4324, %v4289
      %v4326 = vsel %vm1150, %v4255, %v4293
      %v4327 = vsel %vm1152, %v4326, %v4297
      %v4328 = vsel %vm1154, %v4327, %v4301
      %v4329 = vsel %vm1156, %v4328, %v4305
      %v4330 = vsel %vm1158, %v4329, %v4309
      %v4331 = vsel %vm1160, %v4330, %v4313
      %v4332 = vsel %vm1162, %v4331, %v4317
      %v4333 = vpack.c.bf16 %v610, %v610
      %v4334 = vpack.c.bf16 %v1569, %v1163
      %v4335 = vpack.c.bf16 %v1576, %v1170
      %v4336 = vpack.c.bf16 %v2366, %v1959
      %v4337 = vpack.c.bf16 %v2373, %v1966
      %v4338 = vpack.c.bf16 %v3146, %v2756
      %v4339 = vpack.c.bf16 %v3153, %v2763
      %v4340 = vpack.c.bf16 %v3935, %v3545
      %v4341 = vpack.c.bf16 %v3942, %v3552
      %v4342 = vpack.c.bf16 %v4325, %v4325
      %v4343 = vpack.c.bf16 %v4332, %v4332
      %vm4344 = vcmask 588800
      %v4346 = vsel %vm4344, %v4333, 0
      %vm4348 = vcmask 1043456
      %v4350 = vsel %vm4348, %v4342, 0
      %v4353 = vsel %vm4348, %v4343, 0
      %4355 = vmatprep.subr.bf16.mxu0 %v4335
      %4356 = vmatpush1.bf16.msra.mxu0 %v4334
      %4357 = vmatprep.subr.bf16.mxu0 %v4337
      %4358 = vmatpush1.bf16.msra.mxu0 %v4336
      %4359 = vmatprep.subr.bf16.mxu0 %v4339
      %4360 = vmatpush1.bf16.msra.mxu0 %v4338
      %4361 = vmatprep.subr.bf16.mxu0 %v4341
      %4362 = vmatpush1.bf16.msra.mxu0 %v4340
      %4363 = vmatprep.subr.bf16.mxu0 %v4353
      %4364 = vmatpush1.bf16.msra.mxu0 %v4350
      %4365 = vmatprep.subr.bf16.mxu0 0
      %4366 = vmatpush1.bf16.msra.mxu0 0
      %4367 = vmatprep.subr.bf16.mxu0 0
      %4368 = vmatpush1.bf16.msra.mxu0 0
      %4369 = vmatprep.subr.bf16.mxu0 0
      %4370 = vmatpush1.bf16.msra.mxu0 0
      %4371 = vmatprep.subr.bf16.mxu0 0
      %4372 = vmatpush1.bf16.msra.mxu0 0
      %4373 = vmatprep.subr.bf16.mxu0 0
      %4374 = vmatpush1.bf16.msra.mxu0 0
      %4375 = vmatprep.subr.bf16.mxu0 0
      %4376 = vmatpush1.bf16.msra.mxu0 0
      %4377 = vmatprep.subr.bf16.mxu0 0
      %4378 = vmatpush1.bf16.msra.mxu0 0
      %4379 = vmatprep.subr.bf16.mxu0 0
      %4380 = vmatpush1.bf16.msra.mxu0 0
      %4381 = vmatprep.subr.bf16.mxu0 0
      %4382 = vmatpush1.bf16.msra.mxu0 0
      %4383 = vmatprep.subr.bf16.mxu0 0
      %4384 = vmatpush1.bf16.msra.mxu0 0
      %4385 = vmatprep.subr.bf16.mxu0 0
      %4386 = vmatpush1.bf16.msra.mxu0 0
      %4387 = vmatprep.mubr.bf16.mxu0 0
      %4388 = vmatmul.mubr.bf16.gmra.mrb[0].mxu0 %v4346
      %v4389 = vpop.f32.mrb[0].mxu0
      %v4390 = vadd.f32 0.0, %v4389
      %v4391 = vpop.f32.mrb[0].mxu0
      %v4392 = vadd.f32 0.0, %v4391
      %v4393 = vpop.f32.mrb[0].mxu0
      %v4394 = vpop.f32.mrb[0].mxu0
      %4395 = vdwg.mxu0
      %4396 = vst [vmem:[%s264] sm:$0xff] %v4390
      %4397 = vst [vmem:[%s264 + $0x8] sm:$0xff] %v4392
      %v4398 = vadd.f32 %v4390, %v4392
      %4399 = vadd.xlane.f32.xlu0 %v4398
      %v4400 = vpop.xlane.xlu0 %4399
      %4401 = vst.msk [vmem:[%s268] sm:$0xff] %vm772, %v4400
      %v4402 = vmul.f32 %v4390, %v4390
      %v4403 = vmul.f32 %v4392, %v4392
      %v4404 = vadd.f32 %v4402, %v4403
      %4405 = vadd.xlane.f32.xlu0 %v4404
      %v4406 = vpop.xlane.xlu0 %4405
      %4407 = vst.msk [vmem:[%s272] sm:$0xff] %vm772, %v4406
      %p4408 = scmp.lt.s32.totalorder %s18, 1
      %s4409 = scalar_select %p4408, %s18, 1
      %s4410 = smul.addr %s4409, 2
      %s4411 = smul.addr %s4410, 8
      %s4412 = scalar_lea.vmem %s4, %s4411
      %p4413 = scmp.lt.s32.totalorder %s18, 1
      %s4414 = scalar_select %p4413, %s18, 1
      %s4415 = smul.addr %s4414, 8
      %s4416 = scalar_lea.vmem %s5, %s4415
      %p4417 = scmp.lt.s32.totalorder %s18, 1
      %s4418 = scalar_select %p4417, %s18, 1
      %s4419 = smul.addr %s4418, 8
      %s4420 = scalar_lea.vmem %s6, %s4419
      // Predicated region
      $region37: #{conv_block_d_forward.4} parent=35 // pred_check
        %p4421 = pneg %p125
      $region38: #{conv_block_d_forward.4} parent=35 // pred_check_branch
        %4423 = sbr.rel (%p4421) target = $region40
      $region39: #{conv_block_d_forward.4} parent=35 // pred_region
        _
      $region40: #{conv_block_d_forward.4} parent=35 // pred_fallthru
        _
      // Predicated region
      $region41: #{conv_block_d_forward.4} parent=35 // pred_check
        %p4424 = pneg %p151
      $region42: #{conv_block_d_forward.4} parent=35 // pred_check_branch
        %4426 = sbr.rel (%p4424) target = $region44
      $region43: #{conv_block_d_forward.4} parent=35 // pred_region
        _
      $region44: #{conv_block_d_forward.4} parent=35 // pred_fallthru
        _
      // Predicated region
      $region45: #{conv_block_d_forward.4} parent=35 // pred_check
        %p4427 = pneg %p177
      $region46: #{conv_block_d_forward.4} parent=35 // pred_check_branch
        %4429 = sbr.rel (%p4427) target = $region48
      $region47: #{conv_block_d_forward.4} parent=35 // pred_region
        _
      $region48: #{conv_block_d_forward.4} parent=35 // pred_fallthru
        _
    $region36: #{conv_block_d_forward.4} parent=5 // pred_fallthru
      _
    %p4430 = scmp.le.s32.totalorder 2, %s13
    // Predicated region
    $region49: #{conv_block_d_forward.4} parent=5 // pred_check
      %p4431 = pneg %p4430
    $region50: #{conv_block_d_forward.4} parent=5 // pred_check_branch
      %4433 = sbr.rel (%p4431) target = $region52
    $region51: #{conv_block_d_forward.4} parent=5 // pred_region
      %s4434 = ssub.s32 %s13, 2
      // Predicated region
      $region53: #{conv_block_d_forward.4} parent=51 // pred_check
        %p4435 = pneg %p131
      $region54: #{conv_block_d_forward.4} parent=51 // pred_check_branch
        %4437 = sbr.rel (%p4435) target = $region56
      $region55: #{conv_block_d_forward.4} parent=51 // pred_region
        %p4438 = scmp.lt.s32.totalorder %s19, 1
        %s4439 = scalar_select %p4438, %s19, 1
        %s4440 = smul.addr %s4439, 2
        %s4441 = smul.addr %s4440, 8
        %s4442 = scalar_lea.vmem %s4, %s4441
      $region56: #{conv_block_d_forward.4} parent=51 // pred_fallthru
        _
      // Predicated region
      $region57: #{conv_block_d_forward.4} parent=51 // pred_check
        %p4443 = pneg %p157
      $region58: #{conv_block_d_forward.4} parent=51 // pred_check_branch
        %4445 = sbr.rel (%p4443) target = $region60
      $region59: #{conv_block_d_forward.4} parent=51 // pred_region
        %p4446 = scmp.lt.s32.totalorder %s19, 1
        %s4447 = scalar_select %p4446, %s19, 1
        %s4448 = smul.addr %s4447, 8
        %s4449 = scalar_lea.vmem %s5, %s4448
      $region60: #{conv_block_d_forward.4} parent=51 // pred_fallthru
        _
      // Predicated region
      $region61: #{conv_block_d_forward.4} parent=51 // pred_check
        %p4450 = pneg %p183
      $region62: #{conv_block_d_forward.4} parent=51 // pred_check_branch
        %4452 = sbr.rel (%p4450) target = $region64
      $region63: #{conv_block_d_forward.4} parent=51 // pred_region
        %p4453 = scmp.lt.s32.totalorder %s19, 1
        %s4454 = scalar_select %p4453, %s19, 1
        %s4455 = smul.addr %s4454, 8
        %s4456 = scalar_lea.vmem %s6, %s4455
      $region64: #{conv_block_d_forward.4} parent=51 // pred_fallthru
        _
    $region52: #{conv_block_d_forward.4} parent=5 // pred_fallthru
      _
  $region6: #{conv_block_d_forward.4} parent=0 // loop_footer
    %s17 = sadd.s32 1, %s13
  $region7: #{conv_block_d_forward.4} parent=0 // loop_footer_branch
    %12 = sbr.rel target = $region3
  $region8: #{conv_block_d_forward.4} parent=0 // loop_exit
    _

</llo_original>
